<compile_context>
chip_gen: v7x
topology: tpu7x:2x2x1
jax: 0.10.0
libtpu: 0.0.40
codegen_flags: <defaults>
</compile_context>

<pallas_src>
import jax
import jax.numpy as jnp
from jax import lax
from jax.experimental import pallas as pl
from jax.experimental.pallas import tpu as pltpu


def _round_up(n, m):
    return ((n + m - 1) // m) * m


def _self_attention_kernel(x_ref, w_ref, thr_ref, rep_ref, scores_ref):
    # x_ref:      (TB, Tp, Hp) input dtype, VMEM
    # w_ref:      (1, 1, Hp)   f32, VMEM (zero-padded past H)
    # thr_ref:    (TB, 1)      i32, VMEM -- per-row mask threshold (precomputed)
    # rep_ref:    (TB, Hp)     f32 out
    # scores_ref: (TB, Tp)     f32 out
    x = x_ref[...]
    w = w_ref[...]
    thr = thr_ref[...]
    tb, tp, _ = x.shape

    # scores = tanh(x . w) over the hidden (lane) axis -> (TB, Tp) f32
    s = jnp.tanh(jnp.sum(x * w, axis=-1))

    # Fused masked softmax + renormalization:
    #   norm = (mask * e) / sum(mask * e),  e = exp(s - max(s))
    # The plain-softmax denominator cancels, so it is never computed.
    t_idx = lax.broadcasted_iota(jnp.int32, (tb, tp), 1)
    keep = t_idx < thr                              # (TB, Tp) bool
    m = jnp.max(s, axis=-1, keepdims=True)
    e = jnp.where(keep, jnp.exp(s - m), 0.0)        # (TB, Tp) f32
    denom = jnp.sum(e, axis=-1, keepdims=True)      # (TB, 1)
    # NOTE: a fully-masked row (length == 0) divides by zero -> NaN, which
    # matches the reference PyTorch behavior.
    norm = e * pl.reciprocal(denom, approx=True)    # (TB, Tp) f32

    # Weighted sum over the sequence axis on the MXU:
    #   rep[b, h] = sum_t norm[b, t] * x[b, t, h]
    rep = jnp.einsum(
        "bqt,bth->bqh",
        norm[:, None, :].astype(x.dtype),
        x,
        preferred_element_type=jnp.float32,
    )[:, 0, :]

    rep_ref[...] = rep
    scores_ref[...] = norm


def self_attention(inputs, attention_weights, lengths, *, max_batch_tile=256):
    """inputs: (B, T, H), attention_weights: (H,), lengths: (B,) int."""
    B, T, H = inputs.shape

    # Lane/sublane-aligned padded sizes (no-ops when already aligned).
    T_pad = _round_up(T, 128)
    H_pad = _round_up(H, 128)

    # Batch tile: largest multiple of 8 whose x tile stays within a ~4 MiB
    # per-buffer budget; with double buffering + outputs this fits easily in
    # the scoped VMEM on v5e/v6e (128 MiB phys) and v7x (64 MiB phys).
    itemsize = jnp.dtype(inputs.dtype).itemsize
    per_row_bytes = T_pad * H_pad * itemsize
    rows = max(1, (4 * 1024 * 1024) // per_row_bytes)
    TB = max(8, (min(rows, max_batch_tile) // 8) * 8)
    TB = min(TB, _round_up(B, 8))
    B_pad = _round_up(B, TB)
    # TODO(synk): for very long sequences (T_pad*H_pad tile too large for one
    # VMEM buffer) additionally tile over T with an online-softmax accumulator.

    lengths = lengths.astype(jnp.int32)
    max_len = jnp.max(lengths)  # global max, computed once outside the kernel
    # Per-row mask threshold: keep position t iff t < thr[i].
    #   thr[i] = lengths[i] if lengths[i] < max(lengths) else T
    # Rows at max length are unmasked (reference semantics); padded positions
    # t >= T are always dropped.
    thr = jnp.minimum(
        jnp.where(lengths < max_len, lengths, jnp.int32(T)), jnp.int32(T)
    )
    thr_p = jnp.pad(thr, (0, B_pad - B), constant_values=T).reshape(B_pad, 1)

    x_p = jnp.pad(inputs, ((0, B_pad - B), (0, T_pad - T), (0, H_pad - H)))
    w_p = jnp.pad(attention_weights.astype(jnp.float32), (0, H_pad - H))
    w_p = w_p.reshape(1, 1, H_pad)

    grid = (B_pad // TB,)
    rep_p, scores_p = pl.pallas_call(
        _self_attention_kernel,
        out_shape=(
            jax.ShapeDtypeStruct((B_pad, H_pad), jnp.float32),
            jax.ShapeDtypeStruct((B_pad, T_pad), jnp.float32),
        ),
        grid_spec=pltpu.PrefetchScalarGridSpec(
            num_scalar_prefetch=0,
            grid=grid,
            in_specs=[
                pl.BlockSpec((TB, T_pad, H_pad), lambda b: (b, 0, 0)),
                pl.BlockSpec((1, 1, H_pad), lambda b: (0, 0, 0)),
                pl.BlockSpec((TB, 1), lambda b: (b, 0)),
            ],
            out_specs=(
                pl.BlockSpec((TB, H_pad), lambda b: (b, 0)),
                pl.BlockSpec((TB, T_pad), lambda b: (b, 0)),
            ),
        ),
        compiler_params=pltpu.CompilerParams(
            dimension_semantics=("parallel",),
            vmem_limit_bytes=32 * 1024 * 1024,
        ),
    )(x_p, w_p, thr_p)

    # torch does representations.squeeze(); with B>1, H>1 it's a no-op.
    return rep_p[:B, :H], scores_p[:B, :T]


def _reference(inputs, attention_weights, lengths):
    s = jnp.tanh(jnp.einsum("bth,h->bt", inputs, attention_weights))
    soft = jax.nn.softmax(s, axis=-1)
    max_len = jnp.max(lengths)
    t_idx = jnp.arange(inputs.shape[1])[None, :]
    mask = jnp.where(
        (lengths[:, None] < max_len) & (t_idx >= lengths[:, None]), 0.0, 1.0
    )
    masked = soft * mask
    norm = masked / jnp.sum(masked, axis=-1, keepdims=True)
    rep = jnp.sum(inputs * norm[:, :, None], axis=1)
    return rep, norm


if __name__ == "__main__":
    B, T, H = 2, 8, 32
    key = jax.random.PRNGKey(0)
    k_x, k_w = jax.random.split(key)

    inputs = jax.random.normal(k_x, (B, T, H), dtype=jnp.float32)
    # nn.init.uniform(attention_weights, -0.005, 0.005)
    attention_weights = jax.random.uniform(
        k_w, (H,), dtype=jnp.float32, minval=-0.005, maxval=0.005
    )
    lengths = jnp.array([8, 5], dtype=jnp.int32)

    rep, scores = self_attention(inputs, attention_weights, lengths)
    jax.block_until_ready((rep, scores))

    rep_ref, scores_ref = _reference(inputs, attention_weights, lengths)
    # approx reciprocal (EUP) -> slightly looser tolerances than pure f32.
    assert jnp.allclose(rep, rep_ref, atol=2e-3, rtol=2e-3)
    assert jnp.allclose(scores, scores_ref, atol=2e-3, rtol=2e-3)
    print("KERNEL_OK")
</pallas_src>

<mosaic_0001>
module attributes {stable_mosaic.version = 11 : i64} {
  func.func @_self_attention_kernel(%arg0: i32, %arg1: memref<8x128x128xf32, #tpu.memory_space<vmem>>, %arg2: memref<1x1x128xf32, #tpu.memory_space<vmem>>, %arg3: memref<8x1xi32, #tpu.memory_space<vmem>>, %arg4: memref<8x128xf32, #tpu.memory_space<vmem>>, %arg5: memref<8x128xf32, #tpu.memory_space<vmem>>) attributes {dimension_semantics = [#tpu.dimension_semantics<parallel>], iteration_bounds = array<i64: 1>, scalar_prefetch = 0 : i64, scratch_operands = 0 : i64, tpu.core_type = #tpu.core_type<tc>, window_params = [{transform_indices = @transform_0, window_bounds = array<i64: 8, 128, 128>}, {pipeline_mode = #tpu.pipeline_mode<synchronous>, transform_indices = @transform_1, window_bounds = array<i64: 1, 1, 128>}, {transform_indices = @transform_2, window_bounds = array<i64: 8, 1>}, {transform_indices = @transform_3, window_bounds = array<i64: 8, 128>}, {transform_indices = @transform_4, window_bounds = array<i64: 8, 128>}]} {
    %c0 = arith.constant 0 : index
    %c0_0 = arith.constant 0 : index
    %c0_1 = arith.constant 0 : index
    %0 = vector.load %arg1[%c0, %c0_0, %c0_1] : memref<8x128x128xf32, #tpu.memory_space<vmem>>, vector<8x128x128xf32>
    %c0_2 = arith.constant 0 : index
    %c0_3 = arith.constant 0 : index
    %c0_4 = arith.constant 0 : index
    %1 = vector.load %arg2[%c0_2, %c0_3, %c0_4] : memref<1x1x128xf32, #tpu.memory_space<vmem>>, vector<1x1x128xf32>
    %c0_5 = arith.constant 0 : index
    %c0_6 = arith.constant 0 : index
    %2 = vector.load %arg3[%c0_5, %c0_6] : memref<8x1xi32, #tpu.memory_space<vmem>>, vector<8x1xi32>
    %3 = vector.broadcast %1 : vector<1x1x128xf32> to vector<8x128x128xf32>
    %4 = arith.mulf %0, %3 : vector<8x128x128xf32>
    %cst = arith.constant dense<0.000000e+00> : vector<8x128xf32>
    %5 = vector.multi_reduction <add>, %4, %cst [2] : vector<8x128x128xf32> to vector<8x128xf32>
    %6 = math.tanh %5 : vector<8x128xf32>
    %7 = tpu.iota {dimensions = array<i32: 1>} : vector<8x128xi32>
    %8 = vector.broadcast %2 : vector<8x1xi32> to vector<8x128xi32>
    %9 = arith.cmpi slt, %7, %8 : vector<8x128xi32>
    %cst_7 = arith.constant dense<0xFF800000> : vector<8xf32>
    %10 = vector.multi_reduction <maximumf>, %6, %cst_7 [1] : vector<8x128xf32> to vector<8xf32>
    %11 = vector.shape_cast %10 : vector<8xf32> to vector<8x1xf32>
    %12 = vector.broadcast %11 : vector<8x1xf32> to vector<8x128xf32>
    %13 = arith.subf %6, %12 : vector<8x128xf32>
    %14 = math.exp %13 : vector<8x128xf32>
    %cst_8 = arith.constant 0.000000e+00 : f32
    %15 = vector.broadcast %cst_8 : f32 to vector<8x128xf32>
    %16 = arith.select %9, %14, %15 : vector<8x128xi1>, vector<8x128xf32>
    %cst_9 = arith.constant dense<0.000000e+00> : vector<8xf32>
    %17 = vector.multi_reduction <add>, %16, %cst_9 [1] : vector<8x128xf32> to vector<8xf32>
    %18 = vector.shape_cast %17 : vector<8xf32> to vector<8x1xf32>
    %19 = tpu.reciprocal %18 {approx = true} : vector<8x1xf32> -> vector<8x1xf32>
    %20 = vector.broadcast %19 : vector<8x1xf32> to vector<8x128xf32>
    %21 = arith.mulf %16, %20 : vector<8x128xf32>
    %22 = vector.shape_cast %21 : vector<8x128xf32> to vector<8x1x128xf32>
    "tpu.trace_start"() <{level = 10 : i32, message = "bqt,bth->bqh"}> : () -> ()
    %cst_10 = arith.constant dense<0.000000e+00> : vector<8x1x128xf32>
    %23 = tpu.matmul %22, %0, %cst_10 {dimension_numbers = #tpu.dot_dimension_numbers<[2], [1], [1], [2], [0, 0, 0, 1, 1, 2], [0], [0]>} : vector<8x1x128xf32>, vector<8x128x128xf32>, vector<8x1x128xf32> -> vector<8x1x128xf32>
    "tpu.trace_stop"() : () -> ()
    %24 = vector.shape_cast %23 : vector<8x1x128xf32> to vector<8x128xf32>
    %c0_11 = arith.constant 0 : index
    %c0_12 = arith.constant 0 : index
    %25 = vector.load %arg4[%c0_11, %c0_12] : memref<8x128xf32, #tpu.memory_space<vmem>>, vector<8x128xf32>
    tpu.vector_store %arg4[%c0_11, %c0_12], %24 {strides = array<i32>} : memref<8x128xf32, #tpu.memory_space<vmem>>, vector<8x128xf32>,
    %c0_13 = arith.constant 0 : index
    %c0_14 = arith.constant 0 : index
    %26 = vector.load %arg5[%c0_13, %c0_14] : memref<8x128xf32, #tpu.memory_space<vmem>>, vector<8x128xf32>
    tpu.vector_store %arg5[%c0_13, %c0_14], %21 {strides = array<i32>} : memref<8x128xf32, #tpu.memory_space<vmem>>, vector<8x128xf32>,
    return
  }
  func.func @transform_0(%arg0: i32) -> (i32, i32, i32) {
    %c0_i32 = arith.constant 0 : i32
    %c0_i32_0 = arith.constant 0 : i32
    %c0_i32_1 = arith.constant 0 : i32
    return %arg0, %c0_i32, %c0_i32_0 : i32, i32, i32
  }
  func.func @transform_1(%arg0: i32) -> (i32, i32, i32) {
    %c0_i32 = arith.constant 0 : i32
    %c0_i32_0 = arith.constant 0 : i32
    %c0_i32_1 = arith.constant 0 : i32
    %c0_i32_2 = arith.constant 0 : i32
    return %c0_i32, %c0_i32_0, %c0_i32_1 : i32, i32, i32
  }
  func.func @transform_2(%arg0: i32) -> (i32, i32) {
    %c0_i32 = arith.constant 0 : i32
    %c0_i32_0 = arith.constant 0 : i32
    return %arg0, %c0_i32 : i32, i32
  }
  func.func @transform_3(%arg0: i32) -> (i32, i32) {
    %c0_i32 = arith.constant 0 : i32
    %c0_i32_0 = arith.constant 0 : i32
    return %arg0, %c0_i32 : i32, i32
  }
  func.func @transform_4(%arg0: i32) -> (i32, i32) {
    %c0_i32 = arith.constant 0 : i32
    %c0_i32_0 = arith.constant 0 : i32
    return %arg0, %c0_i32 : i32, i32
  }
}

</mosaic_0001>

<llo_original>
// kernel: tpu_custom_call.1
$region0: #{tpu_custom_call.1}
  #allocation0 [shape = 'u32[]', space=smem, size = 0x4, offset = 0x4, fixed_abs, tag = 'smem constant byte address 0x4 - core index']
  #allocation1 [shape = 'u32[144,128]{1,0:T(1,128)}', space=vmem, size = 0x12000, scoped, tag = 'internal scratch']
  %s0 = inlined_call_operand.hbm [shape: f32[8,128,128], index: 0, kind: input, shape index: {}]
  %s1 = inlined_call_operand.vmem [shape: f32[1,1,128], index: 1, kind: input, shape index: {}]
  %s2 = inlined_call_operand.vmem [shape: s32[8,1], index: 2, kind: input, shape index: {}]
  %s3 = inlined_call_operand.hbm [shape: f32[8,128], index: 3, kind: output, shape index: {0}]
  %s4 = inlined_call_operand.hbm [shape: f32[8,128], index: 4, kind: output, shape index: {1}]
  %5 = xla_tuple %s3, %s4
  %s6 = sld [smem:[#allocation0]]
  $region34: #{tpu_custom_call.1} parent=0
    _
  %s8 = ssub.s32 1, %s6
  %s9 = scalar_select 0, %s8, %s6
  $region1: #{tpu_custom_call.1} parent=0
    #allocation2 [shape = 'u8[524288]{0}', space=vmem, size = 0x80000, scoped, tag = 'input window, operand 0, single buffered']
    #allocation3 [shape = 's32[1]{0}', space=sflag, size = 0x4, scoped, tag = 'scoped memory for tpu_custom_call.1']
    #allocation4 [shape = 's32[1]{0}', space=sflag, size = 0x4, scoped, tag = 'scoped memory for tpu_custom_call.1']
    #allocation5 [shape = 'u8[4096]{0}', space=vmem, size = 0x1000, scoped, tag = 'output window, operand 0, single buffered']
    #allocation6 [shape = 'u8[4096]{0}', space=vmem, size = 0x1000, scoped, tag = 'output window, operand 1, single buffered']
    #allocation7 [shape = 's32[1]{0}', space=sflag, size = 0x4, scoped, tag = 'scoped memory for tpu_custom_call.1']
    %10 = vsyncpa [#allocation3], 0
    %11 = vsyncpa [#allocation4], 0
    %12 = vsyncpa [#allocation7], 0
    // Predicated region
    $region2: #{tpu_custom_call.1} parent=1 // pred_check
      _
    $region3: #{tpu_custom_call.1} parent=1 // pred_check_branch
      %14 = sbr.rel (0) target = $region5
    $region4: #{tpu_custom_call.1} parent=1 // pred_region
      %s16 = ssub.s32 16384, 16384
      %17 = vsyncadd [#allocation3], %s16
      %s18 = sshll.u32 [#allocation2], 4
      %s19 = int_to_ptr.vmem [resolvable:$true] %s18
      %24 = dma.hbm_to_vmem [thread:$0]  %s0, 16384, %s19, [#allocation3], 128, 128, 8
    $region5: #{tpu_custom_call.1} parent=1 // pred_fallthru
      _
    // Predicated region
    $region6: #{tpu_custom_call.1} parent=1 // pred_check
      _
    $region7: #{tpu_custom_call.1} parent=1 // pred_check_branch
      %26 = sbr.rel (0) target = $region9
    $region8: #{tpu_custom_call.1} parent=1 // pred_region
      _
    $region9: #{tpu_custom_call.1} parent=1 // pred_fallthru
      _
    // Predicated region
    $region10: #{tpu_custom_call.1} parent=1 // pred_check
      _
    $region11: #{tpu_custom_call.1} parent=1 // pred_check_branch
      %28 = sbr.rel (0) target = $region13
    $region12: #{tpu_custom_call.1} parent=1 // pred_region
      _
    $region13: #{tpu_custom_call.1} parent=1 // pred_fallthru
      _
    // Predicated region
    $region14: #{tpu_custom_call.1} parent=1 // pred_check
      _
    $region15: #{tpu_custom_call.1} parent=1 // pred_check_branch
      %30 = sbr.rel (0) target = $region17
    $region16: #{tpu_custom_call.1} parent=1 // pred_region
      %31 = dma.done [#allocation3], 16384
    $region17: #{tpu_custom_call.1} parent=1 // pred_fallthru
      _
    %v32 = vld [vmem:[#allocation2] sm:$0xff]
    %v33 = vld [vmem:[#allocation2 + $0x8] sm:$0xff]
    %v34 = vld [vmem:[#allocation2 + $0x10] sm:$0xff]
    %v35 = vld [vmem:[#allocation2 + $0x18] sm:$0xff]
    %v36 = vld [vmem:[#allocation2 + $0x20] sm:$0xff]
    %v37 = vld [vmem:[#allocation2 + $0x28] sm:$0xff]
    %v38 = vld [vmem:[#allocation2 + $0x30] sm:$0xff]
    %v39 = vld [vmem:[#allocation2 + $0x38] sm:$0xff]
    %v40 = vld [vmem:[#allocation2 + $0x40] sm:$0xff]
    %v41 = vld [vmem:[#allocation2 + $0x48] sm:$0xff]
    %v42 = vld [vmem:[#allocation2 + $0x50] sm:$0xff]
    %v43 = vld [vmem:[#allocation2 + $0x58] sm:$0xff]
    %v44 = vld [vmem:[#allocation2 + $0x60] sm:$0xff]
    %v45 = vld [vmem:[#allocation2 + $0x68] sm:$0xff]
    %v46 = vld [vmem:[#allocation2 + $0x70] sm:$0xff]
    %v47 = vld [vmem:[#allocation2 + $0x78] sm:$0xff]
    %v48 = vld [vmem:[#allocation2 + $0x80] sm:$0xff]
    %v49 = vld [vmem:[#allocation2 + $0x88] sm:$0xff]
    %v50 = vld [vmem:[#allocation2 + $0x90] sm:$0xff]
    %v51 = vld [vmem:[#allocation2 + $0x98] sm:$0xff]
    %v52 = vld [vmem:[#allocation2 + $0xa0] sm:$0xff]
    %v53 = vld [vmem:[#allocation2 + $0xa8] sm:$0xff]
    %v54 = vld [vmem:[#allocation2 + $0xb0] sm:$0xff]
    %v55 = vld [vmem:[#allocation2 + $0xb8] sm:$0xff]
    %v56 = vld [vmem:[#allocation2 + $0xc0] sm:$0xff]
    %v57 = vld [vmem:[#allocation2 + $0xc8] sm:$0xff]
    %v58 = vld [vmem:[#allocation2 + $0xd0] sm:$0xff]
    %v59 = vld [vmem:[#allocation2 + $0xd8] sm:$0xff]
    %v60 = vld [vmem:[#allocation2 + $0xe0] sm:$0xff]
    %v61 = vld [vmem:[#allocation2 + $0xe8] sm:$0xff]
    %v62 = vld [vmem:[#allocation2 + $0xf0] sm:$0xff]
    %v63 = vld [vmem:[#allocation2 + $0xf8] sm:$0xff]
    %v64 = vld [vmem:[#allocation2 + $0x100] sm:$0xff]
    %v65 = vld [vmem:[#allocation2 + $0x108] sm:$0xff]
    %v66 = vld [vmem:[#allocation2 + $0x110] sm:$0xff]
    %v67 = vld [vmem:[#allocation2 + $0x118] sm:$0xff]
    %v68 = vld [vmem:[#allocation2 + $0x120] sm:$0xff]
    %v69 = vld [vmem:[#allocation2 + $0x128] sm:$0xff]
    %v70 = vld [vmem:[#allocation2 + $0x130] sm:$0xff]
    %v71 = vld [vmem:[#allocation2 + $0x138] sm:$0xff]
    %v72 = vld [vmem:[#allocation2 + $0x140] sm:$0xff]
    %v73 = vld [vmem:[#allocation2 + $0x148] sm:$0xff]
    %v74 = vld [vmem:[#allocation2 + $0x150] sm:$0xff]
    %v75 = vld [vmem:[#allocation2 + $0x158] sm:$0xff]
    %v76 = vld [vmem:[#allocation2 + $0x160] sm:$0xff]
    %v77 = vld [vmem:[#allocation2 + $0x168] sm:$0xff]
    %v78 = vld [vmem:[#allocation2 + $0x170] sm:$0xff]
    %v79 = vld [vmem:[#allocation2 + $0x178] sm:$0xff]
    %v80 = vld [vmem:[#allocation2 + $0x180] sm:$0xff]
    %v81 = vld [vmem:[#allocation2 + $0x188] sm:$0xff]
    %v82 = vld [vmem:[#allocation2 + $0x190] sm:$0xff]
    %v83 = vld [vmem:[#allocation2 + $0x198] sm:$0xff]
    %v84 = vld [vmem:[#allocation2 + $0x1a0] sm:$0xff]
    %v85 = vld [vmem:[#allocation2 + $0x1a8] sm:$0xff]
    %v86 = vld [vmem:[#allocation2 + $0x1b0] sm:$0xff]
    %v87 = vld [vmem:[#allocation2 + $0x1b8] sm:$0xff]
    %v88 = vld [vmem:[#allocation2 + $0x1c0] sm:$0xff]
    %v89 = vld [vmem:[#allocation2 + $0x1c8] sm:$0xff]
    %v90 = vld [vmem:[#allocation2 + $0x1d0] sm:$0xff]
    %v91 = vld [vmem:[#allocation2 + $0x1d8] sm:$0xff]
    %v92 = vld [vmem:[#allocation2 + $0x1e0] sm:$0xff]
    %v93 = vld [vmem:[#allocation2 + $0x1e8] sm:$0xff]
    %v94 = vld [vmem:[#allocation2 + $0x1f0] sm:$0xff]
    %v95 = vld [vmem:[#allocation2 + $0x1f8] sm:$0xff]
    %v96 = vld [vmem:[#allocation2 + $0x200] sm:$0xff]
    %v97 = vld [vmem:[#allocation2 + $0x208] sm:$0xff]
    %v98 = vld [vmem:[#allocation2 + $0x210] sm:$0xff]
    %v99 = vld [vmem:[#allocation2 + $0x218] sm:$0xff]
    %v100 = vld [vmem:[#allocation2 + $0x220] sm:$0xff]
    %v101 = vld [vmem:[#allocation2 + $0x228] sm:$0xff]
    %v102 = vld [vmem:[#allocation2 + $0x230] sm:$0xff]
    %v103 = vld [vmem:[#allocation2 + $0x238] sm:$0xff]
    %v104 = vld [vmem:[#allocation2 + $0x240] sm:$0xff]
    %v105 = vld [vmem:[#allocation2 + $0x248] sm:$0xff]
    %v106 = vld [vmem:[#allocation2 + $0x250] sm:$0xff]
    %v107 = vld [vmem:[#allocation2 + $0x258] sm:$0xff]
    %v108 = vld [vmem:[#allocation2 + $0x260] sm:$0xff]
    %v109 = vld [vmem:[#allocation2 + $0x268] sm:$0xff]
    %v110 = vld [vmem:[#allocation2 + $0x270] sm:$0xff]
    %v111 = vld [vmem:[#allocation2 + $0x278] sm:$0xff]
    %v112 = vld [vmem:[#allocation2 + $0x280] sm:$0xff]
    %v113 = vld [vmem:[#allocation2 + $0x288] sm:$0xff]
    %v114 = vld [vmem:[#allocation2 + $0x290] sm:$0xff]
    %v115 = vld [vmem:[#allocation2 + $0x298] sm:$0xff]
    %v116 = vld [vmem:[#allocation2 + $0x2a0] sm:$0xff]
    %v117 = vld [vmem:[#allocation2 + $0x2a8] sm:$0xff]
    %v118 = vld [vmem:[#allocation2 + $0x2b0] sm:$0xff]
    %v119 = vld [vmem:[#allocation2 + $0x2b8] sm:$0xff]
    %v120 = vld [vmem:[#allocation2 + $0x2c0] sm:$0xff]
    %v121 = vld [vmem:[#allocation2 + $0x2c8] sm:$0xff]
    %v122 = vld [vmem:[#allocation2 + $0x2d0] sm:$0xff]
    %v123 = vld [vmem:[#allocation2 + $0x2d8] sm:$0xff]
    %v124 = vld [vmem:[#allocation2 + $0x2e0] sm:$0xff]
    %v125 = vld [vmem:[#allocation2 + $0x2e8] sm:$0xff]
    %v126 = vld [vmem:[#allocation2 + $0x2f0] sm:$0xff]
    %v127 = vld [vmem:[#allocation2 + $0x2f8] sm:$0xff]
    %v128 = vld [vmem:[#allocation2 + $0x300] sm:$0xff]
    %v129 = vld [vmem:[#allocation2 + $0x308] sm:$0xff]
    %v130 = vld [vmem:[#allocation2 + $0x310] sm:$0xff]
    %v131 = vld [vmem:[#allocation2 + $0x318] sm:$0xff]
    %v132 = vld [vmem:[#allocation2 + $0x320] sm:$0xff]
    %v133 = vld [vmem:[#allocation2 + $0x328] sm:$0xff]
    %v134 = vld [vmem:[#allocation2 + $0x330] sm:$0xff]
    %v135 = vld [vmem:[#allocation2 + $0x338] sm:$0xff]
    %v136 = vld [vmem:[#allocation2 + $0x340] sm:$0xff]
    %v137 = vld [vmem:[#allocation2 + $0x348] sm:$0xff]
    %v138 = vld [vmem:[#allocation2 + $0x350] sm:$0xff]
    %v139 = vld [vmem:[#allocation2 + $0x358] sm:$0xff]
    %v140 = vld [vmem:[#allocation2 + $0x360] sm:$0xff]
    %v141 = vld [vmem:[#allocation2 + $0x368] sm:$0xff]
    %v142 = vld [vmem:[#allocation2 + $0x370] sm:$0xff]
    %v143 = vld [vmem:[#allocation2 + $0x378] sm:$0xff]
    %v144 = vld [vmem:[#allocation2 + $0x380] sm:$0xff]
    %v145 = vld [vmem:[#allocation2 + $0x388] sm:$0xff]
    %v146 = vld [vmem:[#allocation2 + $0x390] sm:$0xff]
    %v147 = vld [vmem:[#allocation2 + $0x398] sm:$0xff]
    %v148 = vld [vmem:[#allocation2 + $0x3a0] sm:$0xff]
    %v149 = vld [vmem:[#allocation2 + $0x3a8] sm:$0xff]
    %v150 = vld [vmem:[#allocation2 + $0x3b0] sm:$0xff]
    %v151 = vld [vmem:[#allocation2 + $0x3b8] sm:$0xff]
    %v152 = vld [vmem:[#allocation2 + $0x3c0] sm:$0xff]
    %v153 = vld [vmem:[#allocation2 + $0x3c8] sm:$0xff]
    %v154 = vld [vmem:[#allocation2 + $0x3d0] sm:$0xff]
    %v155 = vld [vmem:[#allocation2 + $0x3d8] sm:$0xff]
    %v156 = vld [vmem:[#allocation2 + $0x3e0] sm:$0xff]
    %v157 = vld [vmem:[#allocation2 + $0x3e8] sm:$0xff]
    %v158 = vld [vmem:[#allocation2 + $0x3f0] sm:$0xff]
    %v159 = vld [vmem:[#allocation2 + $0x3f8] sm:$0xff]
    %v160 = vld [vmem:[%s1] sm:$0x1]
    %v161 = vld [vmem:[%s2] sm:$0xff]
    %v163 = vlaneseq
    %v164 = vshrl.u32 %v163, 7
    %v165 = vsub.s32 0, %v164
    %v166 = vrot.slane %v160, %v165
    %v168 = vmul.f32 %v32, %v166
    %v169 = vmul.f32 %v33, %v166
    %v170 = vmul.f32 %v34, %v166
    %v171 = vmul.f32 %v35, %v166
    %v172 = vmul.f32 %v36, %v166
    %v173 = vmul.f32 %v37, %v166
    %v174 = vmul.f32 %v38, %v166
    %v175 = vmul.f32 %v39, %v166
    %v176 = vmul.f32 %v40, %v166
    %v177 = vmul.f32 %v41, %v166
    %v178 = vmul.f32 %v42, %v166
    %v179 = vmul.f32 %v43, %v166
    %v180 = vmul.f32 %v44, %v166
    %v181 = vmul.f32 %v45, %v166
    %v182 = vmul.f32 %v46, %v166
    %v183 = vmul.f32 %v47, %v166
    %v184 = vmul.f32 %v48, %v166
    %v185 = vmul.f32 %v49, %v166
    %v186 = vmul.f32 %v50, %v166
    %v187 = vmul.f32 %v51, %v166
    %v188 = vmul.f32 %v52, %v166
    %v189 = vmul.f32 %v53, %v166
    %v190 = vmul.f32 %v54, %v166
    %v191 = vmul.f32 %v55, %v166
    %v192 = vmul.f32 %v56, %v166
    %v193 = vmul.f32 %v57, %v166
    %v194 = vmul.f32 %v58, %v166
    %v195 = vmul.f32 %v59, %v166
    %v196 = vmul.f32 %v60, %v166
    %v197 = vmul.f32 %v61, %v166
    %v198 = vmul.f32 %v62, %v166
    %v199 = vmul.f32 %v63, %v166
    %v200 = vmul.f32 %v64, %v166
    %v201 = vmul.f32 %v65, %v166
    %v202 = vmul.f32 %v66, %v166
    %v203 = vmul.f32 %v67, %v166
    %v204 = vmul.f32 %v68, %v166
    %v205 = vmul.f32 %v69, %v166
    %v206 = vmul.f32 %v70, %v166
    %v207 = vmul.f32 %v71, %v166
    %v208 = vmul.f32 %v72, %v166
    %v209 = vmul.f32 %v73, %v166
    %v210 = vmul.f32 %v74, %v166
    %v211 = vmul.f32 %v75, %v166
    %v212 = vmul.f32 %v76, %v166
    %v213 = vmul.f32 %v77, %v166
    %v214 = vmul.f32 %v78, %v166
    %v215 = vmul.f32 %v79, %v166
    %v216 = vmul.f32 %v80, %v166
    %v217 = vmul.f32 %v81, %v166
    %v218 = vmul.f32 %v82, %v166
    %v219 = vmul.f32 %v83, %v166
    %v220 = vmul.f32 %v84, %v166
    %v221 = vmul.f32 %v85, %v166
    %v222 = vmul.f32 %v86, %v166
    %v223 = vmul.f32 %v87, %v166
    %v224 = vmul.f32 %v88, %v166
    %v225 = vmul.f32 %v89, %v166
    %v226 = vmul.f32 %v90, %v166
    %v227 = vmul.f32 %v91, %v166
    %v228 = vmul.f32 %v92, %v166
    %v229 = vmul.f32 %v93, %v166
    %v230 = vmul.f32 %v94, %v166
    %v231 = vmul.f32 %v95, %v166
    %v232 = vmul.f32 %v96, %v166
    %v233 = vmul.f32 %v97, %v166
    %v234 = vmul.f32 %v98, %v166
    %v235 = vmul.f32 %v99, %v166
    %v236 = vmul.f32 %v100, %v166
    %v237 = vmul.f32 %v101, %v166
    %v238 = vmul.f32 %v102, %v166
    %v239 = vmul.f32 %v103, %v166
    %v240 = vmul.f32 %v104, %v166
    %v241 = vmul.f32 %v105, %v166
    %v242 = vmul.f32 %v106, %v166
    %v243 = vmul.f32 %v107, %v166
    %v244 = vmul.f32 %v108, %v166
    %v245 = vmul.f32 %v109, %v166
    %v246 = vmul.f32 %v110, %v166
    %v247 = vmul.f32 %v111, %v166
    %v248 = vmul.f32 %v112, %v166
    %v249 = vmul.f32 %v113, %v166
    %v250 = vmul.f32 %v114, %v166
    %v251 = vmul.f32 %v115, %v166
    %v252 = vmul.f32 %v116, %v166
    %v253 = vmul.f32 %v117, %v166
    %v254 = vmul.f32 %v118, %v166
    %v255 = vmul.f32 %v119, %v166
    %v256 = vmul.f32 %v120, %v166
    %v257 = vmul.f32 %v121, %v166
    %v258 = vmul.f32 %v122, %v166
    %v259 = vmul.f32 %v123, %v166
    %v260 = vmul.f32 %v124, %v166
    %v261 = vmul.f32 %v125, %v166
    %v262 = vmul.f32 %v126, %v166
    %v263 = vmul.f32 %v127, %v166
    %v264 = vmul.f32 %v128, %v166
    %v265 = vmul.f32 %v129, %v166
    %v266 = vmul.f32 %v130, %v166
    %v267 = vmul.f32 %v131, %v166
    %v268 = vmul.f32 %v132, %v166
    %v269 = vmul.f32 %v133, %v166
    %v270 = vmul.f32 %v134, %v166
    %v271 = vmul.f32 %v135, %v166
    %v272 = vmul.f32 %v136, %v166
    %v273 = vmul.f32 %v137, %v166
    %v274 = vmul.f32 %v138, %v166
    %v275 = vmul.f32 %v139, %v166
    %v276 = vmul.f32 %v140, %v166
    %v277 = vmul.f32 %v141, %v166
    %v278 = vmul.f32 %v142, %v166
    %v279 = vmul.f32 %v143, %v166
    %v280 = vmul.f32 %v144, %v166
    %v281 = vmul.f32 %v145, %v166
    %v282 = vmul.f32 %v146, %v166
    %v283 = vmul.f32 %v147, %v166
    %v284 = vmul.f32 %v148, %v166
    %v285 = vmul.f32 %v149, %v166
    %v286 = vmul.f32 %v150, %v166
    %v287 = vmul.f32 %v151, %v166
    %v288 = vmul.f32 %v152, %v166
    %v289 = vmul.f32 %v153, %v166
    %v290 = vmul.f32 %v154, %v166
    %v291 = vmul.f32 %v155, %v166
    %v292 = vmul.f32 %v156, %v166
    %v293 = vmul.f32 %v157, %v166
    %v294 = vmul.f32 %v158, %v166
    %v295 = vmul.f32 %v159, %v166
    %296 = vadd.xlane.f32.xlu0 %v168
    %v297 = vpop.xlane.xlu0 %296
    %298 = vadd.xlane.f32.xlu0 %v169
    %v299 = vpop.xlane.xlu0 %298
    %300 = vadd.xlane.f32.xlu0 %v170
    %v301 = vpop.xlane.xlu0 %300
    %302 = vadd.xlane.f32.xlu0 %v171
    %v303 = vpop.xlane.xlu0 %302
    %304 = vadd.xlane.f32.xlu0 %v172
    %v305 = vpop.xlane.xlu0 %304
    %306 = vadd.xlane.f32.xlu0 %v173
    %v307 = vpop.xlane.xlu0 %306
    %308 = vadd.xlane.f32.xlu0 %v174
    %v309 = vpop.xlane.xlu0 %308
    %310 = vadd.xlane.f32.xlu0 %v175
    %v311 = vpop.xlane.xlu0 %310
    %312 = vadd.xlane.f32.xlu0 %v176
    %v313 = vpop.xlane.xlu0 %312
    %314 = vadd.xlane.f32.xlu0 %v177
    %v315 = vpop.xlane.xlu0 %314
    %316 = vadd.xlane.f32.xlu0 %v178
    %v317 = vpop.xlane.xlu0 %316
    %318 = vadd.xlane.f32.xlu0 %v179
    %v319 = vpop.xlane.xlu0 %318
    %320 = vadd.xlane.f32.xlu0 %v180
    %v321 = vpop.xlane.xlu0 %320
    %322 = vadd.xlane.f32.xlu0 %v181
    %v323 = vpop.xlane.xlu0 %322
    %324 = vadd.xlane.f32.xlu0 %v182
    %v325 = vpop.xlane.xlu0 %324
    %326 = vadd.xlane.f32.xlu0 %v183
    %v327 = vpop.xlane.xlu0 %326
    %328 = vadd.xlane.f32.xlu0 %v184
    %v329 = vpop.xlane.xlu0 %328
    %330 = vadd.xlane.f32.xlu0 %v185
    %v331 = vpop.xlane.xlu0 %330
    %332 = vadd.xlane.f32.xlu0 %v186
    %v333 = vpop.xlane.xlu0 %332
    %334 = vadd.xlane.f32.xlu0 %v187
    %v335 = vpop.xlane.xlu0 %334
    %336 = vadd.xlane.f32.xlu0 %v188
    %v337 = vpop.xlane.xlu0 %336
    %338 = vadd.xlane.f32.xlu0 %v189
    %v339 = vpop.xlane.xlu0 %338
    %340 = vadd.xlane.f32.xlu0 %v190
    %v341 = vpop.xlane.xlu0 %340
    %342 = vadd.xlane.f32.xlu0 %v191
    %v343 = vpop.xlane.xlu0 %342
    %344 = vadd.xlane.f32.xlu0 %v192
    %v345 = vpop.xlane.xlu0 %344
    %346 = vadd.xlane.f32.xlu0 %v193
    %v347 = vpop.xlane.xlu0 %346
    %348 = vadd.xlane.f32.xlu0 %v194
    %v349 = vpop.xlane.xlu0 %348
    %350 = vadd.xlane.f32.xlu0 %v195
    %v351 = vpop.xlane.xlu0 %350
    %352 = vadd.xlane.f32.xlu0 %v196
    %v353 = vpop.xlane.xlu0 %352
    %354 = vadd.xlane.f32.xlu0 %v197
    %v355 = vpop.xlane.xlu0 %354
    %356 = vadd.xlane.f32.xlu0 %v198
    %v357 = vpop.xlane.xlu0 %356
    %358 = vadd.xlane.f32.xlu0 %v199
    %v359 = vpop.xlane.xlu0 %358
    %360 = vadd.xlane.f32.xlu0 %v200
    %v361 = vpop.xlane.xlu0 %360
    %362 = vadd.xlane.f32.xlu0 %v201
    %v363 = vpop.xlane.xlu0 %362
    %364 = vadd.xlane.f32.xlu0 %v202
    %v365 = vpop.xlane.xlu0 %364
    %366 = vadd.xlane.f32.xlu0 %v203
    %v367 = vpop.xlane.xlu0 %366
    %368 = vadd.xlane.f32.xlu0 %v204
    %v369 = vpop.xlane.xlu0 %368
    %370 = vadd.xlane.f32.xlu0 %v205
    %v371 = vpop.xlane.xlu0 %370
    %372 = vadd.xlane.f32.xlu0 %v206
    %v373 = vpop.xlane.xlu0 %372
    %374 = vadd.xlane.f32.xlu0 %v207
    %v375 = vpop.xlane.xlu0 %374
    %376 = vadd.xlane.f32.xlu0 %v208
    %v377 = vpop.xlane.xlu0 %376
    %378 = vadd.xlane.f32.xlu0 %v209
    %v379 = vpop.xlane.xlu0 %378
    %380 = vadd.xlane.f32.xlu0 %v210
    %v381 = vpop.xlane.xlu0 %380
    %382 = vadd.xlane.f32.xlu0 %v211
    %v383 = vpop.xlane.xlu0 %382
    %384 = vadd.xlane.f32.xlu0 %v212
    %v385 = vpop.xlane.xlu0 %384
    %386 = vadd.xlane.f32.xlu0 %v213
    %v387 = vpop.xlane.xlu0 %386
    %388 = vadd.xlane.f32.xlu0 %v214
    %v389 = vpop.xlane.xlu0 %388
    %390 = vadd.xlane.f32.xlu0 %v215
    %v391 = vpop.xlane.xlu0 %390
    %392 = vadd.xlane.f32.xlu0 %v216
    %v393 = vpop.xlane.xlu0 %392
    %394 = vadd.xlane.f32.xlu0 %v217
    %v395 = vpop.xlane.xlu0 %394
    %396 = vadd.xlane.f32.xlu0 %v218
    %v397 = vpop.xlane.xlu0 %396
    %398 = vadd.xlane.f32.xlu0 %v219
    %v399 = vpop.xlane.xlu0 %398
    %400 = vadd.xlane.f32.xlu0 %v220
    %v401 = vpop.xlane.xlu0 %400
    %402 = vadd.xlane.f32.xlu0 %v221
    %v403 = vpop.xlane.xlu0 %402
    %404 = vadd.xlane.f32.xlu0 %v222
    %v405 = vpop.xlane.xlu0 %404
    %406 = vadd.xlane.f32.xlu0 %v223
    %v407 = vpop.xlane.xlu0 %406
    %408 = vadd.xlane.f32.xlu0 %v224
    %v409 = vpop.xlane.xlu0 %408
    %410 = vadd.xlane.f32.xlu0 %v225
    %v411 = vpop.xlane.xlu0 %410
    %412 = vadd.xlane.f32.xlu0 %v226
    %v413 = vpop.xlane.xlu0 %412
    %414 = vadd.xlane.f32.xlu0 %v227
    %v415 = vpop.xlane.xlu0 %414
    %416 = vadd.xlane.f32.xlu0 %v228
    %v417 = vpop.xlane.xlu0 %416
    %418 = vadd.xlane.f32.xlu0 %v229
    %v419 = vpop.xlane.xlu0 %418
    %420 = vadd.xlane.f32.xlu0 %v230
    %v421 = vpop.xlane.xlu0 %420
    %422 = vadd.xlane.f32.xlu0 %v231
    %v423 = vpop.xlane.xlu0 %422
    %424 = vadd.xlane.f32.xlu0 %v232
    %v425 = vpop.xlane.xlu0 %424
    %426 = vadd.xlane.f32.xlu0 %v233
    %v427 = vpop.xlane.xlu0 %426
    %428 = vadd.xlane.f32.xlu0 %v234
    %v429 = vpop.xlane.xlu0 %428
    %430 = vadd.xlane.f32.xlu0 %v235
    %v431 = vpop.xlane.xlu0 %430
    %432 = vadd.xlane.f32.xlu0 %v236
    %v433 = vpop.xlane.xlu0 %432
    %434 = vadd.xlane.f32.xlu0 %v237
    %v435 = vpop.xlane.xlu0 %434
    %436 = vadd.xlane.f32.xlu0 %v238
    %v437 = vpop.xlane.xlu0 %436
    %438 = vadd.xlane.f32.xlu0 %v239
    %v439 = vpop.xlane.xlu0 %438
    %440 = vadd.xlane.f32.xlu0 %v240
    %v441 = vpop.xlane.xlu0 %440
    %442 = vadd.xlane.f32.xlu0 %v241
    %v443 = vpop.xlane.xlu0 %442
    %444 = vadd.xlane.f32.xlu0 %v242
    %v445 = vpop.xlane.xlu0 %444
    %446 = vadd.xlane.f32.xlu0 %v243
    %v447 = vpop.xlane.xlu0 %446
    %448 = vadd.xlane.f32.xlu0 %v244
    %v449 = vpop.xlane.xlu0 %448
    %450 = vadd.xlane.f32.xlu0 %v245
    %v451 = vpop.xlane.xlu0 %450
    %452 = vadd.xlane.f32.xlu0 %v246
    %v453 = vpop.xlane.xlu0 %452
    %454 = vadd.xlane.f32.xlu0 %v247
    %v455 = vpop.xlane.xlu0 %454
    %456 = vadd.xlane.f32.xlu0 %v248
    %v457 = vpop.xlane.xlu0 %456
    %458 = vadd.xlane.f32.xlu0 %v249
    %v459 = vpop.xlane.xlu0 %458
    %460 = vadd.xlane.f32.xlu0 %v250
    %v461 = vpop.xlane.xlu0 %460
    %462 = vadd.xlane.f32.xlu0 %v251
    %v463 = vpop.xlane.xlu0 %462
    %464 = vadd.xlane.f32.xlu0 %v252
    %v465 = vpop.xlane.xlu0 %464
    %466 = vadd.xlane.f32.xlu0 %v253
    %v467 = vpop.xlane.xlu0 %466
    %468 = vadd.xlane.f32.xlu0 %v254
    %v469 = vpop.xlane.xlu0 %468
    %470 = vadd.xlane.f32.xlu0 %v255
    %v471 = vpop.xlane.xlu0 %470
    %472 = vadd.xlane.f32.xlu0 %v256
    %v473 = vpop.xlane.xlu0 %472
    %474 = vadd.xlane.f32.xlu0 %v257
    %v475 = vpop.xlane.xlu0 %474
    %476 = vadd.xlane.f32.xlu0 %v258
    %v477 = vpop.xlane.xlu0 %476
    %478 = vadd.xlane.f32.xlu0 %v259
    %v479 = vpop.xlane.xlu0 %478
    %480 = vadd.xlane.f32.xlu0 %v260
    %v481 = vpop.xlane.xlu0 %480
    %482 = vadd.xlane.f32.xlu0 %v261
    %v483 = vpop.xlane.xlu0 %482
    %484 = vadd.xlane.f32.xlu0 %v262
    %v485 = vpop.xlane.xlu0 %484
    %486 = vadd.xlane.f32.xlu0 %v263
    %v487 = vpop.xlane.xlu0 %486
    %488 = vadd.xlane.f32.xlu0 %v264
    %v489 = vpop.xlane.xlu0 %488
    %490 = vadd.xlane.f32.xlu0 %v265
    %v491 = vpop.xlane.xlu0 %490
    %492 = vadd.xlane.f32.xlu0 %v266
    %v493 = vpop.xlane.xlu0 %492
    %494 = vadd.xlane.f32.xlu0 %v267
    %v495 = vpop.xlane.xlu0 %494
    %496 = vadd.xlane.f32.xlu0 %v268
    %v497 = vpop.xlane.xlu0 %496
    %498 = vadd.xlane.f32.xlu0 %v269
    %v499 = vpop.xlane.xlu0 %498
    %500 = vadd.xlane.f32.xlu0 %v270
    %v501 = vpop.xlane.xlu0 %500
    %502 = vadd.xlane.f32.xlu0 %v271
    %v503 = vpop.xlane.xlu0 %502
    %504 = vadd.xlane.f32.xlu0 %v272
    %v505 = vpop.xlane.xlu0 %504
    %506 = vadd.xlane.f32.xlu0 %v273
    %v507 = vpop.xlane.xlu0 %506
    %508 = vadd.xlane.f32.xlu0 %v274
    %v509 = vpop.xlane.xlu0 %508
    %510 = vadd.xlane.f32.xlu0 %v275
    %v511 = vpop.xlane.xlu0 %510
    %512 = vadd.xlane.f32.xlu0 %v276
    %v513 = vpop.xlane.xlu0 %512
    %514 = vadd.xlane.f32.xlu0 %v277
    %v515 = vpop.xlane.xlu0 %514
    %516 = vadd.xlane.f32.xlu0 %v278
    %v517 = vpop.xlane.xlu0 %516
    %518 = vadd.xlane.f32.xlu0 %v279
    %v519 = vpop.xlane.xlu0 %518
    %520 = vadd.xlane.f32.xlu0 %v280
    %v521 = vpop.xlane.xlu0 %520
    %522 = vadd.xlane.f32.xlu0 %v281
    %v523 = vpop.xlane.xlu0 %522
    %524 = vadd.xlane.f32.xlu0 %v282
    %v525 = vpop.xlane.xlu0 %524
    %526 = vadd.xlane.f32.xlu0 %v283
    %v527 = vpop.xlane.xlu0 %526
    %528 = vadd.xlane.f32.xlu0 %v284
    %v529 = vpop.xlane.xlu0 %528
    %530 = vadd.xlane.f32.xlu0 %v285
    %v531 = vpop.xlane.xlu0 %530
    %532 = vadd.xlane.f32.xlu0 %v286
    %v533 = vpop.xlane.xlu0 %532
    %534 = vadd.xlane.f32.xlu0 %v287
    %v535 = vpop.xlane.xlu0 %534
    %536 = vadd.xlane.f32.xlu0 %v288
    %v537 = vpop.xlane.xlu0 %536
    %538 = vadd.xlane.f32.xlu0 %v289
    %v539 = vpop.xlane.xlu0 %538
    %540 = vadd.xlane.f32.xlu0 %v290
    %v541 = vpop.xlane.xlu0 %540
    %542 = vadd.xlane.f32.xlu0 %v291
    %v543 = vpop.xlane.xlu0 %542
    %544 = vadd.xlane.f32.xlu0 %v292
    %v545 = vpop.xlane.xlu0 %544
    %546 = vadd.xlane.f32.xlu0 %v293
    %v547 = vpop.xlane.xlu0 %546
    %548 = vadd.xlane.f32.xlu0 %v294
    %v549 = vpop.xlane.xlu0 %548
    %550 = vadd.xlane.f32.xlu0 %v295
    %v551 = vpop.xlane.xlu0 %550
    %v552 = vtanh.pop %v297
    %v553 = vtanh.pop %v299
    %v554 = vtanh.pop %v301
    %v555 = vtanh.pop %v303
    %v556 = vtanh.pop %v305
    %v557 = vtanh.pop %v307
    %v558 = vtanh.pop %v309
    %v559 = vtanh.pop %v311
    %v560 = vtanh.pop %v313
    %v561 = vtanh.pop %v315
    %v562 = vtanh.pop %v317
    %v563 = vtanh.pop %v319
    %v564 = vtanh.pop %v321
    %v565 = vtanh.pop %v323
    %v566 = vtanh.pop %v325
    %v567 = vtanh.pop %v327
    %v568 = vtanh.pop %v329
    %v569 = vtanh.pop %v331
    %v570 = vtanh.pop %v333
    %v571 = vtanh.pop %v335
    %v572 = vtanh.pop %v337
    %v573 = vtanh.pop %v339
    %v574 = vtanh.pop %v341
    %v575 = vtanh.pop %v343
    %v576 = vtanh.pop %v345
    %v577 = vtanh.pop %v347
    %v578 = vtanh.pop %v349
    %v579 = vtanh.pop %v351
    %v580 = vtanh.pop %v353
    %v581 = vtanh.pop %v355
    %v582 = vtanh.pop %v357
    %v583 = vtanh.pop %v359
    %v584 = vtanh.pop %v361
    %v585 = vtanh.pop %v363
    %v586 = vtanh.pop %v365
    %v587 = vtanh.pop %v367
    %v588 = vtanh.pop %v369
    %v589 = vtanh.pop %v371
    %v590 = vtanh.pop %v373
    %v591 = vtanh.pop %v375
    %v592 = vtanh.pop %v377
    %v593 = vtanh.pop %v379
    %v594 = vtanh.pop %v381
    %v595 = vtanh.pop %v383
    %v596 = vtanh.pop %v385
    %v597 = vtanh.pop %v387
    %v598 = vtanh.pop %v389
    %v599 = vtanh.pop %v391
    %v600 = vtanh.pop %v393
    %v601 = vtanh.pop %v395
    %v602 = vtanh.pop %v397
    %v603 = vtanh.pop %v399
    %v604 = vtanh.pop %v401
    %v605 = vtanh.pop %v403
    %v606 = vtanh.pop %v405
    %v607 = vtanh.pop %v407
    %v608 = vtanh.pop %v409
    %v609 = vtanh.pop %v411
    %v610 = vtanh.pop %v413
    %v611 = vtanh.pop %v415
    %v612 = vtanh.pop %v417
    %v613 = vtanh.pop %v419
    %v614 = vtanh.pop %v421
    %v615 = vtanh.pop %v423
    %v616 = vtanh.pop %v425
    %v617 = vtanh.pop %v427
    %v618 = vtanh.pop %v429
    %v619 = vtanh.pop %v431
    %v620 = vtanh.pop %v433
    %v621 = vtanh.pop %v435
    %v622 = vtanh.pop %v437
    %v623 = vtanh.pop %v439
    %v624 = vtanh.pop %v441
    %v625 = vtanh.pop %v443
    %v626 = vtanh.pop %v445
    %v627 = vtanh.pop %v447
    %v628 = vtanh.pop %v449
    %v629 = vtanh.pop %v451
    %v630 = vtanh.pop %v453
    %v631 = vtanh.pop %v455
    %v632 = vtanh.pop %v457
    %v633 = vtanh.pop %v459
    %v634 = vtanh.pop %v461
    %v635 = vtanh.pop %v463
    %v636 = vtanh.pop %v465
    %v637 = vtanh.pop %v467
    %v638 = vtanh.pop %v469
    %v639 = vtanh.pop %v471
    %v640 = vtanh.pop %v473
    %v641 = vtanh.pop %v475
    %v642 = vtanh.pop %v477
    %v643 = vtanh.pop %v479
    %v644 = vtanh.pop %v481
    %v645 = vtanh.pop %v483
    %v646 = vtanh.pop %v485
    %v647 = vtanh.pop %v487
    %v648 = vtanh.pop %v489
    %v649 = vtanh.pop %v491
    %v650 = vtanh.pop %v493
    %v651 = vtanh.pop %v495
    %v652 = vtanh.pop %v497
    %v653 = vtanh.pop %v499
    %v654 = vtanh.pop %v501
    %v655 = vtanh.pop %v503
    %v656 = vtanh.pop %v505
    %v657 = vtanh.pop %v507
    %v658 = vtanh.pop %v509
    %v659 = vtanh.pop %v511
    %v660 = vtanh.pop %v513
    %v661 = vtanh.pop %v515
    %v662 = vtanh.pop %v517
    %v663 = vtanh.pop %v519
    %v664 = vtanh.pop %v521
    %v665 = vtanh.pop %v523
    %v666 = vtanh.pop %v525
    %v667 = vtanh.pop %v527
    %v668 = vtanh.pop %v529
    %v669 = vtanh.pop %v531
    %v670 = vtanh.pop %v533
    %v671 = vtanh.pop %v535
    %v672 = vtanh.pop %v537
    %v673 = vtanh.pop %v539
    %v674 = vtanh.pop %v541
    %v675 = vtanh.pop %v543
    %v676 = vtanh.pop %v545
    %v677 = vtanh.pop %v547
    %v678 = vtanh.pop %v549
    %v679 = vtanh.pop %v551
    %v680 = vlaneseq
    %v681 = vand.u32 %v680, 127
    %682 = vset.pattern.permute.xlu0 0
    %683 = vperm.xlu0 %682, %v161
    %v684 = vpop.permute.xlu0 %683
    %vm685 = vcmp.lt.s32.totalorder %v681, %v684
    %v814 = vlaneseq
    %v815 = vshrl.u32 %v814, 7
    %v816 = vsub.s32 %v681, %v815
    %v817 = vrot.slane %v552, %v816
    %v818 = vadd.s32 %v681, 4294967288
    %v819 = vlaneseq
    %v820 = vshrl.u32 %v819, 7
    %v821 = vsub.s32 %v818, %v820
    %v822 = vrot.slane %v553, %v821
    %vm823 = vcmask 130112
    %v824 = vsel %vm823, %v822, %v817
    %v825 = vadd.s32 %v681, 4294967280
    %v826 = vlaneseq
    %v827 = vshrl.u32 %v826, 7
    %v828 = vsub.s32 %v825, %v827
    %v829 = vrot.slane %v554, %v828
    %vm830 = vcmask 195712
    %v831 = vsel %vm830, %v829, %v824
    %v832 = vadd.s32 %v681, 4294967272
    %v833 = vlaneseq
    %v834 = vshrl.u32 %v833, 7
    %v835 = vsub.s32 %v832, %v834
    %v836 = vrot.slane %v555, %v835
    %vm837 = vcmask 261312
    %v838 = vsel %vm837, %v836, %v831
    %v839 = vadd.s32 %v681, 4294967264
    %v840 = vlaneseq
    %v841 = vshrl.u32 %v840, 7
    %v842 = vsub.s32 %v839, %v841
    %v843 = vrot.slane %v556, %v842
    %vm844 = vcmask 326912
    %v845 = vsel %vm844, %v843, %v838
    %v846 = vadd.s32 %v681, 4294967256
    %v847 = vlaneseq
    %v848 = vshrl.u32 %v847, 7
    %v849 = vsub.s32 %v846, %v848
    %v850 = vrot.slane %v557, %v849
    %vm851 = vcmask 392512
    %v852 = vsel %vm851, %v850, %v845
    %v853 = vadd.s32 %v681, 4294967248
    %v854 = vlaneseq
    %v855 = vshrl.u32 %v854, 7
    %v856 = vsub.s32 %v853, %v855
    %v857 = vrot.slane %v558, %v856
    %vm858 = vcmask 458112
    %v859 = vsel %vm858, %v857, %v852
    %v860 = vadd.s32 %v681, 4294967240
    %v861 = vlaneseq
    %v862 = vshrl.u32 %v861, 7
    %v863 = vsub.s32 %v860, %v862
    %v864 = vrot.slane %v559, %v863
    %vm865 = vcmask 523712
    %v866 = vsel %vm865, %v864, %v859
    %v867 = vadd.s32 %v681, 4294967232
    %v868 = vlaneseq
    %v869 = vshrl.u32 %v868, 7
    %v870 = vsub.s32 %v867, %v869
    %v871 = vrot.slane %v560, %v870
    %vm872 = vcmask 589312
    %v873 = vsel %vm872, %v871, %v866
    %v874 = vadd.s32 %v681, 4294967224
    %v875 = vlaneseq
    %v876 = vshrl.u32 %v875, 7
    %v877 = vsub.s32 %v874, %v876
    %v878 = vrot.slane %v561, %v877
    %vm879 = vcmask 654912
    %v880 = vsel %vm879, %v878, %v873
    %v881 = vadd.s32 %v681, 4294967216
    %v882 = vlaneseq
    %v883 = vshrl.u32 %v882, 7
    %v884 = vsub.s32 %v881, %v883
    %v885 = vrot.slane %v562, %v884
    %vm886 = vcmask 720512
    %v887 = vsel %vm886, %v885, %v880
    %v888 = vadd.s32 %v681, 4294967208
    %v889 = vlaneseq
    %v890 = vshrl.u32 %v889, 7
    %v891 = vsub.s32 %v888, %v890
    %v892 = vrot.slane %v563, %v891
    %vm893 = vcmask 786112
    %v894 = vsel %vm893, %v892, %v887
    %v895 = vadd.s32 %v681, 4294967200
    %v896 = vlaneseq
    %v897 = vshrl.u32 %v896, 7
    %v898 = vsub.s32 %v895, %v897
    %v899 = vrot.slane %v564, %v898
    %vm900 = vcmask 851712
    %v901 = vsel %vm900, %v899, %v894
    %v902 = vadd.s32 %v681, 4294967192
    %v903 = vlaneseq
    %v904 = vshrl.u32 %v903, 7
    %v905 = vsub.s32 %v902, %v904
    %v906 = vrot.slane %v565, %v905
    %vm907 = vcmask 917312
    %v908 = vsel %vm907, %v906, %v901
    %v909 = vadd.s32 %v681, 4294967184
    %v910 = vlaneseq
    %v911 = vshrl.u32 %v910, 7
    %v912 = vsub.s32 %v909, %v911
    %v913 = vrot.slane %v566, %v912
    %vm914 = vcmask 982912
    %v915 = vsel %vm914, %v913, %v908
    %v916 = vadd.s32 %v681, 4294967176
    %v917 = vlaneseq
    %v918 = vshrl.u32 %v917, 7
    %v919 = vsub.s32 %v916, %v918
    %v920 = vrot.slane %v567, %v919
    %vm921 = vcmask 1048512
    %v922 = vsel %vm921, %v920, %v915
    %v923 = vlaneseq
    %v924 = vshrl.u32 %v923, 7
    %v925 = vsub.s32 %v681, %v924
    %v926 = vrot.slane %v568, %v925
    %v927 = vlaneseq
    %v928 = vshrl.u32 %v927, 7
    %v929 = vsub.s32 %v818, %v928
    %v930 = vrot.slane %v569, %v929
    %v931 = vsel %vm823, %v930, %v926
    %v932 = vlaneseq
    %v933 = vshrl.u32 %v932, 7
    %v934 = vsub.s32 %v825, %v933
    %v935 = vrot.slane %v570, %v934
    %v936 = vsel %vm830, %v935, %v931
    %v937 = vlaneseq
    %v938 = vshrl.u32 %v937, 7
    %v939 = vsub.s32 %v832, %v938
    %v940 = vrot.slane %v571, %v939
    %v941 = vsel %vm837, %v940, %v936
    %v942 = vlaneseq
    %v943 = vshrl.u32 %v942, 7
    %v944 = vsub.s32 %v839, %v943
    %v945 = vrot.slane %v572, %v944
    %v946 = vsel %vm844, %v945, %v941
    %v947 = vlaneseq
    %v948 = vshrl.u32 %v947, 7
    %v949 = vsub.s32 %v846, %v948
    %v950 = vrot.slane %v573, %v949
    %v951 = vsel %vm851, %v950, %v946
    %v952 = vlaneseq
    %v953 = vshrl.u32 %v952, 7
    %v954 = vsub.s32 %v853, %v953
    %v955 = vrot.slane %v574, %v954
    %v956 = vsel %vm858, %v955, %v951
    %v957 = vlaneseq
    %v958 = vshrl.u32 %v957, 7
    %v959 = vsub.s32 %v860, %v958
    %v960 = vrot.slane %v575, %v959
    %v961 = vsel %vm865, %v960, %v956
    %v962 = vlaneseq
    %v963 = vshrl.u32 %v962, 7
    %v964 = vsub.s32 %v867, %v963
    %v965 = vrot.slane %v576, %v964
    %v966 = vsel %vm872, %v965, %v961
    %v967 = vlaneseq
    %v968 = vshrl.u32 %v967, 7
    %v969 = vsub.s32 %v874, %v968
    %v970 = vrot.slane %v577, %v969
    %v971 = vsel %vm879, %v970, %v966
    %v972 = vlaneseq
    %v973 = vshrl.u32 %v972, 7
    %v974 = vsub.s32 %v881, %v973
    %v975 = vrot.slane %v578, %v974
    %v976 = vsel %vm886, %v975, %v971
    %v977 = vlaneseq
    %v978 = vshrl.u32 %v977, 7
    %v979 = vsub.s32 %v888, %v978
    %v980 = vrot.slane %v579, %v979
    %v981 = vsel %vm893, %v980, %v976
    %v982 = vlaneseq
    %v983 = vshrl.u32 %v982, 7
    %v984 = vsub.s32 %v895, %v983
    %v985 = vrot.slane %v580, %v984
    %v986 = vsel %vm900, %v985, %v981
    %v987 = vlaneseq
    %v988 = vshrl.u32 %v987, 7
    %v989 = vsub.s32 %v902, %v988
    %v990 = vrot.slane %v581, %v989
    %v991 = vsel %vm907, %v990, %v986
    %v992 = vlaneseq
    %v993 = vshrl.u32 %v992, 7
    %v994 = vsub.s32 %v909, %v993
    %v995 = vrot.slane %v582, %v994
    %v996 = vsel %vm914, %v995, %v991
    %v997 = vlaneseq
    %v998 = vshrl.u32 %v997, 7
    %v999 = vsub.s32 %v916, %v998
    %v1000 = vrot.slane %v583, %v999
    %v1001 = vsel %vm921, %v1000, %v996
    %v1002 = vlaneseq
    %v1003 = vshrl.u32 %v1002, 7
    %v1004 = vsub.s32 %v681, %v1003
    %v1005 = vrot.slane %v584, %v1004
    %v1006 = vlaneseq
    %v1007 = vshrl.u32 %v1006, 7
    %v1008 = vsub.s32 %v818, %v1007
    %v1009 = vrot.slane %v585, %v1008
    %v1010 = vsel %vm823, %v1009, %v1005
    %v1011 = vlaneseq
    %v1012 = vshrl.u32 %v1011, 7
    %v1013 = vsub.s32 %v825, %v1012
    %v1014 = vrot.slane %v586, %v1013
    %v1015 = vsel %vm830, %v1014, %v1010
    %v1016 = vlaneseq
    %v1017 = vshrl.u32 %v1016, 7
    %v1018 = vsub.s32 %v832, %v1017
    %v1019 = vrot.slane %v587, %v1018
    %v1020 = vsel %vm837, %v1019, %v1015
    %v1021 = vlaneseq
    %v1022 = vshrl.u32 %v1021, 7
    %v1023 = vsub.s32 %v839, %v1022
    %v1024 = vrot.slane %v588, %v1023
    %v1025 = vsel %vm844, %v1024, %v1020
    %v1026 = vlaneseq
    %v1027 = vshrl.u32 %v1026, 7
    %v1028 = vsub.s32 %v846, %v1027
    %v1029 = vrot.slane %v589, %v1028
    %v1030 = vsel %vm851, %v1029, %v1025
    %v1031 = vlaneseq
    %v1032 = vshrl.u32 %v1031, 7
    %v1033 = vsub.s32 %v853, %v1032
    %v1034 = vrot.slane %v590, %v1033
    %v1035 = vsel %vm858, %v1034, %v1030
    %v1036 = vlaneseq
    %v1037 = vshrl.u32 %v1036, 7
    %v1038 = vsub.s32 %v860, %v1037
    %v1039 = vrot.slane %v591, %v1038
    %v1040 = vsel %vm865, %v1039, %v1035
    %v1041 = vlaneseq
    %v1042 = vshrl.u32 %v1041, 7
    %v1043 = vsub.s32 %v867, %v1042
    %v1044 = vrot.slane %v592, %v1043
    %v1045 = vsel %vm872, %v1044, %v1040
    %v1046 = vlaneseq
    %v1047 = vshrl.u32 %v1046, 7
    %v1048 = vsub.s32 %v874, %v1047
    %v1049 = vrot.slane %v593, %v1048
    %v1050 = vsel %vm879, %v1049, %v1045
    %v1051 = vlaneseq
    %v1052 = vshrl.u32 %v1051, 7
    %v1053 = vsub.s32 %v881, %v1052
    %v1054 = vrot.slane %v594, %v1053
    %v1055 = vsel %vm886, %v1054, %v1050
    %v1056 = vlaneseq
    %v1057 = vshrl.u32 %v1056, 7
    %v1058 = vsub.s32 %v888, %v1057
    %v1059 = vrot.slane %v595, %v1058
    %v1060 = vsel %vm893, %v1059, %v1055
    %v1061 = vlaneseq
    %v1062 = vshrl.u32 %v1061, 7
    %v1063 = vsub.s32 %v895, %v1062
    %v1064 = vrot.slane %v596, %v1063
    %v1065 = vsel %vm900, %v1064, %v1060
    %v1066 = vlaneseq
    %v1067 = vshrl.u32 %v1066, 7
    %v1068 = vsub.s32 %v902, %v1067
    %v1069 = vrot.slane %v597, %v1068
    %v1070 = vsel %vm907, %v1069, %v1065
    %v1071 = vlaneseq
    %v1072 = vshrl.u32 %v1071, 7
    %v1073 = vsub.s32 %v909, %v1072
    %v1074 = vrot.slane %v598, %v1073
    %v1075 = vsel %vm914, %v1074, %v1070
    %v1076 = vlaneseq
    %v1077 = vshrl.u32 %v1076, 7
    %v1078 = vsub.s32 %v916, %v1077
    %v1079 = vrot.slane %v599, %v1078
    %v1080 = vsel %vm921, %v1079, %v1075
    %v1081 = vlaneseq
    %v1082 = vshrl.u32 %v1081, 7
    %v1083 = vsub.s32 %v681, %v1082
    %v1084 = vrot.slane %v600, %v1083
    %v1085 = vlaneseq
    %v1086 = vshrl.u32 %v1085, 7
    %v1087 = vsub.s32 %v818, %v1086
    %v1088 = vrot.slane %v601, %v1087
    %v1089 = vsel %vm823, %v1088, %v1084
    %v1090 = vlaneseq
    %v1091 = vshrl.u32 %v1090, 7
    %v1092 = vsub.s32 %v825, %v1091
    %v1093 = vrot.slane %v602, %v1092
    %v1094 = vsel %vm830, %v1093, %v1089
    %v1095 = vlaneseq
    %v1096 = vshrl.u32 %v1095, 7
    %v1097 = vsub.s32 %v832, %v1096
    %v1098 = vrot.slane %v603, %v1097
    %v1099 = vsel %vm837, %v1098, %v1094
    %v1100 = vlaneseq
    %v1101 = vshrl.u32 %v1100, 7
    %v1102 = vsub.s32 %v839, %v1101
    %v1103 = vrot.slane %v604, %v1102
    %v1104 = vsel %vm844, %v1103, %v1099
    %v1105 = vlaneseq
    %v1106 = vshrl.u32 %v1105, 7
    %v1107 = vsub.s32 %v846, %v1106
    %v1108 = vrot.slane %v605, %v1107
    %v1109 = vsel %vm851, %v1108, %v1104
    %v1110 = vlaneseq
    %v1111 = vshrl.u32 %v1110, 7
    %v1112 = vsub.s32 %v853, %v1111
    %v1113 = vrot.slane %v606, %v1112
    %v1114 = vsel %vm858, %v1113, %v1109
    %v1115 = vlaneseq
    %v1116 = vshrl.u32 %v1115, 7
    %v1117 = vsub.s32 %v860, %v1116
    %v1118 = vrot.slane %v607, %v1117
    %v1119 = vsel %vm865, %v1118, %v1114
    %v1120 = vlaneseq
    %v1121 = vshrl.u32 %v1120, 7
    %v1122 = vsub.s32 %v867, %v1121
    %v1123 = vrot.slane %v608, %v1122
    %v1124 = vsel %vm872, %v1123, %v1119
    %v1125 = vlaneseq
    %v1126 = vshrl.u32 %v1125, 7
    %v1127 = vsub.s32 %v874, %v1126
    %v1128 = vrot.slane %v609, %v1127
    %v1129 = vsel %vm879, %v1128, %v1124
    %v1130 = vlaneseq
    %v1131 = vshrl.u32 %v1130, 7
    %v1132 = vsub.s32 %v881, %v1131
    %v1133 = vrot.slane %v610, %v1132
    %v1134 = vsel %vm886, %v1133, %v1129
    %v1135 = vlaneseq
    %v1136 = vshrl.u32 %v1135, 7
    %v1137 = vsub.s32 %v888, %v1136
    %v1138 = vrot.slane %v611, %v1137
    %v1139 = vsel %vm893, %v1138, %v1134
    %v1140 = vlaneseq
    %v1141 = vshrl.u32 %v1140, 7
    %v1142 = vsub.s32 %v895, %v1141
    %v1143 = vrot.slane %v612, %v1142
    %v1144 = vsel %vm900, %v1143, %v1139
    %v1145 = vlaneseq
    %v1146 = vshrl.u32 %v1145, 7
    %v1147 = vsub.s32 %v902, %v1146
    %v1148 = vrot.slane %v613, %v1147
    %v1149 = vsel %vm907, %v1148, %v1144
    %v1150 = vlaneseq
    %v1151 = vshrl.u32 %v1150, 7
    %v1152 = vsub.s32 %v909, %v1151
    %v1153 = vrot.slane %v614, %v1152
    %v1154 = vsel %vm914, %v1153, %v1149
    %v1155 = vlaneseq
    %v1156 = vshrl.u32 %v1155, 7
    %v1157 = vsub.s32 %v916, %v1156
    %v1158 = vrot.slane %v615, %v1157
    %v1159 = vsel %vm921, %v1158, %v1154
    %v1160 = vlaneseq
    %v1161 = vshrl.u32 %v1160, 7
    %v1162 = vsub.s32 %v681, %v1161
    %v1163 = vrot.slane %v616, %v1162
    %v1164 = vlaneseq
    %v1165 = vshrl.u32 %v1164, 7
    %v1166 = vsub.s32 %v818, %v1165
    %v1167 = vrot.slane %v617, %v1166
    %v1168 = vsel %vm823, %v1167, %v1163
    %v1169 = vlaneseq
    %v1170 = vshrl.u32 %v1169, 7
    %v1171 = vsub.s32 %v825, %v1170
    %v1172 = vrot.slane %v618, %v1171
    %v1173 = vsel %vm830, %v1172, %v1168
    %v1174 = vlaneseq
    %v1175 = vshrl.u32 %v1174, 7
    %v1176 = vsub.s32 %v832, %v1175
    %v1177 = vrot.slane %v619, %v1176
    %v1178 = vsel %vm837, %v1177, %v1173
    %v1179 = vlaneseq
    %v1180 = vshrl.u32 %v1179, 7
    %v1181 = vsub.s32 %v839, %v1180
    %v1182 = vrot.slane %v620, %v1181
    %v1183 = vsel %vm844, %v1182, %v1178
    %v1184 = vlaneseq
    %v1185 = vshrl.u32 %v1184, 7
    %v1186 = vsub.s32 %v846, %v1185
    %v1187 = vrot.slane %v621, %v1186
    %v1188 = vsel %vm851, %v1187, %v1183
    %v1189 = vlaneseq
    %v1190 = vshrl.u32 %v1189, 7
    %v1191 = vsub.s32 %v853, %v1190
    %v1192 = vrot.slane %v622, %v1191
    %v1193 = vsel %vm858, %v1192, %v1188
    %v1194 = vlaneseq
    %v1195 = vshrl.u32 %v1194, 7
    %v1196 = vsub.s32 %v860, %v1195
    %v1197 = vrot.slane %v623, %v1196
    %v1198 = vsel %vm865, %v1197, %v1193
    %v1199 = vlaneseq
    %v1200 = vshrl.u32 %v1199, 7
    %v1201 = vsub.s32 %v867, %v1200
    %v1202 = vrot.slane %v624, %v1201
    %v1203 = vsel %vm872, %v1202, %v1198
    %v1204 = vlaneseq
    %v1205 = vshrl.u32 %v1204, 7
    %v1206 = vsub.s32 %v874, %v1205
    %v1207 = vrot.slane %v625, %v1206
    %v1208 = vsel %vm879, %v1207, %v1203
    %v1209 = vlaneseq
    %v1210 = vshrl.u32 %v1209, 7
    %v1211 = vsub.s32 %v881, %v1210
    %v1212 = vrot.slane %v626, %v1211
    %v1213 = vsel %vm886, %v1212, %v1208
    %v1214 = vlaneseq
    %v1215 = vshrl.u32 %v1214, 7
    %v1216 = vsub.s32 %v888, %v1215
    %v1217 = vrot.slane %v627, %v1216
    %v1218 = vsel %vm893, %v1217, %v1213
    %v1219 = vlaneseq
    %v1220 = vshrl.u32 %v1219, 7
    %v1221 = vsub.s32 %v895, %v1220
    %v1222 = vrot.slane %v628, %v1221
    %v1223 = vsel %vm900, %v1222, %v1218
    %v1224 = vlaneseq
    %v1225 = vshrl.u32 %v1224, 7
    %v1226 = vsub.s32 %v902, %v1225
    %v1227 = vrot.slane %v629, %v1226
    %v1228 = vsel %vm907, %v1227, %v1223
    %v1229 = vlaneseq
    %v1230 = vshrl.u32 %v1229, 7
    %v1231 = vsub.s32 %v909, %v1230
    %v1232 = vrot.slane %v630, %v1231
    %v1233 = vsel %vm914, %v1232, %v1228
    %v1234 = vlaneseq
    %v1235 = vshrl.u32 %v1234, 7
    %v1236 = vsub.s32 %v916, %v1235
    %v1237 = vrot.slane %v631, %v1236
    %v1238 = vsel %vm921, %v1237, %v1233
    %v1239 = vlaneseq
    %v1240 = vshrl.u32 %v1239, 7
    %v1241 = vsub.s32 %v681, %v1240
    %v1242 = vrot.slane %v632, %v1241
    %v1243 = vlaneseq
    %v1244 = vshrl.u32 %v1243, 7
    %v1245 = vsub.s32 %v818, %v1244
    %v1246 = vrot.slane %v633, %v1245
    %v1247 = vsel %vm823, %v1246, %v1242
    %v1248 = vlaneseq
    %v1249 = vshrl.u32 %v1248, 7
    %v1250 = vsub.s32 %v825, %v1249
    %v1251 = vrot.slane %v634, %v1250
    %v1252 = vsel %vm830, %v1251, %v1247
    %v1253 = vlaneseq
    %v1254 = vshrl.u32 %v1253, 7
    %v1255 = vsub.s32 %v832, %v1254
    %v1256 = vrot.slane %v635, %v1255
    %v1257 = vsel %vm837, %v1256, %v1252
    %v1258 = vlaneseq
    %v1259 = vshrl.u32 %v1258, 7
    %v1260 = vsub.s32 %v839, %v1259
    %v1261 = vrot.slane %v636, %v1260
    %v1262 = vsel %vm844, %v1261, %v1257
    %v1263 = vlaneseq
    %v1264 = vshrl.u32 %v1263, 7
    %v1265 = vsub.s32 %v846, %v1264
    %v1266 = vrot.slane %v637, %v1265
    %v1267 = vsel %vm851, %v1266, %v1262
    %v1268 = vlaneseq
    %v1269 = vshrl.u32 %v1268, 7
    %v1270 = vsub.s32 %v853, %v1269
    %v1271 = vrot.slane %v638, %v1270
    %v1272 = vsel %vm858, %v1271, %v1267
    %v1273 = vlaneseq
    %v1274 = vshrl.u32 %v1273, 7
    %v1275 = vsub.s32 %v860, %v1274
    %v1276 = vrot.slane %v639, %v1275
    %v1277 = vsel %vm865, %v1276, %v1272
    %v1278 = vlaneseq
    %v1279 = vshrl.u32 %v1278, 7
    %v1280 = vsub.s32 %v867, %v1279
    %v1281 = vrot.slane %v640, %v1280
    %v1282 = vsel %vm872, %v1281, %v1277
    %v1283 = vlaneseq
    %v1284 = vshrl.u32 %v1283, 7
    %v1285 = vsub.s32 %v874, %v1284
    %v1286 = vrot.slane %v641, %v1285
    %v1287 = vsel %vm879, %v1286, %v1282
    %v1288 = vlaneseq
    %v1289 = vshrl.u32 %v1288, 7
    %v1290 = vsub.s32 %v881, %v1289
    %v1291 = vrot.slane %v642, %v1290
    %v1292 = vsel %vm886, %v1291, %v1287
    %v1293 = vlaneseq
    %v1294 = vshrl.u32 %v1293, 7
    %v1295 = vsub.s32 %v888, %v1294
    %v1296 = vrot.slane %v643, %v1295
    %v1297 = vsel %vm893, %v1296, %v1292
    %v1298 = vlaneseq
    %v1299 = vshrl.u32 %v1298, 7
    %v1300 = vsub.s32 %v895, %v1299
    %v1301 = vrot.slane %v644, %v1300
    %v1302 = vsel %vm900, %v1301, %v1297
    %v1303 = vlaneseq
    %v1304 = vshrl.u32 %v1303, 7
    %v1305 = vsub.s32 %v902, %v1304
    %v1306 = vrot.slane %v645, %v1305
    %v1307 = vsel %vm907, %v1306, %v1302
    %v1308 = vlaneseq
    %v1309 = vshrl.u32 %v1308, 7
    %v1310 = vsub.s32 %v909, %v1309
    %v1311 = vrot.slane %v646, %v1310
    %v1312 = vsel %vm914, %v1311, %v1307
    %v1313 = vlaneseq
    %v1314 = vshrl.u32 %v1313, 7
    %v1315 = vsub.s32 %v916, %v1314
    %v1316 = vrot.slane %v647, %v1315
    %v1317 = vsel %vm921, %v1316, %v1312
    %v1318 = vlaneseq
    %v1319 = vshrl.u32 %v1318, 7
    %v1320 = vsub.s32 %v681, %v1319
    %v1321 = vrot.slane %v648, %v1320
    %v1322 = vlaneseq
    %v1323 = vshrl.u32 %v1322, 7
    %v1324 = vsub.s32 %v818, %v1323
    %v1325 = vrot.slane %v649, %v1324
    %v1326 = vsel %vm823, %v1325, %v1321
    %v1327 = vlaneseq
    %v1328 = vshrl.u32 %v1327, 7
    %v1329 = vsub.s32 %v825, %v1328
    %v1330 = vrot.slane %v650, %v1329
    %v1331 = vsel %vm830, %v1330, %v1326
    %v1332 = vlaneseq
    %v1333 = vshrl.u32 %v1332, 7
    %v1334 = vsub.s32 %v832, %v1333
    %v1335 = vrot.slane %v651, %v1334
    %v1336 = vsel %vm837, %v1335, %v1331
    %v1337 = vlaneseq
    %v1338 = vshrl.u32 %v1337, 7
    %v1339 = vsub.s32 %v839, %v1338
    %v1340 = vrot.slane %v652, %v1339
    %v1341 = vsel %vm844, %v1340, %v1336
    %v1342 = vlaneseq
    %v1343 = vshrl.u32 %v1342, 7
    %v1344 = vsub.s32 %v846, %v1343
    %v1345 = vrot.slane %v653, %v1344
    %v1346 = vsel %vm851, %v1345, %v1341
    %v1347 = vlaneseq
    %v1348 = vshrl.u32 %v1347, 7
    %v1349 = vsub.s32 %v853, %v1348
    %v1350 = vrot.slane %v654, %v1349
    %v1351 = vsel %vm858, %v1350, %v1346
    %v1352 = vlaneseq
    %v1353 = vshrl.u32 %v1352, 7
    %v1354 = vsub.s32 %v860, %v1353
    %v1355 = vrot.slane %v655, %v1354
    %v1356 = vsel %vm865, %v1355, %v1351
    %v1357 = vlaneseq
    %v1358 = vshrl.u32 %v1357, 7
    %v1359 = vsub.s32 %v867, %v1358
    %v1360 = vrot.slane %v656, %v1359
    %v1361 = vsel %vm872, %v1360, %v1356
    %v1362 = vlaneseq
    %v1363 = vshrl.u32 %v1362, 7
    %v1364 = vsub.s32 %v874, %v1363
    %v1365 = vrot.slane %v657, %v1364
    %v1366 = vsel %vm879, %v1365, %v1361
    %v1367 = vlaneseq
    %v1368 = vshrl.u32 %v1367, 7
    %v1369 = vsub.s32 %v881, %v1368
    %v1370 = vrot.slane %v658, %v1369
    %v1371 = vsel %vm886, %v1370, %v1366
    %v1372 = vlaneseq
    %v1373 = vshrl.u32 %v1372, 7
    %v1374 = vsub.s32 %v888, %v1373
    %v1375 = vrot.slane %v659, %v1374
    %v1376 = vsel %vm893, %v1375, %v1371
    %v1377 = vlaneseq
    %v1378 = vshrl.u32 %v1377, 7
    %v1379 = vsub.s32 %v895, %v1378
    %v1380 = vrot.slane %v660, %v1379
    %v1381 = vsel %vm900, %v1380, %v1376
    %v1382 = vlaneseq
    %v1383 = vshrl.u32 %v1382, 7
    %v1384 = vsub.s32 %v902, %v1383
    %v1385 = vrot.slane %v661, %v1384
    %v1386 = vsel %vm907, %v1385, %v1381
    %v1387 = vlaneseq
    %v1388 = vshrl.u32 %v1387, 7
    %v1389 = vsub.s32 %v909, %v1388
    %v1390 = vrot.slane %v662, %v1389
    %v1391 = vsel %vm914, %v1390, %v1386
    %v1392 = vlaneseq
    %v1393 = vshrl.u32 %v1392, 7
    %v1394 = vsub.s32 %v916, %v1393
    %v1395 = vrot.slane %v663, %v1394
    %v1396 = vsel %vm921, %v1395, %v1391
    %v1397 = vlaneseq
    %v1398 = vshrl.u32 %v1397, 7
    %v1399 = vsub.s32 %v681, %v1398
    %v1400 = vrot.slane %v664, %v1399
    %v1401 = vlaneseq
    %v1402 = vshrl.u32 %v1401, 7
    %v1403 = vsub.s32 %v818, %v1402
    %v1404 = vrot.slane %v665, %v1403
    %v1405 = vsel %vm823, %v1404, %v1400
    %v1406 = vlaneseq
    %v1407 = vshrl.u32 %v1406, 7
    %v1408 = vsub.s32 %v825, %v1407
    %v1409 = vrot.slane %v666, %v1408
    %v1410 = vsel %vm830, %v1409, %v1405
    %v1411 = vlaneseq
    %v1412 = vshrl.u32 %v1411, 7
    %v1413 = vsub.s32 %v832, %v1412
    %v1414 = vrot.slane %v667, %v1413
    %v1415 = vsel %vm837, %v1414, %v1410
    %v1416 = vlaneseq
    %v1417 = vshrl.u32 %v1416, 7
    %v1418 = vsub.s32 %v839, %v1417
    %v1419 = vrot.slane %v668, %v1418
    %v1420 = vsel %vm844, %v1419, %v1415
    %v1421 = vlaneseq
    %v1422 = vshrl.u32 %v1421, 7
    %v1423 = vsub.s32 %v846, %v1422
    %v1424 = vrot.slane %v669, %v1423
    %v1425 = vsel %vm851, %v1424, %v1420
    %v1426 = vlaneseq
    %v1427 = vshrl.u32 %v1426, 7
    %v1428 = vsub.s32 %v853, %v1427
    %v1429 = vrot.slane %v670, %v1428
    %v1430 = vsel %vm858, %v1429, %v1425
    %v1431 = vlaneseq
    %v1432 = vshrl.u32 %v1431, 7
    %v1433 = vsub.s32 %v860, %v1432
    %v1434 = vrot.slane %v671, %v1433
    %v1435 = vsel %vm865, %v1434, %v1430
    %v1436 = vlaneseq
    %v1437 = vshrl.u32 %v1436, 7
    %v1438 = vsub.s32 %v867, %v1437
    %v1439 = vrot.slane %v672, %v1438
    %v1440 = vsel %vm872, %v1439, %v1435
    %v1441 = vlaneseq
    %v1442 = vshrl.u32 %v1441, 7
    %v1443 = vsub.s32 %v874, %v1442
    %v1444 = vrot.slane %v673, %v1443
    %v1445 = vsel %vm879, %v1444, %v1440
    %v1446 = vlaneseq
    %v1447 = vshrl.u32 %v1446, 7
    %v1448 = vsub.s32 %v881, %v1447
    %v1449 = vrot.slane %v674, %v1448
    %v1450 = vsel %vm886, %v1449, %v1445
    %v1451 = vlaneseq
    %v1452 = vshrl.u32 %v1451, 7
    %v1453 = vsub.s32 %v888, %v1452
    %v1454 = vrot.slane %v675, %v1453
    %v1455 = vsel %vm893, %v1454, %v1450
    %v1456 = vlaneseq
    %v1457 = vshrl.u32 %v1456, 7
    %v1458 = vsub.s32 %v895, %v1457
    %v1459 = vrot.slane %v676, %v1458
    %v1460 = vsel %vm900, %v1459, %v1455
    %v1461 = vlaneseq
    %v1462 = vshrl.u32 %v1461, 7
    %v1463 = vsub.s32 %v902, %v1462
    %v1464 = vrot.slane %v677, %v1463
    %v1465 = vsel %vm907, %v1464, %v1460
    %v1466 = vlaneseq
    %v1467 = vshrl.u32 %v1466, 7
    %v1468 = vsub.s32 %v909, %v1467
    %v1469 = vrot.slane %v678, %v1468
    %v1470 = vsel %vm914, %v1469, %v1465
    %v1471 = vlaneseq
    %v1472 = vshrl.u32 %v1471, 7
    %v1473 = vsub.s32 %v916, %v1472
    %v1474 = vrot.slane %v679, %v1473
    %v1475 = vsel %vm921, %v1474, %v1470
    %vm1476 = vcmask 1041409
    %v1477 = vsel %vm1476, %v1001, %v922
    %vm1478 = vcmask 1042434
    %v1479 = vsel %vm1478, %v1080, %v1477
    %vm1480 = vcmask 1043459
    %v1481 = vsel %vm1480, %v1159, %v1479
    %vm1482 = vcmask 1044484
    %v1483 = vsel %vm1482, %v1238, %v1481
    %vm1484 = vcmask 1045509
    %v1485 = vsel %vm1484, %v1317, %v1483
    %vm1486 = vcmask 1046534
    %v1487 = vsel %vm1486, %v1396, %v1485
    %vm1488 = vcmask 1047559
    %v1489 = vsel %vm1488, %v1475, %v1487
    %1491 = vmax.xlane.f32.xlu0 %v1489
    %v1492 = vpop.xlane.xlu0 %1491
    %v1494 = vlaneseq
    %v1495 = vshrl.u32 %v1494, 7
    %v1496 = vsub.s32 0, %v1495
    %v1497 = vrot.slane %v1492, %v1496
    %v1498 = vlaneseq
    %v1499 = vshrl.u32 %v1498, 7
    %v1500 = vsub.s32 1, %v1499
    %v1501 = vrot.slane %v1492, %v1500
    %v1502 = vlaneseq
    %v1503 = vshrl.u32 %v1502, 7
    %v1504 = vsub.s32 2, %v1503
    %v1505 = vrot.slane %v1492, %v1504
    %v1506 = vlaneseq
    %v1507 = vshrl.u32 %v1506, 7
    %v1508 = vsub.s32 3, %v1507
    %v1509 = vrot.slane %v1492, %v1508
    %v1510 = vlaneseq
    %v1511 = vshrl.u32 %v1510, 7
    %v1512 = vsub.s32 4, %v1511
    %v1513 = vrot.slane %v1492, %v1512
    %v1514 = vlaneseq
    %v1515 = vshrl.u32 %v1514, 7
    %v1516 = vsub.s32 5, %v1515
    %v1517 = vrot.slane %v1492, %v1516
    %v1518 = vlaneseq
    %v1519 = vshrl.u32 %v1518, 7
    %v1520 = vsub.s32 6, %v1519
    %v1521 = vrot.slane %v1492, %v1520
    %v1522 = vlaneseq
    %v1523 = vshrl.u32 %v1522, 7
    %v1524 = vsub.s32 7, %v1523
    %v1525 = vrot.slane %v1492, %v1524
    %v1534 = vsub.f32 %v552, %v1497
    %v1535 = vsub.f32 %v553, %v1497
    %v1536 = vsub.f32 %v554, %v1497
    %v1537 = vsub.f32 %v555, %v1497
    %v1538 = vsub.f32 %v556, %v1497
    %v1539 = vsub.f32 %v557, %v1497
    %v1540 = vsub.f32 %v558, %v1497
    %v1541 = vsub.f32 %v559, %v1497
    %v1542 = vsub.f32 %v560, %v1497
    %v1543 = vsub.f32 %v561, %v1497
    %v1544 = vsub.f32 %v562, %v1497
    %v1545 = vsub.f32 %v563, %v1497
    %v1546 = vsub.f32 %v564, %v1497
    %v1547 = vsub.f32 %v565, %v1497
    %v1548 = vsub.f32 %v566, %v1497
    %v1549 = vsub.f32 %v567, %v1497
    %v1550 = vsub.f32 %v568, %v1501
    %v1551 = vsub.f32 %v569, %v1501
    %v1552 = vsub.f32 %v570, %v1501
    %v1553 = vsub.f32 %v571, %v1501
    %v1554 = vsub.f32 %v572, %v1501
    %v1555 = vsub.f32 %v573, %v1501
    %v1556 = vsub.f32 %v574, %v1501
    %v1557 = vsub.f32 %v575, %v1501
    %v1558 = vsub.f32 %v576, %v1501
    %v1559 = vsub.f32 %v577, %v1501
    %v1560 = vsub.f32 %v578, %v1501
    %v1561 = vsub.f32 %v579, %v1501
    %v1562 = vsub.f32 %v580, %v1501
    %v1563 = vsub.f32 %v581, %v1501
    %v1564 = vsub.f32 %v582, %v1501
    %v1565 = vsub.f32 %v583, %v1501
    %v1566 = vsub.f32 %v584, %v1505
    %v1567 = vsub.f32 %v585, %v1505
    %v1568 = vsub.f32 %v586, %v1505
    %v1569 = vsub.f32 %v587, %v1505
    %v1570 = vsub.f32 %v588, %v1505
    %v1571 = vsub.f32 %v589, %v1505
    %v1572 = vsub.f32 %v590, %v1505
    %v1573 = vsub.f32 %v591, %v1505
    %v1574 = vsub.f32 %v592, %v1505
    %v1575 = vsub.f32 %v593, %v1505
    %v1576 = vsub.f32 %v594, %v1505
    %v1577 = vsub.f32 %v595, %v1505
    %v1578 = vsub.f32 %v596, %v1505
    %v1579 = vsub.f32 %v597, %v1505
    %v1580 = vsub.f32 %v598, %v1505
    %v1581 = vsub.f32 %v599, %v1505
    %v1582 = vsub.f32 %v600, %v1509
    %v1583 = vsub.f32 %v601, %v1509
    %v1584 = vsub.f32 %v602, %v1509
    %v1585 = vsub.f32 %v603, %v1509
    %v1586 = vsub.f32 %v604, %v1509
    %v1587 = vsub.f32 %v605, %v1509
    %v1588 = vsub.f32 %v606, %v1509
    %v1589 = vsub.f32 %v607, %v1509
    %v1590 = vsub.f32 %v608, %v1509
    %v1591 = vsub.f32 %v609, %v1509
    %v1592 = vsub.f32 %v610, %v1509
    %v1593 = vsub.f32 %v611, %v1509
    %v1594 = vsub.f32 %v612, %v1509
    %v1595 = vsub.f32 %v613, %v1509
    %v1596 = vsub.f32 %v614, %v1509
    %v1597 = vsub.f32 %v615, %v1509
    %v1598 = vsub.f32 %v616, %v1513
    %v1599 = vsub.f32 %v617, %v1513
    %v1600 = vsub.f32 %v618, %v1513
    %v1601 = vsub.f32 %v619, %v1513
    %v1602 = vsub.f32 %v620, %v1513
    %v1603 = vsub.f32 %v621, %v1513
    %v1604 = vsub.f32 %v622, %v1513
    %v1605 = vsub.f32 %v623, %v1513
    %v1606 = vsub.f32 %v624, %v1513
    %v1607 = vsub.f32 %v625, %v1513
    %v1608 = vsub.f32 %v626, %v1513
    %v1609 = vsub.f32 %v627, %v1513
    %v1610 = vsub.f32 %v628, %v1513
    %v1611 = vsub.f32 %v629, %v1513
    %v1612 = vsub.f32 %v630, %v1513
    %v1613 = vsub.f32 %v631, %v1513
    %v1614 = vsub.f32 %v632, %v1517
    %v1615 = vsub.f32 %v633, %v1517
    %v1616 = vsub.f32 %v634, %v1517
    %v1617 = vsub.f32 %v635, %v1517
    %v1618 = vsub.f32 %v636, %v1517
    %v1619 = vsub.f32 %v637, %v1517
    %v1620 = vsub.f32 %v638, %v1517
    %v1621 = vsub.f32 %v639, %v1517
    %v1622 = vsub.f32 %v640, %v1517
    %v1623 = vsub.f32 %v641, %v1517
    %v1624 = vsub.f32 %v642, %v1517
    %v1625 = vsub.f32 %v643, %v1517
    %v1626 = vsub.f32 %v644, %v1517
    %v1627 = vsub.f32 %v645, %v1517
    %v1628 = vsub.f32 %v646, %v1517
    %v1629 = vsub.f32 %v647, %v1517
    %v1630 = vsub.f32 %v648, %v1521
    %v1631 = vsub.f32 %v649, %v1521
    %v1632 = vsub.f32 %v650, %v1521
    %v1633 = vsub.f32 %v651, %v1521
    %v1634 = vsub.f32 %v652, %v1521
    %v1635 = vsub.f32 %v653, %v1521
    %v1636 = vsub.f32 %v654, %v1521
    %v1637 = vsub.f32 %v655, %v1521
    %v1638 = vsub.f32 %v656, %v1521
    %v1639 = vsub.f32 %v657, %v1521
    %v1640 = vsub.f32 %v658, %v1521
    %v1641 = vsub.f32 %v659, %v1521
    %v1642 = vsub.f32 %v660, %v1521
    %v1643 = vsub.f32 %v661, %v1521
    %v1644 = vsub.f32 %v662, %v1521
    %v1645 = vsub.f32 %v663, %v1521
    %v1646 = vsub.f32 %v664, %v1525
    %v1647 = vsub.f32 %v665, %v1525
    %v1648 = vsub.f32 %v666, %v1525
    %v1649 = vsub.f32 %v667, %v1525
    %v1650 = vsub.f32 %v668, %v1525
    %v1651 = vsub.f32 %v669, %v1525
    %v1652 = vsub.f32 %v670, %v1525
    %v1653 = vsub.f32 %v671, %v1525
    %v1654 = vsub.f32 %v672, %v1525
    %v1655 = vsub.f32 %v673, %v1525
    %v1656 = vsub.f32 %v674, %v1525
    %v1657 = vsub.f32 %v675, %v1525
    %v1658 = vsub.f32 %v676, %v1525
    %v1659 = vsub.f32 %v677, %v1525
    %v1660 = vsub.f32 %v678, %v1525
    %v1661 = vsub.f32 %v679, %v1525
    %v1662 = vmul.f32 %v1534, 1.442695
    %v1663 = vpow.pop %v1662
    %v1664 = vmul.f32 %v1535, 1.442695
    %v1665 = vpow.pop %v1664
    %v1666 = vmul.f32 %v1536, 1.442695
    %v1667 = vpow.pop %v1666
    %v1668 = vmul.f32 %v1537, 1.442695
    %v1669 = vpow.pop %v1668
    %v1670 = vmul.f32 %v1538, 1.442695
    %v1671 = vpow.pop %v1670
    %v1672 = vmul.f32 %v1539, 1.442695
    %v1673 = vpow.pop %v1672
    %v1674 = vmul.f32 %v1540, 1.442695
    %v1675 = vpow.pop %v1674
    %v1676 = vmul.f32 %v1541, 1.442695
    %v1677 = vpow.pop %v1676
    %v1678 = vmul.f32 %v1542, 1.442695
    %v1679 = vpow.pop %v1678
    %v1680 = vmul.f32 %v1543, 1.442695
    %v1681 = vpow.pop %v1680
    %v1682 = vmul.f32 %v1544, 1.442695
    %v1683 = vpow.pop %v1682
    %v1684 = vmul.f32 %v1545, 1.442695
    %v1685 = vpow.pop %v1684
    %v1686 = vmul.f32 %v1546, 1.442695
    %v1687 = vpow.pop %v1686
    %v1688 = vmul.f32 %v1547, 1.442695
    %v1689 = vpow.pop %v1688
    %v1690 = vmul.f32 %v1548, 1.442695
    %v1691 = vpow.pop %v1690
    %v1692 = vmul.f32 %v1549, 1.442695
    %v1693 = vpow.pop %v1692
    %v1694 = vmul.f32 %v1550, 1.442695
    %v1695 = vpow.pop %v1694
    %v1696 = vmul.f32 %v1551, 1.442695
    %v1697 = vpow.pop %v1696
    %v1698 = vmul.f32 %v1552, 1.442695
    %v1699 = vpow.pop %v1698
    %v1700 = vmul.f32 %v1553, 1.442695
    %v1701 = vpow.pop %v1700
    %v1702 = vmul.f32 %v1554, 1.442695
    %v1703 = vpow.pop %v1702
    %v1704 = vmul.f32 %v1555, 1.442695
    %v1705 = vpow.pop %v1704
    %v1706 = vmul.f32 %v1556, 1.442695
    %v1707 = vpow.pop %v1706
    %v1708 = vmul.f32 %v1557, 1.442695
    %v1709 = vpow.pop %v1708
    %v1710 = vmul.f32 %v1558, 1.442695
    %v1711 = vpow.pop %v1710
    %v1712 = vmul.f32 %v1559, 1.442695
    %v1713 = vpow.pop %v1712
    %v1714 = vmul.f32 %v1560, 1.442695
    %v1715 = vpow.pop %v1714
    %v1716 = vmul.f32 %v1561, 1.442695
    %v1717 = vpow.pop %v1716
    %v1718 = vmul.f32 %v1562, 1.442695
    %v1719 = vpow.pop %v1718
    %v1720 = vmul.f32 %v1563, 1.442695
    %v1721 = vpow.pop %v1720
    %v1722 = vmul.f32 %v1564, 1.442695
    %v1723 = vpow.pop %v1722
    %v1724 = vmul.f32 %v1565, 1.442695
    %v1725 = vpow.pop %v1724
    %v1726 = vmul.f32 %v1566, 1.442695
    %v1727 = vpow.pop %v1726
    %v1728 = vmul.f32 %v1567, 1.442695
    %v1729 = vpow.pop %v1728
    %v1730 = vmul.f32 %v1568, 1.442695
    %v1731 = vpow.pop %v1730
    %v1732 = vmul.f32 %v1569, 1.442695
    %v1733 = vpow.pop %v1732
    %v1734 = vmul.f32 %v1570, 1.442695
    %v1735 = vpow.pop %v1734
    %v1736 = vmul.f32 %v1571, 1.442695
    %v1737 = vpow.pop %v1736
    %v1738 = vmul.f32 %v1572, 1.442695
    %v1739 = vpow.pop %v1738
    %v1740 = vmul.f32 %v1573, 1.442695
    %v1741 = vpow.pop %v1740
    %v1742 = vmul.f32 %v1574, 1.442695
    %v1743 = vpow.pop %v1742
    %v1744 = vmul.f32 %v1575, 1.442695
    %v1745 = vpow.pop %v1744
    %v1746 = vmul.f32 %v1576, 1.442695
    %v1747 = vpow.pop %v1746
    %v1748 = vmul.f32 %v1577, 1.442695
    %v1749 = vpow.pop %v1748
    %v1750 = vmul.f32 %v1578, 1.442695
    %v1751 = vpow.pop %v1750
    %v1752 = vmul.f32 %v1579, 1.442695
    %v1753 = vpow.pop %v1752
    %v1754 = vmul.f32 %v1580, 1.442695
    %v1755 = vpow.pop %v1754
    %v1756 = vmul.f32 %v1581, 1.442695
    %v1757 = vpow.pop %v1756
    %v1758 = vmul.f32 %v1582, 1.442695
    %v1759 = vpow.pop %v1758
    %v1760 = vmul.f32 %v1583, 1.442695
    %v1761 = vpow.pop %v1760
    %v1762 = vmul.f32 %v1584, 1.442695
    %v1763 = vpow.pop %v1762
    %v1764 = vmul.f32 %v1585, 1.442695
    %v1765 = vpow.pop %v1764
    %v1766 = vmul.f32 %v1586, 1.442695
    %v1767 = vpow.pop %v1766
    %v1768 = vmul.f32 %v1587, 1.442695
    %v1769 = vpow.pop %v1768
    %v1770 = vmul.f32 %v1588, 1.442695
    %v1771 = vpow.pop %v1770
    %v1772 = vmul.f32 %v1589, 1.442695
    %v1773 = vpow.pop %v1772
    %v1774 = vmul.f32 %v1590, 1.442695
    %v1775 = vpow.pop %v1774
    %v1776 = vmul.f32 %v1591, 1.442695
    %v1777 = vpow.pop %v1776
    %v1778 = vmul.f32 %v1592, 1.442695
    %v1779 = vpow.pop %v1778
    %v1780 = vmul.f32 %v1593, 1.442695
    %v1781 = vpow.pop %v1780
    %v1782 = vmul.f32 %v1594, 1.442695
    %v1783 = vpow.pop %v1782
    %v1784 = vmul.f32 %v1595, 1.442695
    %v1785 = vpow.pop %v1784
    %v1786 = vmul.f32 %v1596, 1.442695
    %v1787 = vpow.pop %v1786
    %v1788 = vmul.f32 %v1597, 1.442695
    %v1789 = vpow.pop %v1788
    %v1790 = vmul.f32 %v1598, 1.442695
    %v1791 = vpow.pop %v1790
    %v1792 = vmul.f32 %v1599, 1.442695
    %v1793 = vpow.pop %v1792
    %v1794 = vmul.f32 %v1600, 1.442695
    %v1795 = vpow.pop %v1794
    %v1796 = vmul.f32 %v1601, 1.442695
    %v1797 = vpow.pop %v1796
    %v1798 = vmul.f32 %v1602, 1.442695
    %v1799 = vpow.pop %v1798
    %v1800 = vmul.f32 %v1603, 1.442695
    %v1801 = vpow.pop %v1800
    %v1802 = vmul.f32 %v1604, 1.442695
    %v1803 = vpow.pop %v1802
    %v1804 = vmul.f32 %v1605, 1.442695
    %v1805 = vpow.pop %v1804
    %v1806 = vmul.f32 %v1606, 1.442695
    %v1807 = vpow.pop %v1806
    %v1808 = vmul.f32 %v1607, 1.442695
    %v1809 = vpow.pop %v1808
    %v1810 = vmul.f32 %v1608, 1.442695
    %v1811 = vpow.pop %v1810
    %v1812 = vmul.f32 %v1609, 1.442695
    %v1813 = vpow.pop %v1812
    %v1814 = vmul.f32 %v1610, 1.442695
    %v1815 = vpow.pop %v1814
    %v1816 = vmul.f32 %v1611, 1.442695
    %v1817 = vpow.pop %v1816
    %v1818 = vmul.f32 %v1612, 1.442695
    %v1819 = vpow.pop %v1818
    %v1820 = vmul.f32 %v1613, 1.442695
    %v1821 = vpow.pop %v1820
    %v1822 = vmul.f32 %v1614, 1.442695
    %v1823 = vpow.pop %v1822
    %v1824 = vmul.f32 %v1615, 1.442695
    %v1825 = vpow.pop %v1824
    %v1826 = vmul.f32 %v1616, 1.442695
    %v1827 = vpow.pop %v1826
    %v1828 = vmul.f32 %v1617, 1.442695
    %v1829 = vpow.pop %v1828
    %v1830 = vmul.f32 %v1618, 1.442695
    %v1831 = vpow.pop %v1830
    %v1832 = vmul.f32 %v1619, 1.442695
    %v1833 = vpow.pop %v1832
    %v1834 = vmul.f32 %v1620, 1.442695
    %v1835 = vpow.pop %v1834
    %v1836 = vmul.f32 %v1621, 1.442695
    %v1837 = vpow.pop %v1836
    %v1838 = vmul.f32 %v1622, 1.442695
    %v1839 = vpow.pop %v1838
    %v1840 = vmul.f32 %v1623, 1.442695
    %v1841 = vpow.pop %v1840
    %v1842 = vmul.f32 %v1624, 1.442695
    %v1843 = vpow.pop %v1842
    %v1844 = vmul.f32 %v1625, 1.442695
    %v1845 = vpow.pop %v1844
    %v1846 = vmul.f32 %v1626, 1.442695
    %v1847 = vpow.pop %v1846
    %v1848 = vmul.f32 %v1627, 1.442695
    %v1849 = vpow.pop %v1848
    %v1850 = vmul.f32 %v1628, 1.442695
    %v1851 = vpow.pop %v1850
    %v1852 = vmul.f32 %v1629, 1.442695
    %v1853 = vpow.pop %v1852
    %v1854 = vmul.f32 %v1630, 1.442695
    %v1855 = vpow.pop %v1854
    %v1856 = vmul.f32 %v1631, 1.442695
    %v1857 = vpow.pop %v1856
    %v1858 = vmul.f32 %v1632, 1.442695
    %v1859 = vpow.pop %v1858
    %v1860 = vmul.f32 %v1633, 1.442695
    %v1861 = vpow.pop %v1860
    %v1862 = vmul.f32 %v1634, 1.442695
    %v1863 = vpow.pop %v1862
    %v1864 = vmul.f32 %v1635, 1.442695
    %v1865 = vpow.pop %v1864
    %v1866 = vmul.f32 %v1636, 1.442695
    %v1867 = vpow.pop %v1866
    %v1868 = vmul.f32 %v1637, 1.442695
    %v1869 = vpow.pop %v1868
    %v1870 = vmul.f32 %v1638, 1.442695
    %v1871 = vpow.pop %v1870
    %v1872 = vmul.f32 %v1639, 1.442695
    %v1873 = vpow.pop %v1872
    %v1874 = vmul.f32 %v1640, 1.442695
    %v1875 = vpow.pop %v1874
    %v1876 = vmul.f32 %v1641, 1.442695
    %v1877 = vpow.pop %v1876
    %v1878 = vmul.f32 %v1642, 1.442695
    %v1879 = vpow.pop %v1878
    %v1880 = vmul.f32 %v1643, 1.442695
    %v1881 = vpow.pop %v1880
    %v1882 = vmul.f32 %v1644, 1.442695
    %v1883 = vpow.pop %v1882
    %v1884 = vmul.f32 %v1645, 1.442695
    %v1885 = vpow.pop %v1884
    %v1886 = vmul.f32 %v1646, 1.442695
    %v1887 = vpow.pop %v1886
    %v1888 = vmul.f32 %v1647, 1.442695
    %v1889 = vpow.pop %v1888
    %v1890 = vmul.f32 %v1648, 1.442695
    %v1891 = vpow.pop %v1890
    %v1892 = vmul.f32 %v1649, 1.442695
    %v1893 = vpow.pop %v1892
    %v1894 = vmul.f32 %v1650, 1.442695
    %v1895 = vpow.pop %v1894
    %v1896 = vmul.f32 %v1651, 1.442695
    %v1897 = vpow.pop %v1896
    %v1898 = vmul.f32 %v1652, 1.442695
    %v1899 = vpow.pop %v1898
    %v1900 = vmul.f32 %v1653, 1.442695
    %v1901 = vpow.pop %v1900
    %v1902 = vmul.f32 %v1654, 1.442695
    %v1903 = vpow.pop %v1902
    %v1904 = vmul.f32 %v1655, 1.442695
    %v1905 = vpow.pop %v1904
    %v1906 = vmul.f32 %v1656, 1.442695
    %v1907 = vpow.pop %v1906
    %v1908 = vmul.f32 %v1657, 1.442695
    %v1909 = vpow.pop %v1908
    %v1910 = vmul.f32 %v1658, 1.442695
    %v1911 = vpow.pop %v1910
    %v1912 = vmul.f32 %v1659, 1.442695
    %v1913 = vpow.pop %v1912
    %v1914 = vmul.f32 %v1660, 1.442695
    %v1915 = vpow.pop %v1914
    %v1916 = vmul.f32 %v1661, 1.442695
    %v1917 = vpow.pop %v1916
    %2046 = vset.pattern.permute.xlu0 0
    %2047 = vperm.xlu0 %2046, %v1663
    %v2048 = vpop.permute.xlu0 %2047
    %2049 = vset.pattern.permute.xlu0 0
    %2050 = vperm.xlu0 %2049, %v1665
    %v2051 = vpop.permute.xlu0 %2050
    %2052 = vset.pattern.permute.xlu0 0
    %2053 = vperm.xlu0 %2052, %v1667
    %v2054 = vpop.permute.xlu0 %2053
    %2055 = vset.pattern.permute.xlu0 0
    %2056 = vperm.xlu0 %2055, %v1669
    %v2057 = vpop.permute.xlu0 %2056
    %2058 = vset.pattern.permute.xlu0 0
    %2059 = vperm.xlu0 %2058, %v1671
    %v2060 = vpop.permute.xlu0 %2059
    %2061 = vset.pattern.permute.xlu0 0
    %2062 = vperm.xlu0 %2061, %v1673
    %v2063 = vpop.permute.xlu0 %2062
    %2064 = vset.pattern.permute.xlu0 0
    %2065 = vperm.xlu0 %2064, %v1675
    %v2066 = vpop.permute.xlu0 %2065
    %2067 = vset.pattern.permute.xlu0 0
    %2068 = vperm.xlu0 %2067, %v1677
    %v2069 = vpop.permute.xlu0 %2068
    %2070 = vset.pattern.permute.xlu0 0
    %2071 = vperm.xlu0 %2070, %v1679
    %v2072 = vpop.permute.xlu0 %2071
    %2073 = vset.pattern.permute.xlu0 0
    %2074 = vperm.xlu0 %2073, %v1681
    %v2075 = vpop.permute.xlu0 %2074
    %2076 = vset.pattern.permute.xlu0 0
    %2077 = vperm.xlu0 %2076, %v1683
    %v2078 = vpop.permute.xlu0 %2077
    %2079 = vset.pattern.permute.xlu0 0
    %2080 = vperm.xlu0 %2079, %v1685
    %v2081 = vpop.permute.xlu0 %2080
    %2082 = vset.pattern.permute.xlu0 0
    %2083 = vperm.xlu0 %2082, %v1687
    %v2084 = vpop.permute.xlu0 %2083
    %2085 = vset.pattern.permute.xlu0 0
    %2086 = vperm.xlu0 %2085, %v1689
    %v2087 = vpop.permute.xlu0 %2086
    %2088 = vset.pattern.permute.xlu0 0
    %2089 = vperm.xlu0 %2088, %v1691
    %v2090 = vpop.permute.xlu0 %2089
    %2091 = vset.pattern.permute.xlu0 0
    %2092 = vperm.xlu0 %2091, %v1693
    %v2093 = vpop.permute.xlu0 %2092
    %2094 = vset.pattern.permute.xlu0 0
    %2095 = vperm.xlu0 %2094, %v1695
    %v2096 = vpop.permute.xlu0 %2095
    %2097 = vset.pattern.permute.xlu0 0
    %2098 = vperm.xlu0 %2097, %v1697
    %v2099 = vpop.permute.xlu0 %2098
    %2100 = vset.pattern.permute.xlu0 0
    %2101 = vperm.xlu0 %2100, %v1699
    %v2102 = vpop.permute.xlu0 %2101
    %2103 = vset.pattern.permute.xlu0 0
    %2104 = vperm.xlu0 %2103, %v1701
    %v2105 = vpop.permute.xlu0 %2104
    %2106 = vset.pattern.permute.xlu0 0
    %2107 = vperm.xlu0 %2106, %v1703
    %v2108 = vpop.permute.xlu0 %2107
    %2109 = vset.pattern.permute.xlu0 0
    %2110 = vperm.xlu0 %2109, %v1705
    %v2111 = vpop.permute.xlu0 %2110
    %2112 = vset.pattern.permute.xlu0 0
    %2113 = vperm.xlu0 %2112, %v1707
    %v2114 = vpop.permute.xlu0 %2113
    %2115 = vset.pattern.permute.xlu0 0
    %2116 = vperm.xlu0 %2115, %v1709
    %v2117 = vpop.permute.xlu0 %2116
    %2118 = vset.pattern.permute.xlu0 0
    %2119 = vperm.xlu0 %2118, %v1711
    %v2120 = vpop.permute.xlu0 %2119
    %2121 = vset.pattern.permute.xlu0 0
    %2122 = vperm.xlu0 %2121, %v1713
    %v2123 = vpop.permute.xlu0 %2122
    %2124 = vset.pattern.permute.xlu0 0
    %2125 = vperm.xlu0 %2124, %v1715
    %v2126 = vpop.permute.xlu0 %2125
    %2127 = vset.pattern.permute.xlu0 0
    %2128 = vperm.xlu0 %2127, %v1717
    %v2129 = vpop.permute.xlu0 %2128
    %2130 = vset.pattern.permute.xlu0 0
    %2131 = vperm.xlu0 %2130, %v1719
    %v2132 = vpop.permute.xlu0 %2131
    %2133 = vset.pattern.permute.xlu0 0
    %2134 = vperm.xlu0 %2133, %v1721
    %v2135 = vpop.permute.xlu0 %2134
    %2136 = vset.pattern.permute.xlu0 0
    %2137 = vperm.xlu0 %2136, %v1723
    %v2138 = vpop.permute.xlu0 %2137
    %2139 = vset.pattern.permute.xlu0 0
    %2140 = vperm.xlu0 %2139, %v1725
    %v2141 = vpop.permute.xlu0 %2140
    %2142 = vset.pattern.permute.xlu0 0
    %2143 = vperm.xlu0 %2142, %v1727
    %v2144 = vpop.permute.xlu0 %2143
    %2145 = vset.pattern.permute.xlu0 0
    %2146 = vperm.xlu0 %2145, %v1729
    %v2147 = vpop.permute.xlu0 %2146
    %2148 = vset.pattern.permute.xlu0 0
    %2149 = vperm.xlu0 %2148, %v1731
    %v2150 = vpop.permute.xlu0 %2149
    %2151 = vset.pattern.permute.xlu0 0
    %2152 = vperm.xlu0 %2151, %v1733
    %v2153 = vpop.permute.xlu0 %2152
    %2154 = vset.pattern.permute.xlu0 0
    %2155 = vperm.xlu0 %2154, %v1735
    %v2156 = vpop.permute.xlu0 %2155
    %2157 = vset.pattern.permute.xlu0 0
    %2158 = vperm.xlu0 %2157, %v1737
    %v2159 = vpop.permute.xlu0 %2158
    %2160 = vset.pattern.permute.xlu0 0
    %2161 = vperm.xlu0 %2160, %v1739
    %v2162 = vpop.permute.xlu0 %2161
    %2163 = vset.pattern.permute.xlu0 0
    %2164 = vperm.xlu0 %2163, %v1741
    %v2165 = vpop.permute.xlu0 %2164
    %2166 = vset.pattern.permute.xlu0 0
    %2167 = vperm.xlu0 %2166, %v1743
    %v2168 = vpop.permute.xlu0 %2167
    %2169 = vset.pattern.permute.xlu0 0
    %2170 = vperm.xlu0 %2169, %v1745
    %v2171 = vpop.permute.xlu0 %2170
    %2172 = vset.pattern.permute.xlu0 0
    %2173 = vperm.xlu0 %2172, %v1747
    %v2174 = vpop.permute.xlu0 %2173
    %2175 = vset.pattern.permute.xlu0 0
    %2176 = vperm.xlu0 %2175, %v1749
    %v2177 = vpop.permute.xlu0 %2176
    %2178 = vset.pattern.permute.xlu0 0
    %2179 = vperm.xlu0 %2178, %v1751
    %v2180 = vpop.permute.xlu0 %2179
    %2181 = vset.pattern.permute.xlu0 0
    %2182 = vperm.xlu0 %2181, %v1753
    %v2183 = vpop.permute.xlu0 %2182
    %2184 = vset.pattern.permute.xlu0 0
    %2185 = vperm.xlu0 %2184, %v1755
    %v2186 = vpop.permute.xlu0 %2185
    %2187 = vset.pattern.permute.xlu0 0
    %2188 = vperm.xlu0 %2187, %v1757
    %v2189 = vpop.permute.xlu0 %2188
    %2190 = vset.pattern.permute.xlu0 0
    %2191 = vperm.xlu0 %2190, %v1759
    %v2192 = vpop.permute.xlu0 %2191
    %2193 = vset.pattern.permute.xlu0 0
    %2194 = vperm.xlu0 %2193, %v1761
    %v2195 = vpop.permute.xlu0 %2194
    %2196 = vset.pattern.permute.xlu0 0
    %2197 = vperm.xlu0 %2196, %v1763
    %v2198 = vpop.permute.xlu0 %2197
    %2199 = vset.pattern.permute.xlu0 0
    %2200 = vperm.xlu0 %2199, %v1765
    %v2201 = vpop.permute.xlu0 %2200
    %2202 = vset.pattern.permute.xlu0 0
    %2203 = vperm.xlu0 %2202, %v1767
    %v2204 = vpop.permute.xlu0 %2203
    %2205 = vset.pattern.permute.xlu0 0
    %2206 = vperm.xlu0 %2205, %v1769
    %v2207 = vpop.permute.xlu0 %2206
    %2208 = vset.pattern.permute.xlu0 0
    %2209 = vperm.xlu0 %2208, %v1771
    %v2210 = vpop.permute.xlu0 %2209
    %2211 = vset.pattern.permute.xlu0 0
    %2212 = vperm.xlu0 %2211, %v1773
    %v2213 = vpop.permute.xlu0 %2212
    %2214 = vset.pattern.permute.xlu0 0
    %2215 = vperm.xlu0 %2214, %v1775
    %v2216 = vpop.permute.xlu0 %2215
    %2217 = vset.pattern.permute.xlu0 0
    %2218 = vperm.xlu0 %2217, %v1777
    %v2219 = vpop.permute.xlu0 %2218
    %2220 = vset.pattern.permute.xlu0 0
    %2221 = vperm.xlu0 %2220, %v1779
    %v2222 = vpop.permute.xlu0 %2221
    %2223 = vset.pattern.permute.xlu0 0
    %2224 = vperm.xlu0 %2223, %v1781
    %v2225 = vpop.permute.xlu0 %2224
    %2226 = vset.pattern.permute.xlu0 0
    %2227 = vperm.xlu0 %2226, %v1783
    %v2228 = vpop.permute.xlu0 %2227
    %2229 = vset.pattern.permute.xlu0 0
    %2230 = vperm.xlu0 %2229, %v1785
    %v2231 = vpop.permute.xlu0 %2230
    %2232 = vset.pattern.permute.xlu0 0
    %2233 = vperm.xlu0 %2232, %v1787
    %v2234 = vpop.permute.xlu0 %2233
    %2235 = vset.pattern.permute.xlu0 0
    %2236 = vperm.xlu0 %2235, %v1789
    %v2237 = vpop.permute.xlu0 %2236
    %2238 = vset.pattern.permute.xlu0 0
    %2239 = vperm.xlu0 %2238, %v1791
    %v2240 = vpop.permute.xlu0 %2239
    %2241 = vset.pattern.permute.xlu0 0
    %2242 = vperm.xlu0 %2241, %v1793
    %v2243 = vpop.permute.xlu0 %2242
    %2244 = vset.pattern.permute.xlu0 0
    %2245 = vperm.xlu0 %2244, %v1795
    %v2246 = vpop.permute.xlu0 %2245
    %2247 = vset.pattern.permute.xlu0 0
    %2248 = vperm.xlu0 %2247, %v1797
    %v2249 = vpop.permute.xlu0 %2248
    %2250 = vset.pattern.permute.xlu0 0
    %2251 = vperm.xlu0 %2250, %v1799
    %v2252 = vpop.permute.xlu0 %2251
    %2253 = vset.pattern.permute.xlu0 0
    %2254 = vperm.xlu0 %2253, %v1801
    %v2255 = vpop.permute.xlu0 %2254
    %2256 = vset.pattern.permute.xlu0 0
    %2257 = vperm.xlu0 %2256, %v1803
    %v2258 = vpop.permute.xlu0 %2257
    %2259 = vset.pattern.permute.xlu0 0
    %2260 = vperm.xlu0 %2259, %v1805
    %v2261 = vpop.permute.xlu0 %2260
    %2262 = vset.pattern.permute.xlu0 0
    %2263 = vperm.xlu0 %2262, %v1807
    %v2264 = vpop.permute.xlu0 %2263
    %2265 = vset.pattern.permute.xlu0 0
    %2266 = vperm.xlu0 %2265, %v1809
    %v2267 = vpop.permute.xlu0 %2266
    %2268 = vset.pattern.permute.xlu0 0
    %2269 = vperm.xlu0 %2268, %v1811
    %v2270 = vpop.permute.xlu0 %2269
    %2271 = vset.pattern.permute.xlu0 0
    %2272 = vperm.xlu0 %2271, %v1813
    %v2273 = vpop.permute.xlu0 %2272
    %2274 = vset.pattern.permute.xlu0 0
    %2275 = vperm.xlu0 %2274, %v1815
    %v2276 = vpop.permute.xlu0 %2275
    %2277 = vset.pattern.permute.xlu0 0
    %2278 = vperm.xlu0 %2277, %v1817
    %v2279 = vpop.permute.xlu0 %2278
    %2280 = vset.pattern.permute.xlu0 0
    %2281 = vperm.xlu0 %2280, %v1819
    %v2282 = vpop.permute.xlu0 %2281
    %2283 = vset.pattern.permute.xlu0 0
    %2284 = vperm.xlu0 %2283, %v1821
    %v2285 = vpop.permute.xlu0 %2284
    %2286 = vset.pattern.permute.xlu0 0
    %2287 = vperm.xlu0 %2286, %v1823
    %v2288 = vpop.permute.xlu0 %2287
    %2289 = vset.pattern.permute.xlu0 0
    %2290 = vperm.xlu0 %2289, %v1825
    %v2291 = vpop.permute.xlu0 %2290
    %2292 = vset.pattern.permute.xlu0 0
    %2293 = vperm.xlu0 %2292, %v1827
    %v2294 = vpop.permute.xlu0 %2293
    %2295 = vset.pattern.permute.xlu0 0
    %2296 = vperm.xlu0 %2295, %v1829
    %v2297 = vpop.permute.xlu0 %2296
    %2298 = vset.pattern.permute.xlu0 0
    %2299 = vperm.xlu0 %2298, %v1831
    %v2300 = vpop.permute.xlu0 %2299
    %2301 = vset.pattern.permute.xlu0 0
    %2302 = vperm.xlu0 %2301, %v1833
    %v2303 = vpop.permute.xlu0 %2302
    %2304 = vset.pattern.permute.xlu0 0
    %2305 = vperm.xlu0 %2304, %v1835
    %v2306 = vpop.permute.xlu0 %2305
    %2307 = vset.pattern.permute.xlu0 0
    %2308 = vperm.xlu0 %2307, %v1837
    %v2309 = vpop.permute.xlu0 %2308
    %2310 = vset.pattern.permute.xlu0 0
    %2311 = vperm.xlu0 %2310, %v1839
    %v2312 = vpop.permute.xlu0 %2311
    %2313 = vset.pattern.permute.xlu0 0
    %2314 = vperm.xlu0 %2313, %v1841
    %v2315 = vpop.permute.xlu0 %2314
    %2316 = vset.pattern.permute.xlu0 0
    %2317 = vperm.xlu0 %2316, %v1843
    %v2318 = vpop.permute.xlu0 %2317
    %2319 = vset.pattern.permute.xlu0 0
    %2320 = vperm.xlu0 %2319, %v1845
    %v2321 = vpop.permute.xlu0 %2320
    %2322 = vset.pattern.permute.xlu0 0
    %2323 = vperm.xlu0 %2322, %v1847
    %v2324 = vpop.permute.xlu0 %2323
    %2325 = vset.pattern.permute.xlu0 0
    %2326 = vperm.xlu0 %2325, %v1849
    %v2327 = vpop.permute.xlu0 %2326
    %2328 = vset.pattern.permute.xlu0 0
    %2329 = vperm.xlu0 %2328, %v1851
    %v2330 = vpop.permute.xlu0 %2329
    %2331 = vset.pattern.permute.xlu0 0
    %2332 = vperm.xlu0 %2331, %v1853
    %v2333 = vpop.permute.xlu0 %2332
    %2334 = vset.pattern.permute.xlu0 0
    %2335 = vperm.xlu0 %2334, %v1855
    %v2336 = vpop.permute.xlu0 %2335
    %2337 = vset.pattern.permute.xlu0 0
    %2338 = vperm.xlu0 %2337, %v1857
    %v2339 = vpop.permute.xlu0 %2338
    %2340 = vset.pattern.permute.xlu0 0
    %2341 = vperm.xlu0 %2340, %v1859
    %v2342 = vpop.permute.xlu0 %2341
    %2343 = vset.pattern.permute.xlu0 0
    %2344 = vperm.xlu0 %2343, %v1861
    %v2345 = vpop.permute.xlu0 %2344
    %2346 = vset.pattern.permute.xlu0 0
    %2347 = vperm.xlu0 %2346, %v1863
    %v2348 = vpop.permute.xlu0 %2347
    %2349 = vset.pattern.permute.xlu0 0
    %2350 = vperm.xlu0 %2349, %v1865
    %v2351 = vpop.permute.xlu0 %2350
    %2352 = vset.pattern.permute.xlu0 0
    %2353 = vperm.xlu0 %2352, %v1867
    %v2354 = vpop.permute.xlu0 %2353
    %2355 = vset.pattern.permute.xlu0 0
    %2356 = vperm.xlu0 %2355, %v1869
    %v2357 = vpop.permute.xlu0 %2356
    %2358 = vset.pattern.permute.xlu0 0
    %2359 = vperm.xlu0 %2358, %v1871
    %v2360 = vpop.permute.xlu0 %2359
    %2361 = vset.pattern.permute.xlu0 0
    %2362 = vperm.xlu0 %2361, %v1873
    %v2363 = vpop.permute.xlu0 %2362
    %2364 = vset.pattern.permute.xlu0 0
    %2365 = vperm.xlu0 %2364, %v1875
    %v2366 = vpop.permute.xlu0 %2365
    %2367 = vset.pattern.permute.xlu0 0
    %2368 = vperm.xlu0 %2367, %v1877
    %v2369 = vpop.permute.xlu0 %2368
    %2370 = vset.pattern.permute.xlu0 0
    %2371 = vperm.xlu0 %2370, %v1879
    %v2372 = vpop.permute.xlu0 %2371
    %2373 = vset.pattern.permute.xlu0 0
    %2374 = vperm.xlu0 %2373, %v1881
    %v2375 = vpop.permute.xlu0 %2374
    %2376 = vset.pattern.permute.xlu0 0
    %2377 = vperm.xlu0 %2376, %v1883
    %v2378 = vpop.permute.xlu0 %2377
    %2379 = vset.pattern.permute.xlu0 0
    %2380 = vperm.xlu0 %2379, %v1885
    %v2381 = vpop.permute.xlu0 %2380
    %2382 = vset.pattern.permute.xlu0 0
    %2383 = vperm.xlu0 %2382, %v1887
    %v2384 = vpop.permute.xlu0 %2383
    %2385 = vset.pattern.permute.xlu0 0
    %2386 = vperm.xlu0 %2385, %v1889
    %v2387 = vpop.permute.xlu0 %2386
    %2388 = vset.pattern.permute.xlu0 0
    %2389 = vperm.xlu0 %2388, %v1891
    %v2390 = vpop.permute.xlu0 %2389
    %2391 = vset.pattern.permute.xlu0 0
    %2392 = vperm.xlu0 %2391, %v1893
    %v2393 = vpop.permute.xlu0 %2392
    %2394 = vset.pattern.permute.xlu0 0
    %2395 = vperm.xlu0 %2394, %v1895
    %v2396 = vpop.permute.xlu0 %2395
    %2397 = vset.pattern.permute.xlu0 0
    %2398 = vperm.xlu0 %2397, %v1897
    %v2399 = vpop.permute.xlu0 %2398
    %2400 = vset.pattern.permute.xlu0 0
    %2401 = vperm.xlu0 %2400, %v1899
    %v2402 = vpop.permute.xlu0 %2401
    %2403 = vset.pattern.permute.xlu0 0
    %2404 = vperm.xlu0 %2403, %v1901
    %v2405 = vpop.permute.xlu0 %2404
    %2406 = vset.pattern.permute.xlu0 0
    %2407 = vperm.xlu0 %2406, %v1903
    %v2408 = vpop.permute.xlu0 %2407
    %2409 = vset.pattern.permute.xlu0 0
    %2410 = vperm.xlu0 %2409, %v1905
    %v2411 = vpop.permute.xlu0 %2410
    %2412 = vset.pattern.permute.xlu0 0
    %2413 = vperm.xlu0 %2412, %v1907
    %v2414 = vpop.permute.xlu0 %2413
    %2415 = vset.pattern.permute.xlu0 0
    %2416 = vperm.xlu0 %2415, %v1909
    %v2417 = vpop.permute.xlu0 %2416
    %2418 = vset.pattern.permute.xlu0 0
    %2419 = vperm.xlu0 %2418, %v1911
    %v2420 = vpop.permute.xlu0 %2419
    %2421 = vset.pattern.permute.xlu0 0
    %2422 = vperm.xlu0 %2421, %v1913
    %v2423 = vpop.permute.xlu0 %2422
    %2424 = vset.pattern.permute.xlu0 0
    %2425 = vperm.xlu0 %2424, %v1915
    %v2426 = vpop.permute.xlu0 %2425
    %2427 = vset.pattern.permute.xlu0 0
    %2428 = vperm.xlu0 %2427, %v1917
    %v2429 = vpop.permute.xlu0 %2428
    %v2430 = vlaneseq
    %v2431 = vshrl.u32 %v2430, 7
    %v2432 = vsub.s32 %v681, %v2431
    %v2433 = vrot.slane %v2048, %v2432
    %v2434 = vlaneseq
    %v2435 = vshrl.u32 %v2434, 7
    %v2436 = vsub.s32 %v818, %v2435
    %v2437 = vrot.slane %v2051, %v2436
    %v2438 = vsel %vm823, %v2437, %v2433
    %v2439 = vlaneseq
    %v2440 = vshrl.u32 %v2439, 7
    %v2441 = vsub.s32 %v825, %v2440
    %v2442 = vrot.slane %v2054, %v2441
    %v2443 = vsel %vm830, %v2442, %v2438
    %v2444 = vlaneseq
    %v2445 = vshrl.u32 %v2444, 7
    %v2446 = vsub.s32 %v832, %v2445
    %v2447 = vrot.slane %v2057, %v2446
    %v2448 = vsel %vm837, %v2447, %v2443
    %v2449 = vlaneseq
    %v2450 = vshrl.u32 %v2449, 7
    %v2451 = vsub.s32 %v839, %v2450
    %v2452 = vrot.slane %v2060, %v2451
    %v2453 = vsel %vm844, %v2452, %v2448
    %v2454 = vlaneseq
    %v2455 = vshrl.u32 %v2454, 7
    %v2456 = vsub.s32 %v846, %v2455
    %v2457 = vrot.slane %v2063, %v2456
    %v2458 = vsel %vm851, %v2457, %v2453
    %v2459 = vlaneseq
    %v2460 = vshrl.u32 %v2459, 7
    %v2461 = vsub.s32 %v853, %v2460
    %v2462 = vrot.slane %v2066, %v2461
    %v2463 = vsel %vm858, %v2462, %v2458
    %v2464 = vlaneseq
    %v2465 = vshrl.u32 %v2464, 7
    %v2466 = vsub.s32 %v860, %v2465
    %v2467 = vrot.slane %v2069, %v2466
    %v2468 = vsel %vm865, %v2467, %v2463
    %v2469 = vlaneseq
    %v2470 = vshrl.u32 %v2469, 7
    %v2471 = vsub.s32 %v867, %v2470
    %v2472 = vrot.slane %v2072, %v2471
    %v2473 = vsel %vm872, %v2472, %v2468
    %v2474 = vlaneseq
    %v2475 = vshrl.u32 %v2474, 7
    %v2476 = vsub.s32 %v874, %v2475
    %v2477 = vrot.slane %v2075, %v2476
    %v2478 = vsel %vm879, %v2477, %v2473
    %v2479 = vlaneseq
    %v2480 = vshrl.u32 %v2479, 7
    %v2481 = vsub.s32 %v881, %v2480
    %v2482 = vrot.slane %v2078, %v2481
    %v2483 = vsel %vm886, %v2482, %v2478
    %v2484 = vlaneseq
    %v2485 = vshrl.u32 %v2484, 7
    %v2486 = vsub.s32 %v888, %v2485
    %v2487 = vrot.slane %v2081, %v2486
    %v2488 = vsel %vm893, %v2487, %v2483
    %v2489 = vlaneseq
    %v2490 = vshrl.u32 %v2489, 7
    %v2491 = vsub.s32 %v895, %v2490
    %v2492 = vrot.slane %v2084, %v2491
    %v2493 = vsel %vm900, %v2492, %v2488
    %v2494 = vlaneseq
    %v2495 = vshrl.u32 %v2494, 7
    %v2496 = vsub.s32 %v902, %v2495
    %v2497 = vrot.slane %v2087, %v2496
    %v2498 = vsel %vm907, %v2497, %v2493
    %v2499 = vlaneseq
    %v2500 = vshrl.u32 %v2499, 7
    %v2501 = vsub.s32 %v909, %v2500
    %v2502 = vrot.slane %v2090, %v2501
    %v2503 = vsel %vm914, %v2502, %v2498
    %v2504 = vlaneseq
    %v2505 = vshrl.u32 %v2504, 7
    %v2506 = vsub.s32 %v916, %v2505
    %v2507 = vrot.slane %v2093, %v2506
    %v2508 = vsel %vm921, %v2507, %v2503
    %v2509 = vlaneseq
    %v2510 = vshrl.u32 %v2509, 7
    %v2511 = vsub.s32 %v681, %v2510
    %v2512 = vrot.slane %v2096, %v2511
    %v2513 = vlaneseq
    %v2514 = vshrl.u32 %v2513, 7
    %v2515 = vsub.s32 %v818, %v2514
    %v2516 = vrot.slane %v2099, %v2515
    %v2517 = vsel %vm823, %v2516, %v2512
    %v2518 = vlaneseq
    %v2519 = vshrl.u32 %v2518, 7
    %v2520 = vsub.s32 %v825, %v2519
    %v2521 = vrot.slane %v2102, %v2520
    %v2522 = vsel %vm830, %v2521, %v2517
    %v2523 = vlaneseq
    %v2524 = vshrl.u32 %v2523, 7
    %v2525 = vsub.s32 %v832, %v2524
    %v2526 = vrot.slane %v2105, %v2525
    %v2527 = vsel %vm837, %v2526, %v2522
    %v2528 = vlaneseq
    %v2529 = vshrl.u32 %v2528, 7
    %v2530 = vsub.s32 %v839, %v2529
    %v2531 = vrot.slane %v2108, %v2530
    %v2532 = vsel %vm844, %v2531, %v2527
    %v2533 = vlaneseq
    %v2534 = vshrl.u32 %v2533, 7
    %v2535 = vsub.s32 %v846, %v2534
    %v2536 = vrot.slane %v2111, %v2535
    %v2537 = vsel %vm851, %v2536, %v2532
    %v2538 = vlaneseq
    %v2539 = vshrl.u32 %v2538, 7
    %v2540 = vsub.s32 %v853, %v2539
    %v2541 = vrot.slane %v2114, %v2540
    %v2542 = vsel %vm858, %v2541, %v2537
    %v2543 = vlaneseq
    %v2544 = vshrl.u32 %v2543, 7
    %v2545 = vsub.s32 %v860, %v2544
    %v2546 = vrot.slane %v2117, %v2545
    %v2547 = vsel %vm865, %v2546, %v2542
    %v2548 = vlaneseq
    %v2549 = vshrl.u32 %v2548, 7
    %v2550 = vsub.s32 %v867, %v2549
    %v2551 = vrot.slane %v2120, %v2550
    %v2552 = vsel %vm872, %v2551, %v2547
    %v2553 = vlaneseq
    %v2554 = vshrl.u32 %v2553, 7
    %v2555 = vsub.s32 %v874, %v2554
    %v2556 = vrot.slane %v2123, %v2555
    %v2557 = vsel %vm879, %v2556, %v2552
    %v2558 = vlaneseq
    %v2559 = vshrl.u32 %v2558, 7
    %v2560 = vsub.s32 %v881, %v2559
    %v2561 = vrot.slane %v2126, %v2560
    %v2562 = vsel %vm886, %v2561, %v2557
    %v2563 = vlaneseq
    %v2564 = vshrl.u32 %v2563, 7
    %v2565 = vsub.s32 %v888, %v2564
    %v2566 = vrot.slane %v2129, %v2565
    %v2567 = vsel %vm893, %v2566, %v2562
    %v2568 = vlaneseq
    %v2569 = vshrl.u32 %v2568, 7
    %v2570 = vsub.s32 %v895, %v2569
    %v2571 = vrot.slane %v2132, %v2570
    %v2572 = vsel %vm900, %v2571, %v2567
    %v2573 = vlaneseq
    %v2574 = vshrl.u32 %v2573, 7
    %v2575 = vsub.s32 %v902, %v2574
    %v2576 = vrot.slane %v2135, %v2575
    %v2577 = vsel %vm907, %v2576, %v2572
    %v2578 = vlaneseq
    %v2579 = vshrl.u32 %v2578, 7
    %v2580 = vsub.s32 %v909, %v2579
    %v2581 = vrot.slane %v2138, %v2580
    %v2582 = vsel %vm914, %v2581, %v2577
    %v2583 = vlaneseq
    %v2584 = vshrl.u32 %v2583, 7
    %v2585 = vsub.s32 %v916, %v2584
    %v2586 = vrot.slane %v2141, %v2585
    %v2587 = vsel %vm921, %v2586, %v2582
    %v2588 = vlaneseq
    %v2589 = vshrl.u32 %v2588, 7
    %v2590 = vsub.s32 %v681, %v2589
    %v2591 = vrot.slane %v2144, %v2590
    %v2592 = vlaneseq
    %v2593 = vshrl.u32 %v2592, 7
    %v2594 = vsub.s32 %v818, %v2593
    %v2595 = vrot.slane %v2147, %v2594
    %v2596 = vsel %vm823, %v2595, %v2591
    %v2597 = vlaneseq
    %v2598 = vshrl.u32 %v2597, 7
    %v2599 = vsub.s32 %v825, %v2598
    %v2600 = vrot.slane %v2150, %v2599
    %v2601 = vsel %vm830, %v2600, %v2596
    %v2602 = vlaneseq
    %v2603 = vshrl.u32 %v2602, 7
    %v2604 = vsub.s32 %v832, %v2603
    %v2605 = vrot.slane %v2153, %v2604
    %v2606 = vsel %vm837, %v2605, %v2601
    %v2607 = vlaneseq
    %v2608 = vshrl.u32 %v2607, 7
    %v2609 = vsub.s32 %v839, %v2608
    %v2610 = vrot.slane %v2156, %v2609
    %v2611 = vsel %vm844, %v2610, %v2606
    %v2612 = vlaneseq
    %v2613 = vshrl.u32 %v2612, 7
    %v2614 = vsub.s32 %v846, %v2613
    %v2615 = vrot.slane %v2159, %v2614
    %v2616 = vsel %vm851, %v2615, %v2611
    %v2617 = vlaneseq
    %v2618 = vshrl.u32 %v2617, 7
    %v2619 = vsub.s32 %v853, %v2618
    %v2620 = vrot.slane %v2162, %v2619
    %v2621 = vsel %vm858, %v2620, %v2616
    %v2622 = vlaneseq
    %v2623 = vshrl.u32 %v2622, 7
    %v2624 = vsub.s32 %v860, %v2623
    %v2625 = vrot.slane %v2165, %v2624
    %v2626 = vsel %vm865, %v2625, %v2621
    %v2627 = vlaneseq
    %v2628 = vshrl.u32 %v2627, 7
    %v2629 = vsub.s32 %v867, %v2628
    %v2630 = vrot.slane %v2168, %v2629
    %v2631 = vsel %vm872, %v2630, %v2626
    %v2632 = vlaneseq
    %v2633 = vshrl.u32 %v2632, 7
    %v2634 = vsub.s32 %v874, %v2633
    %v2635 = vrot.slane %v2171, %v2634
    %v2636 = vsel %vm879, %v2635, %v2631
    %v2637 = vlaneseq
    %v2638 = vshrl.u32 %v2637, 7
    %v2639 = vsub.s32 %v881, %v2638
    %v2640 = vrot.slane %v2174, %v2639
    %v2641 = vsel %vm886, %v2640, %v2636
    %v2642 = vlaneseq
    %v2643 = vshrl.u32 %v2642, 7
    %v2644 = vsub.s32 %v888, %v2643
    %v2645 = vrot.slane %v2177, %v2644
    %v2646 = vsel %vm893, %v2645, %v2641
    %v2647 = vlaneseq
    %v2648 = vshrl.u32 %v2647, 7
    %v2649 = vsub.s32 %v895, %v2648
    %v2650 = vrot.slane %v2180, %v2649
    %v2651 = vsel %vm900, %v2650, %v2646
    %v2652 = vlaneseq
    %v2653 = vshrl.u32 %v2652, 7
    %v2654 = vsub.s32 %v902, %v2653
    %v2655 = vrot.slane %v2183, %v2654
    %v2656 = vsel %vm907, %v2655, %v2651
    %v2657 = vlaneseq
    %v2658 = vshrl.u32 %v2657, 7
    %v2659 = vsub.s32 %v909, %v2658
    %v2660 = vrot.slane %v2186, %v2659
    %v2661 = vsel %vm914, %v2660, %v2656
    %v2662 = vlaneseq
    %v2663 = vshrl.u32 %v2662, 7
    %v2664 = vsub.s32 %v916, %v2663
    %v2665 = vrot.slane %v2189, %v2664
    %v2666 = vsel %vm921, %v2665, %v2661
    %v2667 = vlaneseq
    %v2668 = vshrl.u32 %v2667, 7
    %v2669 = vsub.s32 %v681, %v2668
    %v2670 = vrot.slane %v2192, %v2669
    %v2671 = vlaneseq
    %v2672 = vshrl.u32 %v2671, 7
    %v2673 = vsub.s32 %v818, %v2672
    %v2674 = vrot.slane %v2195, %v2673
    %v2675 = vsel %vm823, %v2674, %v2670
    %v2676 = vlaneseq
    %v2677 = vshrl.u32 %v2676, 7
    %v2678 = vsub.s32 %v825, %v2677
    %v2679 = vrot.slane %v2198, %v2678
    %v2680 = vsel %vm830, %v2679, %v2675
    %v2681 = vlaneseq
    %v2682 = vshrl.u32 %v2681, 7
    %v2683 = vsub.s32 %v832, %v2682
    %v2684 = vrot.slane %v2201, %v2683
    %v2685 = vsel %vm837, %v2684, %v2680
    %v2686 = vlaneseq
    %v2687 = vshrl.u32 %v2686, 7
    %v2688 = vsub.s32 %v839, %v2687
    %v2689 = vrot.slane %v2204, %v2688
    %v2690 = vsel %vm844, %v2689, %v2685
    %v2691 = vlaneseq
    %v2692 = vshrl.u32 %v2691, 7
    %v2693 = vsub.s32 %v846, %v2692
    %v2694 = vrot.slane %v2207, %v2693
    %v2695 = vsel %vm851, %v2694, %v2690
    %v2696 = vlaneseq
    %v2697 = vshrl.u32 %v2696, 7
    %v2698 = vsub.s32 %v853, %v2697
    %v2699 = vrot.slane %v2210, %v2698
    %v2700 = vsel %vm858, %v2699, %v2695
    %v2701 = vlaneseq
    %v2702 = vshrl.u32 %v2701, 7
    %v2703 = vsub.s32 %v860, %v2702
    %v2704 = vrot.slane %v2213, %v2703
    %v2705 = vsel %vm865, %v2704, %v2700
    %v2706 = vlaneseq
    %v2707 = vshrl.u32 %v2706, 7
    %v2708 = vsub.s32 %v867, %v2707
    %v2709 = vrot.slane %v2216, %v2708
    %v2710 = vsel %vm872, %v2709, %v2705
    %v2711 = vlaneseq
    %v2712 = vshrl.u32 %v2711, 7
    %v2713 = vsub.s32 %v874, %v2712
    %v2714 = vrot.slane %v2219, %v2713
    %v2715 = vsel %vm879, %v2714, %v2710
    %v2716 = vlaneseq
    %v2717 = vshrl.u32 %v2716, 7
    %v2718 = vsub.s32 %v881, %v2717
    %v2719 = vrot.slane %v2222, %v2718
    %v2720 = vsel %vm886, %v2719, %v2715
    %v2721 = vlaneseq
    %v2722 = vshrl.u32 %v2721, 7
    %v2723 = vsub.s32 %v888, %v2722
    %v2724 = vrot.slane %v2225, %v2723
    %v2725 = vsel %vm893, %v2724, %v2720
    %v2726 = vlaneseq
    %v2727 = vshrl.u32 %v2726, 7
    %v2728 = vsub.s32 %v895, %v2727
    %v2729 = vrot.slane %v2228, %v2728
    %v2730 = vsel %vm900, %v2729, %v2725
    %v2731 = vlaneseq
    %v2732 = vshrl.u32 %v2731, 7
    %v2733 = vsub.s32 %v902, %v2732
    %v2734 = vrot.slane %v2231, %v2733
    %v2735 = vsel %vm907, %v2734, %v2730
    %v2736 = vlaneseq
    %v2737 = vshrl.u32 %v2736, 7
    %v2738 = vsub.s32 %v909, %v2737
    %v2739 = vrot.slane %v2234, %v2738
    %v2740 = vsel %vm914, %v2739, %v2735
    %v2741 = vlaneseq
    %v2742 = vshrl.u32 %v2741, 7
    %v2743 = vsub.s32 %v916, %v2742
    %v2744 = vrot.slane %v2237, %v2743
    %v2745 = vsel %vm921, %v2744, %v2740
    %v2746 = vlaneseq
    %v2747 = vshrl.u32 %v2746, 7
    %v2748 = vsub.s32 %v681, %v2747
    %v2749 = vrot.slane %v2240, %v2748
    %v2750 = vlaneseq
    %v2751 = vshrl.u32 %v2750, 7
    %v2752 = vsub.s32 %v818, %v2751
    %v2753 = vrot.slane %v2243, %v2752
    %v2754 = vsel %vm823, %v2753, %v2749
    %v2755 = vlaneseq
    %v2756 = vshrl.u32 %v2755, 7
    %v2757 = vsub.s32 %v825, %v2756
    %v2758 = vrot.slane %v2246, %v2757
    %v2759 = vsel %vm830, %v2758, %v2754
    %v2760 = vlaneseq
    %v2761 = vshrl.u32 %v2760, 7
    %v2762 = vsub.s32 %v832, %v2761
    %v2763 = vrot.slane %v2249, %v2762
    %v2764 = vsel %vm837, %v2763, %v2759
    %v2765 = vlaneseq
    %v2766 = vshrl.u32 %v2765, 7
    %v2767 = vsub.s32 %v839, %v2766
    %v2768 = vrot.slane %v2252, %v2767
    %v2769 = vsel %vm844, %v2768, %v2764
    %v2770 = vlaneseq
    %v2771 = vshrl.u32 %v2770, 7
    %v2772 = vsub.s32 %v846, %v2771
    %v2773 = vrot.slane %v2255, %v2772
    %v2774 = vsel %vm851, %v2773, %v2769
    %v2775 = vlaneseq
    %v2776 = vshrl.u32 %v2775, 7
    %v2777 = vsub.s32 %v853, %v2776
    %v2778 = vrot.slane %v2258, %v2777
    %v2779 = vsel %vm858, %v2778, %v2774
    %v2780 = vlaneseq
    %v2781 = vshrl.u32 %v2780, 7
    %v2782 = vsub.s32 %v860, %v2781
    %v2783 = vrot.slane %v2261, %v2782
    %v2784 = vsel %vm865, %v2783, %v2779
    %v2785 = vlaneseq
    %v2786 = vshrl.u32 %v2785, 7
    %v2787 = vsub.s32 %v867, %v2786
    %v2788 = vrot.slane %v2264, %v2787
    %v2789 = vsel %vm872, %v2788, %v2784
    %v2790 = vlaneseq
    %v2791 = vshrl.u32 %v2790, 7
    %v2792 = vsub.s32 %v874, %v2791
    %v2793 = vrot.slane %v2267, %v2792
    %v2794 = vsel %vm879, %v2793, %v2789
    %v2795 = vlaneseq
    %v2796 = vshrl.u32 %v2795, 7
    %v2797 = vsub.s32 %v881, %v2796
    %v2798 = vrot.slane %v2270, %v2797
    %v2799 = vsel %vm886, %v2798, %v2794
    %v2800 = vlaneseq
    %v2801 = vshrl.u32 %v2800, 7
    %v2802 = vsub.s32 %v888, %v2801
    %v2803 = vrot.slane %v2273, %v2802
    %v2804 = vsel %vm893, %v2803, %v2799
    %v2805 = vlaneseq
    %v2806 = vshrl.u32 %v2805, 7
    %v2807 = vsub.s32 %v895, %v2806
    %v2808 = vrot.slane %v2276, %v2807
    %v2809 = vsel %vm900, %v2808, %v2804
    %v2810 = vlaneseq
    %v2811 = vshrl.u32 %v2810, 7
    %v2812 = vsub.s32 %v902, %v2811
    %v2813 = vrot.slane %v2279, %v2812
    %v2814 = vsel %vm907, %v2813, %v2809
    %v2815 = vlaneseq
    %v2816 = vshrl.u32 %v2815, 7
    %v2817 = vsub.s32 %v909, %v2816
    %v2818 = vrot.slane %v2282, %v2817
    %v2819 = vsel %vm914, %v2818, %v2814
    %v2820 = vlaneseq
    %v2821 = vshrl.u32 %v2820, 7
    %v2822 = vsub.s32 %v916, %v2821
    %v2823 = vrot.slane %v2285, %v2822
    %v2824 = vsel %vm921, %v2823, %v2819
    %v2825 = vlaneseq
    %v2826 = vshrl.u32 %v2825, 7
    %v2827 = vsub.s32 %v681, %v2826
    %v2828 = vrot.slane %v2288, %v2827
    %v2829 = vlaneseq
    %v2830 = vshrl.u32 %v2829, 7
    %v2831 = vsub.s32 %v818, %v2830
    %v2832 = vrot.slane %v2291, %v2831
    %v2833 = vsel %vm823, %v2832, %v2828
    %v2834 = vlaneseq
    %v2835 = vshrl.u32 %v2834, 7
    %v2836 = vsub.s32 %v825, %v2835
    %v2837 = vrot.slane %v2294, %v2836
    %v2838 = vsel %vm830, %v2837, %v2833
    %v2839 = vlaneseq
    %v2840 = vshrl.u32 %v2839, 7
    %v2841 = vsub.s32 %v832, %v2840
    %v2842 = vrot.slane %v2297, %v2841
    %v2843 = vsel %vm837, %v2842, %v2838
    %v2844 = vlaneseq
    %v2845 = vshrl.u32 %v2844, 7
    %v2846 = vsub.s32 %v839, %v2845
    %v2847 = vrot.slane %v2300, %v2846
    %v2848 = vsel %vm844, %v2847, %v2843
    %v2849 = vlaneseq
    %v2850 = vshrl.u32 %v2849, 7
    %v2851 = vsub.s32 %v846, %v2850
    %v2852 = vrot.slane %v2303, %v2851
    %v2853 = vsel %vm851, %v2852, %v2848
    %v2854 = vlaneseq
    %v2855 = vshrl.u32 %v2854, 7
    %v2856 = vsub.s32 %v853, %v2855
    %v2857 = vrot.slane %v2306, %v2856
    %v2858 = vsel %vm858, %v2857, %v2853
    %v2859 = vlaneseq
    %v2860 = vshrl.u32 %v2859, 7
    %v2861 = vsub.s32 %v860, %v2860
    %v2862 = vrot.slane %v2309, %v2861
    %v2863 = vsel %vm865, %v2862, %v2858
    %v2864 = vlaneseq
    %v2865 = vshrl.u32 %v2864, 7
    %v2866 = vsub.s32 %v867, %v2865
    %v2867 = vrot.slane %v2312, %v2866
    %v2868 = vsel %vm872, %v2867, %v2863
    %v2869 = vlaneseq
    %v2870 = vshrl.u32 %v2869, 7
    %v2871 = vsub.s32 %v874, %v2870
    %v2872 = vrot.slane %v2315, %v2871
    %v2873 = vsel %vm879, %v2872, %v2868
    %v2874 = vlaneseq
    %v2875 = vshrl.u32 %v2874, 7
    %v2876 = vsub.s32 %v881, %v2875
    %v2877 = vrot.slane %v2318, %v2876
    %v2878 = vsel %vm886, %v2877, %v2873
    %v2879 = vlaneseq
    %v2880 = vshrl.u32 %v2879, 7
    %v2881 = vsub.s32 %v888, %v2880
    %v2882 = vrot.slane %v2321, %v2881
    %v2883 = vsel %vm893, %v2882, %v2878
    %v2884 = vlaneseq
    %v2885 = vshrl.u32 %v2884, 7
    %v2886 = vsub.s32 %v895, %v2885
    %v2887 = vrot.slane %v2324, %v2886
    %v2888 = vsel %vm900, %v2887, %v2883
    %v2889 = vlaneseq
    %v2890 = vshrl.u32 %v2889, 7
    %v2891 = vsub.s32 %v902, %v2890
    %v2892 = vrot.slane %v2327, %v2891
    %v2893 = vsel %vm907, %v2892, %v2888
    %v2894 = vlaneseq
    %v2895 = vshrl.u32 %v2894, 7
    %v2896 = vsub.s32 %v909, %v2895
    %v2897 = vrot.slane %v2330, %v2896
    %v2898 = vsel %vm914, %v2897, %v2893
    %v2899 = vlaneseq
    %v2900 = vshrl.u32 %v2899, 7
    %v2901 = vsub.s32 %v916, %v2900
    %v2902 = vrot.slane %v2333, %v2901
    %v2903 = vsel %vm921, %v2902, %v2898
    %v2904 = vlaneseq
    %v2905 = vshrl.u32 %v2904, 7
    %v2906 = vsub.s32 %v681, %v2905
    %v2907 = vrot.slane %v2336, %v2906
    %v2908 = vlaneseq
    %v2909 = vshrl.u32 %v2908, 7
    %v2910 = vsub.s32 %v818, %v2909
    %v2911 = vrot.slane %v2339, %v2910
    %v2912 = vsel %vm823, %v2911, %v2907
    %v2913 = vlaneseq
    %v2914 = vshrl.u32 %v2913, 7
    %v2915 = vsub.s32 %v825, %v2914
    %v2916 = vrot.slane %v2342, %v2915
    %v2917 = vsel %vm830, %v2916, %v2912
    %v2918 = vlaneseq
    %v2919 = vshrl.u32 %v2918, 7
    %v2920 = vsub.s32 %v832, %v2919
    %v2921 = vrot.slane %v2345, %v2920
    %v2922 = vsel %vm837, %v2921, %v2917
    %v2923 = vlaneseq
    %v2924 = vshrl.u32 %v2923, 7
    %v2925 = vsub.s32 %v839, %v2924
    %v2926 = vrot.slane %v2348, %v2925
    %v2927 = vsel %vm844, %v2926, %v2922
    %v2928 = vlaneseq
    %v2929 = vshrl.u32 %v2928, 7
    %v2930 = vsub.s32 %v846, %v2929
    %v2931 = vrot.slane %v2351, %v2930
    %v2932 = vsel %vm851, %v2931, %v2927
    %v2933 = vlaneseq
    %v2934 = vshrl.u32 %v2933, 7
    %v2935 = vsub.s32 %v853, %v2934
    %v2936 = vrot.slane %v2354, %v2935
    %v2937 = vsel %vm858, %v2936, %v2932
    %v2938 = vlaneseq
    %v2939 = vshrl.u32 %v2938, 7
    %v2940 = vsub.s32 %v860, %v2939
    %v2941 = vrot.slane %v2357, %v2940
    %v2942 = vsel %vm865, %v2941, %v2937
    %v2943 = vlaneseq
    %v2944 = vshrl.u32 %v2943, 7
    %v2945 = vsub.s32 %v867, %v2944
    %v2946 = vrot.slane %v2360, %v2945
    %v2947 = vsel %vm872, %v2946, %v2942
    %v2948 = vlaneseq
    %v2949 = vshrl.u32 %v2948, 7
    %v2950 = vsub.s32 %v874, %v2949
    %v2951 = vrot.slane %v2363, %v2950
    %v2952 = vsel %vm879, %v2951, %v2947
    %v2953 = vlaneseq
    %v2954 = vshrl.u32 %v2953, 7
    %v2955 = vsub.s32 %v881, %v2954
    %v2956 = vrot.slane %v2366, %v2955
    %v2957 = vsel %vm886, %v2956, %v2952
    %v2958 = vlaneseq
    %v2959 = vshrl.u32 %v2958, 7
    %v2960 = vsub.s32 %v888, %v2959
    %v2961 = vrot.slane %v2369, %v2960
    %v2962 = vsel %vm893, %v2961, %v2957
    %v2963 = vlaneseq
    %v2964 = vshrl.u32 %v2963, 7
    %v2965 = vsub.s32 %v895, %v2964
    %v2966 = vrot.slane %v2372, %v2965
    %v2967 = vsel %vm900, %v2966, %v2962
    %v2968 = vlaneseq
    %v2969 = vshrl.u32 %v2968, 7
    %v2970 = vsub.s32 %v902, %v2969
    %v2971 = vrot.slane %v2375, %v2970
    %v2972 = vsel %vm907, %v2971, %v2967
    %v2973 = vlaneseq
    %v2974 = vshrl.u32 %v2973, 7
    %v2975 = vsub.s32 %v909, %v2974
    %v2976 = vrot.slane %v2378, %v2975
    %v2977 = vsel %vm914, %v2976, %v2972
    %v2978 = vlaneseq
    %v2979 = vshrl.u32 %v2978, 7
    %v2980 = vsub.s32 %v916, %v2979
    %v2981 = vrot.slane %v2381, %v2980
    %v2982 = vsel %vm921, %v2981, %v2977
    %v2983 = vlaneseq
    %v2984 = vshrl.u32 %v2983, 7
    %v2985 = vsub.s32 %v681, %v2984
    %v2986 = vrot.slane %v2384, %v2985
    %v2987 = vlaneseq
    %v2988 = vshrl.u32 %v2987, 7
    %v2989 = vsub.s32 %v818, %v2988
    %v2990 = vrot.slane %v2387, %v2989
    %v2991 = vsel %vm823, %v2990, %v2986
    %v2992 = vlaneseq
    %v2993 = vshrl.u32 %v2992, 7
    %v2994 = vsub.s32 %v825, %v2993
    %v2995 = vrot.slane %v2390, %v2994
    %v2996 = vsel %vm830, %v2995, %v2991
    %v2997 = vlaneseq
    %v2998 = vshrl.u32 %v2997, 7
    %v2999 = vsub.s32 %v832, %v2998
    %v3000 = vrot.slane %v2393, %v2999
    %v3001 = vsel %vm837, %v3000, %v2996
    %v3002 = vlaneseq
    %v3003 = vshrl.u32 %v3002, 7
    %v3004 = vsub.s32 %v839, %v3003
    %v3005 = vrot.slane %v2396, %v3004
    %v3006 = vsel %vm844, %v3005, %v3001
    %v3007 = vlaneseq
    %v3008 = vshrl.u32 %v3007, 7
    %v3009 = vsub.s32 %v846, %v3008
    %v3010 = vrot.slane %v2399, %v3009
    %v3011 = vsel %vm851, %v3010, %v3006
    %v3012 = vlaneseq
    %v3013 = vshrl.u32 %v3012, 7
    %v3014 = vsub.s32 %v853, %v3013
    %v3015 = vrot.slane %v2402, %v3014
    %v3016 = vsel %vm858, %v3015, %v3011
    %v3017 = vlaneseq
    %v3018 = vshrl.u32 %v3017, 7
    %v3019 = vsub.s32 %v860, %v3018
    %v3020 = vrot.slane %v2405, %v3019
    %v3021 = vsel %vm865, %v3020, %v3016
    %v3022 = vlaneseq
    %v3023 = vshrl.u32 %v3022, 7
    %v3024 = vsub.s32 %v867, %v3023
    %v3025 = vrot.slane %v2408, %v3024
    %v3026 = vsel %vm872, %v3025, %v3021
    %v3027 = vlaneseq
    %v3028 = vshrl.u32 %v3027, 7
    %v3029 = vsub.s32 %v874, %v3028
    %v3030 = vrot.slane %v2411, %v3029
    %v3031 = vsel %vm879, %v3030, %v3026
    %v3032 = vlaneseq
    %v3033 = vshrl.u32 %v3032, 7
    %v3034 = vsub.s32 %v881, %v3033
    %v3035 = vrot.slane %v2414, %v3034
    %v3036 = vsel %vm886, %v3035, %v3031
    %v3037 = vlaneseq
    %v3038 = vshrl.u32 %v3037, 7
    %v3039 = vsub.s32 %v888, %v3038
    %v3040 = vrot.slane %v2417, %v3039
    %v3041 = vsel %vm893, %v3040, %v3036
    %v3042 = vlaneseq
    %v3043 = vshrl.u32 %v3042, 7
    %v3044 = vsub.s32 %v895, %v3043
    %v3045 = vrot.slane %v2420, %v3044
    %v3046 = vsel %vm900, %v3045, %v3041
    %v3047 = vlaneseq
    %v3048 = vshrl.u32 %v3047, 7
    %v3049 = vsub.s32 %v902, %v3048
    %v3050 = vrot.slane %v2423, %v3049
    %v3051 = vsel %vm907, %v3050, %v3046
    %v3052 = vlaneseq
    %v3053 = vshrl.u32 %v3052, 7
    %v3054 = vsub.s32 %v909, %v3053
    %v3055 = vrot.slane %v2426, %v3054
    %v3056 = vsel %vm914, %v3055, %v3051
    %v3057 = vlaneseq
    %v3058 = vshrl.u32 %v3057, 7
    %v3059 = vsub.s32 %v916, %v3058
    %v3060 = vrot.slane %v2429, %v3059
    %v3061 = vsel %vm921, %v3060, %v3056
    %v3062 = vsel %vm1476, %v2587, %v2508
    %v3063 = vsel %vm1478, %v2666, %v3062
    %v3064 = vsel %vm1480, %v2745, %v3063
    %v3065 = vsel %vm1482, %v2824, %v3064
    %v3066 = vsel %vm1484, %v2903, %v3065
    %v3067 = vsel %vm1486, %v2982, %v3066
    %v3068 = vsel %vm1488, %v3061, %v3067
    %v3070 = vsel %vm685, %v3068, 0.0
    %3071 = vadd.xlane.f32.xlu0 %v3070
    %v3072 = vpop.xlane.xlu0 %3071
    %v3073 = vrcp.pop %v3072
    %v3074 = vmul.f32 %v3070, %v3073
    %v3076 = vcombine.high %v3074, %v3074
    %v3078 = vunpack.c.l.s4 1966171168
    %v3079 = vunpack.c.0.s8 %v3078
    %v3080 = vlaneseq
    %v3081 = vshrl.u32 %v3080, 7
    %v3082 = vsub.s32 %v3079, %v3081
    %v3083 = vrot.slane %v3074, %v3082
    %v3085 = vunpack.c.l.s4 1966171168
    %v3086 = vunpack.c.0.s8 %v3085
    %v3087 = vlaneseq
    %v3088 = vshrl.u32 %v3087, 7
    %v3089 = vsub.s32 %v3086, %v3088
    %v3090 = vrot.slane %v3076, %v3089
    %v3091 = vcombine.high %v3083, %v3083
    %v3092 = vcombine.high %v3090, %v3090
    %v3094 = vunpack.c.l.s4 1966171168
    %v3095 = vunpack.c.0.s8 %v3094
    %v3096 = vlaneseq
    %v3097 = vshrl.u32 %v3096, 7
    %v3098 = vsub.s32 %v3095, %v3097
    %v3099 = vrot.slane %v3083, %v3098
    %v3101 = vunpack.c.l.s4 1966171168
    %v3102 = vunpack.c.0.s8 %v3101
    %v3103 = vlaneseq
    %v3104 = vshrl.u32 %v3103, 7
    %v3105 = vsub.s32 %v3102, %v3104
    %v3106 = vrot.slane %v3090, %v3105
    %v3108 = vunpack.c.l.s4 1966171168
    %v3109 = vunpack.c.0.s8 %v3108
    %v3110 = vlaneseq
    %v3111 = vshrl.u32 %v3110, 7
    %v3112 = vsub.s32 %v3109, %v3111
    %v3113 = vrot.slane %v3091, %v3112
    %v3115 = vunpack.c.l.s4 1966171168
    %v3116 = vunpack.c.0.s8 %v3115
    %v3117 = vlaneseq
    %v3118 = vshrl.u32 %v3117, 7
    %v3119 = vsub.s32 %v3116, %v3118
    %v3120 = vrot.slane %v3092, %v3119
    %v3121 = vcombine.high %v3099, %v3099
    %v3122 = vcombine.high %v3106, %v3106
    %v3123 = vcombine.high %v3113, %v3113
    %v3124 = vcombine.high %v3120, %v3120
    %3133 = vmatprep.subr.mxu0 0.0
    %3134 = vmatpush1.msra.mxu0 %v32
    %3135 = vmatprep.subr.mxu0 0.0
    %3136 = vmatpush1.msra.mxu0 %v33
    %3137 = vmatprep.subr.mxu0 0.0
    %3138 = vmatpush1.msra.mxu0 %v34
    %3139 = vmatprep.subr.mxu0 0.0
    %3140 = vmatpush1.msra.mxu0 %v35
    %3141 = vmatprep.subr.mxu0 0.0
    %3142 = vmatpush1.msra.mxu0 %v36
    %3143 = vmatprep.subr.mxu0 0.0
    %3144 = vmatpush1.msra.mxu0 %v37
    %3145 = vmatprep.subr.mxu0 0.0
    %3146 = vmatpush1.msra.mxu0 %v38
    %3147 = vmatprep.subr.mxu0 0.0
    %3148 = vmatpush1.msra.mxu0 %v39
    %3149 = vmatprep.subr.mxu0 0.0
    %3150 = vmatpush1.msra.mxu0 %v40
    %3151 = vmatprep.subr.mxu0 0.0
    %3152 = vmatpush1.msra.mxu0 %v41
    %3153 = vmatprep.subr.mxu0 0.0
    %3154 = vmatpush1.msra.mxu0 %v42
    %3155 = vmatprep.subr.mxu0 0.0
    %3156 = vmatpush1.msra.mxu0 %v43
    %3157 = vmatprep.subr.mxu0 0.0
    %3158 = vmatpush1.msra.mxu0 %v44
    %3159 = vmatprep.subr.mxu0 0.0
    %3160 = vmatpush1.msra.mxu0 %v45
    %3161 = vmatprep.subr.mxu0 0.0
    %3162 = vmatpush1.msra.mxu0 %v46
    %3163 = vmatprep.subr.mxu0 0.0
    %3164 = vmatpush1.msra.mxu0 %v47
    %3165 = vmatprep.subr.mxu0 0.0
    %3166 = vmatpush1.msra.mxu0 0.0
    %3167 = vmatprep.subr.mxu0 0.0
    %3168 = vmatpush1.msra.mxu0 0.0
    %3169 = vmatprep.subr.mxu0 0.0
    %3170 = vmatpush1.msra.mxu0 0.0
    %3171 = vmatprep.subr.mxu0 0.0
    %3172 = vmatpush1.msra.mxu0 0.0
    %3173 = vmatprep.subr.mxu0 0.0
    %3174 = vmatpush1.msra.mxu0 0.0
    %3175 = vmatprep.subr.mxu0 0.0
    %3176 = vmatpush1.msra.mxu0 0.0
    %3177 = vmatprep.subr.mxu0 0.0
    %3178 = vmatpush1.msra.mxu0 0.0
    %3179 = vmatprep.subr.mxu0 0.0
    %3180 = vmatpush1.msra.mxu0 0.0
    %3181 = vmatprep.subr.mxu0 0.0
    %3182 = vmatpush1.msra.mxu0 0.0
    %3183 = vmatprep.subr.mxu0 0.0
    %3184 = vmatpush1.msra.mxu0 0.0
    %3185 = vmatprep.subr.mxu0 0.0
    %3186 = vmatpush1.msra.mxu0 0.0
    %3187 = vmatprep.subr.mxu0 0.0
    %3188 = vmatpush1.msra.mxu0 0.0
    %3189 = vmatprep.subr.mxu0 0.0
    %3190 = vmatpush1.msra.mxu0 0.0
    %3191 = vmatprep.subr.mxu0 0.0
    %3192 = vmatpush1.msra.mxu0 0.0
    %3193 = vmatprep.subr.mxu0 0.0
    %3194 = vmatpush1.msra.mxu0 0.0
    %3195 = vmatprep.subr.mxu0 0.0
    %3196 = vmatpush1.msra.mxu0 0.0
    %3197 = vmatprep.mubr.f32.mxu0 0.0
    %3198 = vmatmul.mubr.f32.gmra.mrb[0].mxu0 %v3099
    %v3199 = vpop.f32.mrb[0].mxu0
    %v3200 = vadd.f32 0.0, %v3199
    %v3201 = vpop.f32.mrb[0].mxu0
    %3202 = vdwg.mxu0
    %3203 = vmatprep.subr.mxu0 0.0
    %3204 = vmatpush1.msra.mxu0 %v48
    %3205 = vmatprep.subr.mxu0 0.0
    %3206 = vmatpush1.msra.mxu0 %v49
    %3207 = vmatprep.subr.mxu0 0.0
    %3208 = vmatpush1.msra.mxu0 %v50
    %3209 = vmatprep.subr.mxu0 0.0
    %3210 = vmatpush1.msra.mxu0 %v51
    %3211 = vmatprep.subr.mxu0 0.0
    %3212 = vmatpush1.msra.mxu0 %v52
    %3213 = vmatprep.subr.mxu0 0.0
    %3214 = vmatpush1.msra.mxu0 %v53
    %3215 = vmatprep.subr.mxu0 0.0
    %3216 = vmatpush1.msra.mxu0 %v54
    %3217 = vmatprep.subr.mxu0 0.0
    %3218 = vmatpush1.msra.mxu0 %v55
    %3219 = vmatprep.subr.mxu0 0.0
    %3220 = vmatpush1.msra.mxu0 %v56
    %3221 = vmatprep.subr.mxu0 0.0
    %3222 = vmatpush1.msra.mxu0 %v57
    %3223 = vmatprep.subr.mxu0 0.0
    %3224 = vmatpush1.msra.mxu0 %v58
    %3225 = vmatprep.subr.mxu0 0.0
    %3226 = vmatpush1.msra.mxu0 %v59
    %3227 = vmatprep.subr.mxu0 0.0
    %3228 = vmatpush1.msra.mxu0 %v60
    %3229 = vmatprep.subr.mxu0 0.0
    %3230 = vmatpush1.msra.mxu0 %v61
    %3231 = vmatprep.subr.mxu0 0.0
    %3232 = vmatpush1.msra.mxu0 %v62
    %3233 = vmatprep.subr.mxu0 0.0
    %3234 = vmatpush1.msra.mxu0 %v63
    %3235 = vmatprep.subr.mxu0 0.0
    %3236 = vmatpush1.msra.mxu0 0.0
    %3237 = vmatprep.subr.mxu0 0.0
    %3238 = vmatpush1.msra.mxu0 0.0
    %3239 = vmatprep.subr.mxu0 0.0
    %3240 = vmatpush1.msra.mxu0 0.0
    %3241 = vmatprep.subr.mxu0 0.0
    %3242 = vmatpush1.msra.mxu0 0.0
    %3243 = vmatprep.subr.mxu0 0.0
    %3244 = vmatpush1.msra.mxu0 0.0
    %3245 = vmatprep.subr.mxu0 0.0
    %3246 = vmatpush1.msra.mxu0 0.0
    %3247 = vmatprep.subr.mxu0 0.0
    %3248 = vmatpush1.msra.mxu0 0.0
    %3249 = vmatprep.subr.mxu0 0.0
    %3250 = vmatpush1.msra.mxu0 0.0
    %3251 = vmatprep.subr.mxu0 0.0
    %3252 = vmatpush1.msra.mxu0 0.0
    %3253 = vmatprep.subr.mxu0 0.0
    %3254 = vmatpush1.msra.mxu0 0.0
    %3255 = vmatprep.subr.mxu0 0.0
    %3256 = vmatpush1.msra.mxu0 0.0
    %3257 = vmatprep.subr.mxu0 0.0
    %3258 = vmatpush1.msra.mxu0 0.0
    %3259 = vmatprep.subr.mxu0 0.0
    %3260 = vmatpush1.msra.mxu0 0.0
    %3261 = vmatprep.subr.mxu0 0.0
    %3262 = vmatpush1.msra.mxu0 0.0
    %3263 = vmatprep.subr.mxu0 0.0
    %3264 = vmatpush1.msra.mxu0 0.0
    %3265 = vmatprep.subr.mxu0 0.0
    %3266 = vmatpush1.msra.mxu0 0.0
    %3267 = vmatprep.mubr.f32.mxu0 0.0
    %3268 = vmatmul.mubr.f32.gmra.mrb[0].mxu0 %v3113
    %v3269 = vpop.f32.mrb[0].mxu0
    %v3270 = vadd.f32 0.0, %v3269
    %v3271 = vpop.f32.mrb[0].mxu0
    %3272 = vdwg.mxu0
    %3273 = vmatprep.subr.mxu0 0.0
    %3274 = vmatpush1.msra.mxu0 %v64
    %3275 = vmatprep.subr.mxu0 0.0
    %3276 = vmatpush1.msra.mxu0 %v65
    %3277 = vmatprep.subr.mxu0 0.0
    %3278 = vmatpush1.msra.mxu0 %v66
    %3279 = vmatprep.subr.mxu0 0.0
    %3280 = vmatpush1.msra.mxu0 %v67
    %3281 = vmatprep.subr.mxu0 0.0
    %3282 = vmatpush1.msra.mxu0 %v68
    %3283 = vmatprep.subr.mxu0 0.0
    %3284 = vmatpush1.msra.mxu0 %v69
    %3285 = vmatprep.subr.mxu0 0.0
    %3286 = vmatpush1.msra.mxu0 %v70
    %3287 = vmatprep.subr.mxu0 0.0
    %3288 = vmatpush1.msra.mxu0 %v71
    %3289 = vmatprep.subr.mxu0 0.0
    %3290 = vmatpush1.msra.mxu0 %v72
    %3291 = vmatprep.subr.mxu0 0.0
    %3292 = vmatpush1.msra.mxu0 %v73
    %3293 = vmatprep.subr.mxu0 0.0
    %3294 = vmatpush1.msra.mxu0 %v74
    %3295 = vmatprep.subr.mxu0 0.0
    %3296 = vmatpush1.msra.mxu0 %v75
    %3297 = vmatprep.subr.mxu0 0.0
    %3298 = vmatpush1.msra.mxu0 %v76
    %3299 = vmatprep.subr.mxu0 0.0
    %3300 = vmatpush1.msra.mxu0 %v77
    %3301 = vmatprep.subr.mxu0 0.0
    %3302 = vmatpush1.msra.mxu0 %v78
    %3303 = vmatprep.subr.mxu0 0.0
    %3304 = vmatpush1.msra.mxu0 %v79
    %3305 = vmatprep.subr.mxu0 0.0
    %3306 = vmatpush1.msra.mxu0 0.0
    %3307 = vmatprep.subr.mxu0 0.0
    %3308 = vmatpush1.msra.mxu0 0.0
    %3309 = vmatprep.subr.mxu0 0.0
    %3310 = vmatpush1.msra.mxu0 0.0
    %3311 = vmatprep.subr.mxu0 0.0
    %3312 = vmatpush1.msra.mxu0 0.0
    %3313 = vmatprep.subr.mxu0 0.0
    %3314 = vmatpush1.msra.mxu0 0.0
    %3315 = vmatprep.subr.mxu0 0.0
    %3316 = vmatpush1.msra.mxu0 0.0
    %3317 = vmatprep.subr.mxu0 0.0
    %3318 = vmatpush1.msra.mxu0 0.0
    %3319 = vmatprep.subr.mxu0 0.0
    %3320 = vmatpush1.msra.mxu0 0.0
    %3321 = vmatprep.subr.mxu0 0.0
    %3322 = vmatpush1.msra.mxu0 0.0
    %3323 = vmatprep.subr.mxu0 0.0
    %3324 = vmatpush1.msra.mxu0 0.0
    %3325 = vmatprep.subr.mxu0 0.0
    %3326 = vmatpush1.msra.mxu0 0.0
    %3327 = vmatprep.subr.mxu0 0.0
    %3328 = vmatpush1.msra.mxu0 0.0
    %3329 = vmatprep.subr.mxu0 0.0
    %3330 = vmatpush1.msra.mxu0 0.0
    %3331 = vmatprep.subr.mxu0 0.0
    %3332 = vmatpush1.msra.mxu0 0.0
    %3333 = vmatprep.subr.mxu0 0.0
    %3334 = vmatpush1.msra.mxu0 0.0
    %3335 = vmatprep.subr.mxu0 0.0
    %3336 = vmatpush1.msra.mxu0 0.0
    %3337 = vmatprep.mubr.f32.mxu0 0.0
    %3338 = vmatmul.mubr.f32.gmra.mrb[0].mxu0 %v3121
    %v3339 = vpop.f32.mrb[0].mxu0
    %v3340 = vadd.f32 0.0, %v3339
    %v3341 = vpop.f32.mrb[0].mxu0
    %3342 = vdwg.mxu0
    %3343 = vmatprep.subr.mxu0 0.0
    %3344 = vmatpush1.msra.mxu0 %v80
    %3345 = vmatprep.subr.mxu0 0.0
    %3346 = vmatpush1.msra.mxu0 %v81
    %3347 = vmatprep.subr.mxu0 0.0
    %3348 = vmatpush1.msra.mxu0 %v82
    %3349 = vmatprep.subr.mxu0 0.0
    %3350 = vmatpush1.msra.mxu0 %v83
    %3351 = vmatprep.subr.mxu0 0.0
    %3352 = vmatpush1.msra.mxu0 %v84
    %3353 = vmatprep.subr.mxu0 0.0
    %3354 = vmatpush1.msra.mxu0 %v85
    %3355 = vmatprep.subr.mxu0 0.0
    %3356 = vmatpush1.msra.mxu0 %v86
    %3357 = vmatprep.subr.mxu0 0.0
    %3358 = vmatpush1.msra.mxu0 %v87
    %3359 = vmatprep.subr.mxu0 0.0
    %3360 = vmatpush1.msra.mxu0 %v88
    %3361 = vmatprep.subr.mxu0 0.0
    %3362 = vmatpush1.msra.mxu0 %v89
    %3363 = vmatprep.subr.mxu0 0.0
    %3364 = vmatpush1.msra.mxu0 %v90
    %3365 = vmatprep.subr.mxu0 0.0
    %3366 = vmatpush1.msra.mxu0 %v91
    %3367 = vmatprep.subr.mxu0 0.0
    %3368 = vmatpush1.msra.mxu0 %v92
    %3369 = vmatprep.subr.mxu0 0.0
    %3370 = vmatpush1.msra.mxu0 %v93
    %3371 = vmatprep.subr.mxu0 0.0
    %3372 = vmatpush1.msra.mxu0 %v94
    %3373 = vmatprep.subr.mxu0 0.0
    %3374 = vmatpush1.msra.mxu0 %v95
    %3375 = vmatprep.subr.mxu0 0.0
    %3376 = vmatpush1.msra.mxu0 0.0
    %3377 = vmatprep.subr.mxu0 0.0
    %3378 = vmatpush1.msra.mxu0 0.0
    %3379 = vmatprep.subr.mxu0 0.0
    %3380 = vmatpush1.msra.mxu0 0.0
    %3381 = vmatprep.subr.mxu0 0.0
    %3382 = vmatpush1.msra.mxu0 0.0
    %3383 = vmatprep.subr.mxu0 0.0
    %3384 = vmatpush1.msra.mxu0 0.0
    %3385 = vmatprep.subr.mxu0 0.0
    %3386 = vmatpush1.msra.mxu0 0.0
    %3387 = vmatprep.subr.mxu0 0.0
    %3388 = vmatpush1.msra.mxu0 0.0
    %3389 = vmatprep.subr.mxu0 0.0
    %3390 = vmatpush1.msra.mxu0 0.0
    %3391 = vmatprep.subr.mxu0 0.0
    %3392 = vmatpush1.msra.mxu0 0.0
    %3393 = vmatprep.subr.mxu0 0.0
    %3394 = vmatpush1.msra.mxu0 0.0
    %3395 = vmatprep.subr.mxu0 0.0
    %3396 = vmatpush1.msra.mxu0 0.0
    %3397 = vmatprep.subr.mxu0 0.0
    %3398 = vmatpush1.msra.mxu0 0.0
    %3399 = vmatprep.subr.mxu0 0.0
    %3400 = vmatpush1.msra.mxu0 0.0
    %3401 = vmatprep.subr.mxu0 0.0
    %3402 = vmatpush1.msra.mxu0 0.0
    %3403 = vmatprep.subr.mxu0 0.0
    %3404 = vmatpush1.msra.mxu0 0.0
    %3405 = vmatprep.subr.mxu0 0.0
    %3406 = vmatpush1.msra.mxu0 0.0
    %3407 = vmatprep.mubr.f32.mxu0 0.0
    %3408 = vmatmul.mubr.f32.gmra.mrb[0].mxu0 %v3123
    %v3409 = vpop.f32.mrb[0].mxu0
    %v3410 = vadd.f32 0.0, %v3409
    %v3411 = vpop.f32.mrb[0].mxu0
    %3412 = vdwg.mxu0
    %3413 = vmatprep.subr.mxu0 0.0
    %3414 = vmatpush1.msra.mxu0 %v96
    %3415 = vmatprep.subr.mxu0 0.0
    %3416 = vmatpush1.msra.mxu0 %v97
    %3417 = vmatprep.subr.mxu0 0.0
    %3418 = vmatpush1.msra.mxu0 %v98
    %3419 = vmatprep.subr.mxu0 0.0
    %3420 = vmatpush1.msra.mxu0 %v99
    %3421 = vmatprep.subr.mxu0 0.0
    %3422 = vmatpush1.msra.mxu0 %v100
    %3423 = vmatprep.subr.mxu0 0.0
    %3424 = vmatpush1.msra.mxu0 %v101
    %3425 = vmatprep.subr.mxu0 0.0
    %3426 = vmatpush1.msra.mxu0 %v102
    %3427 = vmatprep.subr.mxu0 0.0
    %3428 = vmatpush1.msra.mxu0 %v103
    %3429 = vmatprep.subr.mxu0 0.0
    %3430 = vmatpush1.msra.mxu0 %v104
    %3431 = vmatprep.subr.mxu0 0.0
    %3432 = vmatpush1.msra.mxu0 %v105
    %3433 = vmatprep.subr.mxu0 0.0
    %3434 = vmatpush1.msra.mxu0 %v106
    %3435 = vmatprep.subr.mxu0 0.0
    %3436 = vmatpush1.msra.mxu0 %v107
    %3437 = vmatprep.subr.mxu0 0.0
    %3438 = vmatpush1.msra.mxu0 %v108
    %3439 = vmatprep.subr.mxu0 0.0
    %3440 = vmatpush1.msra.mxu0 %v109
    %3441 = vmatprep.subr.mxu0 0.0
    %3442 = vmatpush1.msra.mxu0 %v110
    %3443 = vmatprep.subr.mxu0 0.0
    %3444 = vmatpush1.msra.mxu0 %v111
    %3445 = vmatprep.subr.mxu0 0.0
    %3446 = vmatpush1.msra.mxu0 0.0
    %3447 = vmatprep.subr.mxu0 0.0
    %3448 = vmatpush1.msra.mxu0 0.0
    %3449 = vmatprep.subr.mxu0 0.0
    %3450 = vmatpush1.msra.mxu0 0.0
    %3451 = vmatprep.subr.mxu0 0.0
    %3452 = vmatpush1.msra.mxu0 0.0
    %3453 = vmatprep.subr.mxu0 0.0
    %3454 = vmatpush1.msra.mxu0 0.0
    %3455 = vmatprep.subr.mxu0 0.0
    %3456 = vmatpush1.msra.mxu0 0.0
    %3457 = vmatprep.subr.mxu0 0.0
    %3458 = vmatpush1.msra.mxu0 0.0
    %3459 = vmatprep.subr.mxu0 0.0
    %3460 = vmatpush1.msra.mxu0 0.0
    %3461 = vmatprep.subr.mxu0 0.0
    %3462 = vmatpush1.msra.mxu0 0.0
    %3463 = vmatprep.subr.mxu0 0.0
    %3464 = vmatpush1.msra.mxu0 0.0
    %3465 = vmatprep.subr.mxu0 0.0
    %3466 = vmatpush1.msra.mxu0 0.0
    %3467 = vmatprep.subr.mxu0 0.0
    %3468 = vmatpush1.msra.mxu0 0.0
    %3469 = vmatprep.subr.mxu0 0.0
    %3470 = vmatpush1.msra.mxu0 0.0
    %3471 = vmatprep.subr.mxu0 0.0
    %3472 = vmatpush1.msra.mxu0 0.0
    %3473 = vmatprep.subr.mxu0 0.0
    %3474 = vmatpush1.msra.mxu0 0.0
    %3475 = vmatprep.subr.mxu0 0.0
    %3476 = vmatpush1.msra.mxu0 0.0
    %3477 = vmatprep.mubr.f32.mxu0 0.0
    %3478 = vmatmul.mubr.f32.gmra.mrb[0].mxu0 %v3106
    %v3479 = vpop.f32.mrb[0].mxu0
    %v3480 = vadd.f32 0.0, %v3479
    %v3481 = vpop.f32.mrb[0].mxu0
    %3482 = vdwg.mxu0
    %3483 = vmatprep.subr.mxu0 0.0
    %3484 = vmatpush1.msra.mxu0 %v112
    %3485 = vmatprep.subr.mxu0 0.0
    %3486 = vmatpush1.msra.mxu0 %v113
    %3487 = vmatprep.subr.mxu0 0.0
    %3488 = vmatpush1.msra.mxu0 %v114
    %3489 = vmatprep.subr.mxu0 0.0
    %3490 = vmatpush1.msra.mxu0 %v115
    %3491 = vmatprep.subr.mxu0 0.0
    %3492 = vmatpush1.msra.mxu0 %v116
    %3493 = vmatprep.subr.mxu0 0.0
    %3494 = vmatpush1.msra.mxu0 %v117
    %3495 = vmatprep.subr.mxu0 0.0
    %3496 = vmatpush1.msra.mxu0 %v118
    %3497 = vmatprep.subr.mxu0 0.0
    %3498 = vmatpush1.msra.mxu0 %v119
    %3499 = vmatprep.subr.mxu0 0.0
    %3500 = vmatpush1.msra.mxu0 %v120
    %3501 = vmatprep.subr.mxu0 0.0
    %3502 = vmatpush1.msra.mxu0 %v121
    %3503 = vmatprep.subr.mxu0 0.0
    %3504 = vmatpush1.msra.mxu0 %v122
    %3505 = vmatprep.subr.mxu0 0.0
    %3506 = vmatpush1.msra.mxu0 %v123
    %3507 = vmatprep.subr.mxu0 0.0
    %3508 = vmatpush1.msra.mxu0 %v124
    %3509 = vmatprep.subr.mxu0 0.0
    %3510 = vmatpush1.msra.mxu0 %v125
    %3511 = vmatprep.subr.mxu0 0.0
    %3512 = vmatpush1.msra.mxu0 %v126
    %3513 = vmatprep.subr.mxu0 0.0
    %3514 = vmatpush1.msra.mxu0 %v127
    %3515 = vmatprep.subr.mxu0 0.0
    %3516 = vmatpush1.msra.mxu0 0.0
    %3517 = vmatprep.subr.mxu0 0.0
    %3518 = vmatpush1.msra.mxu0 0.0
    %3519 = vmatprep.subr.mxu0 0.0
    %3520 = vmatpush1.msra.mxu0 0.0
    %3521 = vmatprep.subr.mxu0 0.0
    %3522 = vmatpush1.msra.mxu0 0.0
    %3523 = vmatprep.subr.mxu0 0.0
    %3524 = vmatpush1.msra.mxu0 0.0
    %3525 = vmatprep.subr.mxu0 0.0
    %3526 = vmatpush1.msra.mxu0 0.0
    %3527 = vmatprep.subr.mxu0 0.0
    %3528 = vmatpush1.msra.mxu0 0.0
    %3529 = vmatprep.subr.mxu0 0.0
    %3530 = vmatpush1.msra.mxu0 0.0
    %3531 = vmatprep.subr.mxu0 0.0
    %3532 = vmatpush1.msra.mxu0 0.0
    %3533 = vmatprep.subr.mxu0 0.0
    %3534 = vmatpush1.msra.mxu0 0.0
    %3535 = vmatprep.subr.mxu0 0.0
    %3536 = vmatpush1.msra.mxu0 0.0
    %3537 = vmatprep.subr.mxu0 0.0
    %3538 = vmatpush1.msra.mxu0 0.0
    %3539 = vmatprep.subr.mxu0 0.0
    %3540 = vmatpush1.msra.mxu0 0.0
    %3541 = vmatprep.subr.mxu0 0.0
    %3542 = vmatpush1.msra.mxu0 0.0
    %3543 = vmatprep.subr.mxu0 0.0
    %3544 = vmatpush1.msra.mxu0 0.0
    %3545 = vmatprep.subr.mxu0 0.0
    %3546 = vmatpush1.msra.mxu0 0.0
    %3547 = vmatprep.mubr.f32.mxu0 0.0
    %3548 = vmatmul.mubr.f32.gmra.mrb[0].mxu0 %v3120
    %v3549 = vpop.f32.mrb[0].mxu0
    %v3550 = vadd.f32 0.0, %v3549
    %v3551 = vpop.f32.mrb[0].mxu0
    %3552 = vdwg.mxu0
    %3553 = vmatprep.subr.mxu0 0.0
    %3554 = vmatpush1.msra.mxu0 %v128
    %3555 = vmatprep.subr.mxu0 0.0
    %3556 = vmatpush1.msra.mxu0 %v129
    %3557 = vmatprep.subr.mxu0 0.0
    %3558 = vmatpush1.msra.mxu0 %v130
    %3559 = vmatprep.subr.mxu0 0.0
    %3560 = vmatpush1.msra.mxu0 %v131
    %3561 = vmatprep.subr.mxu0 0.0
    %3562 = vmatpush1.msra.mxu0 %v132
    %3563 = vmatprep.subr.mxu0 0.0
    %3564 = vmatpush1.msra.mxu0 %v133
    %3565 = vmatprep.subr.mxu0 0.0
    %3566 = vmatpush1.msra.mxu0 %v134
    %3567 = vmatprep.subr.mxu0 0.0
    %3568 = vmatpush1.msra.mxu0 %v135
    %3569 = vmatprep.subr.mxu0 0.0
    %3570 = vmatpush1.msra.mxu0 %v136
    %3571 = vmatprep.subr.mxu0 0.0
    %3572 = vmatpush1.msra.mxu0 %v137
    %3573 = vmatprep.subr.mxu0 0.0
    %3574 = vmatpush1.msra.mxu0 %v138
    %3575 = vmatprep.subr.mxu0 0.0
    %3576 = vmatpush1.msra.mxu0 %v139
    %3577 = vmatprep.subr.mxu0 0.0
    %3578 = vmatpush1.msra.mxu0 %v140
    %3579 = vmatprep.subr.mxu0 0.0
    %3580 = vmatpush1.msra.mxu0 %v141
    %3581 = vmatprep.subr.mxu0 0.0
    %3582 = vmatpush1.msra.mxu0 %v142
    %3583 = vmatprep.subr.mxu0 0.0
    %3584 = vmatpush1.msra.mxu0 %v143
    %3585 = vmatprep.subr.mxu0 0.0
    %3586 = vmatpush1.msra.mxu0 0.0
    %3587 = vmatprep.subr.mxu0 0.0
    %3588 = vmatpush1.msra.mxu0 0.0
    %3589 = vmatprep.subr.mxu0 0.0
    %3590 = vmatpush1.msra.mxu0 0.0
    %3591 = vmatprep.subr.mxu0 0.0
    %3592 = vmatpush1.msra.mxu0 0.0
    %3593 = vmatprep.subr.mxu0 0.0
    %3594 = vmatpush1.msra.mxu0 0.0
    %3595 = vmatprep.subr.mxu0 0.0
    %3596 = vmatpush1.msra.mxu0 0.0
    %3597 = vmatprep.subr.mxu0 0.0
    %3598 = vmatpush1.msra.mxu0 0.0
    %3599 = vmatprep.subr.mxu0 0.0
    %3600 = vmatpush1.msra.mxu0 0.0
    %3601 = vmatprep.subr.mxu0 0.0
    %3602 = vmatpush1.msra.mxu0 0.0
    %3603 = vmatprep.subr.mxu0 0.0
    %3604 = vmatpush1.msra.mxu0 0.0
    %3605 = vmatprep.subr.mxu0 0.0
    %3606 = vmatpush1.msra.mxu0 0.0
    %3607 = vmatprep.subr.mxu0 0.0
    %3608 = vmatpush1.msra.mxu0 0.0
    %3609 = vmatprep.subr.mxu0 0.0
    %3610 = vmatpush1.msra.mxu0 0.0
    %3611 = vmatprep.subr.mxu0 0.0
    %3612 = vmatpush1.msra.mxu0 0.0
    %3613 = vmatprep.subr.mxu0 0.0
    %3614 = vmatpush1.msra.mxu0 0.0
    %3615 = vmatprep.subr.mxu0 0.0
    %3616 = vmatpush1.msra.mxu0 0.0
    %3617 = vmatprep.mubr.f32.mxu0 0.0
    %3618 = vmatmul.mubr.f32.gmra.mrb[0].mxu0 %v3122
    %v3619 = vpop.f32.mrb[0].mxu0
    %v3620 = vadd.f32 0.0, %v3619
    %v3621 = vpop.f32.mrb[0].mxu0
    %3622 = vdwg.mxu0
    %3623 = vmatprep.subr.mxu0 0.0
    %3624 = vmatpush1.msra.mxu0 %v144
    %3625 = vmatprep.subr.mxu0 0.0
    %3626 = vmatpush1.msra.mxu0 %v145
    %3627 = vmatprep.subr.mxu0 0.0
    %3628 = vmatpush1.msra.mxu0 %v146
    %3629 = vmatprep.subr.mxu0 0.0
    %3630 = vmatpush1.msra.mxu0 %v147
    %3631 = vmatprep.subr.mxu0 0.0
    %3632 = vmatpush1.msra.mxu0 %v148
    %3633 = vmatprep.subr.mxu0 0.0
    %3634 = vmatpush1.msra.mxu0 %v149
    %3635 = vmatprep.subr.mxu0 0.0
    %3636 = vmatpush1.msra.mxu0 %v150
    %3637 = vmatprep.subr.mxu0 0.0
    %3638 = vmatpush1.msra.mxu0 %v151
    %3639 = vmatprep.subr.mxu0 0.0
    %3640 = vmatpush1.msra.mxu0 %v152
    %3641 = vmatprep.subr.mxu0 0.0
    %3642 = vmatpush1.msra.mxu0 %v153
    %3643 = vmatprep.subr.mxu0 0.0
    %3644 = vmatpush1.msra.mxu0 %v154
    %3645 = vmatprep.subr.mxu0 0.0
    %3646 = vmatpush1.msra.mxu0 %v155
    %3647 = vmatprep.subr.mxu0 0.0
    %3648 = vmatpush1.msra.mxu0 %v156
    %3649 = vmatprep.subr.mxu0 0.0
    %3650 = vmatpush1.msra.mxu0 %v157
    %3651 = vmatprep.subr.mxu0 0.0
    %3652 = vmatpush1.msra.mxu0 %v158
    %3653 = vmatprep.subr.mxu0 0.0
    %3654 = vmatpush1.msra.mxu0 %v159
    %3655 = vmatprep.subr.mxu0 0.0
    %3656 = vmatpush1.msra.mxu0 0.0
    %3657 = vmatprep.subr.mxu0 0.0
    %3658 = vmatpush1.msra.mxu0 0.0
    %3659 = vmatprep.subr.mxu0 0.0
    %3660 = vmatpush1.msra.mxu0 0.0
    %3661 = vmatprep.subr.mxu0 0.0
    %3662 = vmatpush1.msra.mxu0 0.0
    %3663 = vmatprep.subr.mxu0 0.0
    %3664 = vmatpush1.msra.mxu0 0.0
    %3665 = vmatprep.subr.mxu0 0.0
    %3666 = vmatpush1.msra.mxu0 0.0
    %3667 = vmatprep.subr.mxu0 0.0
    %3668 = vmatpush1.msra.mxu0 0.0
    %3669 = vmatprep.subr.mxu0 0.0
    %3670 = vmatpush1.msra.mxu0 0.0
    %3671 = vmatprep.subr.mxu0 0.0
    %3672 = vmatpush1.msra.mxu0 0.0
    %3673 = vmatprep.subr.mxu0 0.0
    %3674 = vmatpush1.msra.mxu0 0.0
    %3675 = vmatprep.subr.mxu0 0.0
    %3676 = vmatpush1.msra.mxu0 0.0
    %3677 = vmatprep.subr.mxu0 0.0
    %3678 = vmatpush1.msra.mxu0 0.0
    %3679 = vmatprep.subr.mxu0 0.0
    %3680 = vmatpush1.msra.mxu0 0.0
    %3681 = vmatprep.subr.mxu0 0.0
    %3682 = vmatpush1.msra.mxu0 0.0
    %3683 = vmatprep.subr.mxu0 0.0
    %3684 = vmatpush1.msra.mxu0 0.0
    %3685 = vmatprep.subr.mxu0 0.0
    %3686 = vmatpush1.msra.mxu0 0.0
    %3687 = vmatprep.mubr.f32.mxu0 0.0
    %3688 = vmatmul.mubr.f32.gmra.mrb[0].mxu0 %v3124
    %v3689 = vpop.f32.mrb[0].mxu0
    %v3690 = vadd.f32 0.0, %v3689
    %v3691 = vpop.f32.mrb[0].mxu0
    %3692 = vdwg.mxu0
    %v3701 = vrot.slane %v3270, 7
    %v3702 = vsel %vm1476, %v3701, %v3200
    %v3703 = vrot.slane %v3340, 6
    %v3704 = vsel %vm1478, %v3703, %v3702
    %v3705 = vrot.slane %v3410, 5
    %v3706 = vsel %vm1480, %v3705, %v3704
    %v3707 = vrot.slane %v3480, 4
    %v3708 = vsel %vm1482, %v3707, %v3706
    %v3709 = vrot.slane %v3550, 3
    %v3710 = vsel %vm1484, %v3709, %v3708
    %v3711 = vrot.slane %v3620, 2
    %v3712 = vsel %vm1486, %v3711, %v3710
    %v3713 = vrot.slane %v3690, 1
    %v3714 = vsel %vm1488, %v3713, %v3712
    %3716 = vst [vmem:[#allocation5] sm:$0xff] %v3714
    %3717 = vst [vmem:[#allocation6] sm:$0xff] %v3074
    // Predicated region
    $region18: #{tpu_custom_call.1} parent=1 // pred_check
      _
    $region19: #{tpu_custom_call.1} parent=1 // pred_check_branch
      %3719 = sbr.rel (0) target = $region21
    $region20: #{tpu_custom_call.1} parent=1 // pred_region
      %s3721 = ssub.s32 128, 128
      %3722 = vsyncadd [#allocation4], %s3721
      %s3724 = sshll.u32 [#allocation5], 4
      %s3725 = int_to_ptr.vmem [resolvable:$true] %s3724
      %3727 = dma.vmem_to_hbm [thread:$0]  %s3725, 128, %s3, [#allocation4]
    $region21: #{tpu_custom_call.1} parent=1 // pred_fallthru
      _
    // Predicated region
    $region22: #{tpu_custom_call.1} parent=1 // pred_check
      _
    $region23: #{tpu_custom_call.1} parent=1 // pred_check_branch
      %3729 = sbr.rel (0) target = $region25
    $region24: #{tpu_custom_call.1} parent=1 // pred_region
      %s3731 = ssub.s32 128, 128
      %3732 = vsyncadd [#allocation7], %s3731
      %s3734 = sshll.u32 [#allocation6], 4
      %s3735 = int_to_ptr.vmem [resolvable:$true] %s3734
      %3737 = dma.vmem_to_hbm [thread:$0]  %s3735, 128, %s4, [#allocation7]
    $region25: #{tpu_custom_call.1} parent=1 // pred_fallthru
      _
    // Predicated region
    $region26: #{tpu_custom_call.1} parent=1 // pred_check
      _
    $region27: #{tpu_custom_call.1} parent=1 // pred_check_branch
      %3739 = sbr.rel (0) target = $region29
    $region28: #{tpu_custom_call.1} parent=1 // pred_region
      %3740 = dma.done [#allocation4], 128
    $region29: #{tpu_custom_call.1} parent=1 // pred_fallthru
      _
    // Predicated region
    $region30: #{tpu_custom_call.1} parent=1 // pred_check
      _
    $region31: #{tpu_custom_call.1} parent=1 // pred_check_branch
      %3742 = sbr.rel (0) target = $region33
    $region32: #{tpu_custom_call.1} parent=1 // pred_region
      %3743 = dma.done [#allocation7], 128
    $region33: #{tpu_custom_call.1} parent=1 // pred_fallthru
      _
    %3744 = vsyncpa [#allocation3], 1
    %3745 = vsyncpa [#allocation4], 1
    %3746 = vsyncpa [#allocation7], 1

</llo_original>
